<compile_context>
chip_gen: v6e
topology: v6e:2x2x1
jax: 0.10.0
libtpu: 0.0.40
codegen_flags: <defaults>
</compile_context>

<pallas_src>
import functools

import numpy as np

import jax
import jax.numpy as jnp
from jax.experimental import pallas as pl
from jax.experimental.pallas import tpu as pltpu


# 3x3 conv tap offsets (also used for the space-to-depth'd 4x4/stride-2 conv), row-major.
_TAPS3 = tuple((dh, dw) for dh in (-1, 0, 1) for dw in (-1, 0, 1))


def _conv_geometry(H, W, dtype):
    """Flat lane-shift offsets + validity masks for 3x3 taps on an (H, W) grid."""
    hh = np.arange(H * W) // W
    ww = np.arange(H * W) % W
    offsets, masks = [], []
    for dh, dw in _TAPS3:
        offsets.append(int(dh * W + dw))
        valid = (hh + dh >= 0) & (hh + dh < H) & (ww + dw >= 0) & (ww + dw < W)
        masks.append(valid.astype(np.float32))
    masks = jnp.asarray(np.stack(masks)[:, None, :], dtype=dtype)       # (9, 1, H*W)
    return tuple(offsets), masks


def _lane_shift(x, off, m):
    """result[:, o] = x[:, (o + off) % m] for static `off` (wrapped lanes get masked out)."""
    d = off % m
    if d == 0:
        return x
    # TODO(synk): switch to pltpu.roll (single XLU rotate) after verifying shift direction.
    return jnp.concatenate([x[:, d:], x[:, :d]], axis=-1)


# ----------------------------------------------------------------------------
# Pallas kernels
# ----------------------------------------------------------------------------

def _gn_conv_kernel(*refs, offsets, has_gn, apply_silu, inv_n, has_bcast, has_res, eps):
    """Per-batch fused [GroupNorm -> SiLU ->] multi-tap conv [+bias +bcast +1x1 residual].

    Conv taps are static lane shifts of the compact (C, H*W) block plus boundary masks,
    so no im2col / padded copy ever touches HBM.  Stats and accumulation are f32.
    """
    it = iter(refs)
    x_ref = next(it)
    if has_gn:
        gmat_ref, gamma_ref, beta_ref = next(it), next(it), next(it)
    w_ref, b_ref, m_ref = next(it), next(it), next(it)
    t_ref = next(it) if has_bcast else None
    if has_res:
        r_ref, wr_ref = next(it), next(it)
    o_ref = next(it)

    cd = w_ref.dtype                                       # MXU compute dtype (bf16)
    if has_gn:
        xf = x_ref[0].astype(jnp.float32)                  # (K, M)
        s1 = jnp.sum(xf, axis=1, keepdims=True)
        mean = jnp.dot(gmat_ref[...], s1, preferred_element_type=jnp.float32) * inv_n
        xc = xf - mean                                     # two-pass variance (stable)
        s2 = jnp.sum(xc * xc, axis=1, keepdims=True)
        var = jnp.dot(gmat_ref[...], s2, preferred_element_type=jnp.float32) * inv_n
        y = xc * jax.lax.rsqrt(var + eps) * gamma_ref[...] + beta_ref[...]
        if apply_silu:
            y = y * jax.nn.sigmoid(y)
        xin = y.astype(cd)
    else:
        xin = x_ref[0].astype(cd)

    M = xin.shape[-1]
    acc = jnp.zeros(o_ref.shape[1:], jnp.float32)          # (N, M) accumulator
    for t, off in enumerate(offsets):
        if off == 0:
            xt = xin                                       # centre tap: mask is all-ones
        else:
            xt = _lane_shift(xin, off, M) * m_ref[t]       # zero wrapped / padded lanes
        acc = acc + jnp.dot(w_ref[t], xt, preferred_element_type=jnp.float32)

    out = acc + b_ref[...]                                 # (N, 1) bias, f32
    if has_bcast:
        out = out + t_ref[0]                               # (N, 1) per-batch time embedding
    if has_res:
        out = out + jnp.dot(wr_ref[...], r_ref[0].astype(cd),
                            preferred_element_type=jnp.float32)
    o_ref[0] = out.astype(o_ref.dtype)


def _attn_block_kernel(h_ref, gmat_ref, gamma_ref, beta_ref, wq_ref, bq_ref,
                       kse_ref, v_ref, wo_ref, bo_ref, o_ref, *, inv_n, eps):
    """Per-batch fused GroupNorm -> q proj -> single-head cross-attn -> out proj -> +h.

    1/sqrt(E) is pre-folded into wq/bq.  S is tiny so the score/PV matmuls are degenerate
    for the MXU, but they share the kernel with two full (C x C) @ (C x HW) matmuls.
    """
    hf = h_ref[0].astype(jnp.float32)                      # (C, M)
    s1 = jnp.sum(hf, axis=1, keepdims=True)
    mean = jnp.dot(gmat_ref[...], s1, preferred_element_type=jnp.float32) * inv_n
    hc = hf - mean
    s2 = jnp.sum(hc * hc, axis=1, keepdims=True)
    var = jnp.dot(gmat_ref[...], s2, preferred_element_type=jnp.float32) * inv_n
    hn = hc * jax.lax.rsqrt(var + eps) * gamma_ref[...] + beta_ref[...]

    cd = wq_ref.dtype
    q = jnp.dot(wq_ref[...], hn.astype(cd), preferred_element_type=jnp.float32) + bq_ref[...]
    s = jnp.dot(kse_ref[0], q.astype(cd), preferred_element_type=jnp.float32)    # (S, M)
    s = s - jnp.max(s, axis=0, keepdims=True)
    probs = jnp.exp(s)
    probs = probs * pl.reciprocal(jnp.sum(probs, axis=0, keepdims=True), approx=True)
    attn = jnp.dot(v_ref[0], probs.astype(cd), preferred_element_type=jnp.float32)  # (C, M)
    out = (jnp.dot(wo_ref[...], attn.astype(cd), preferred_element_type=jnp.float32)
           + bo_ref[...] + hf)                                                      # residual
    o_ref[0] = out.astype(o_ref.dtype)


# ----------------------------------------------------------------------------
# Pallas wrappers
# ----------------------------------------------------------------------------

def tap_conv(x, w_taps, bias, masks, offsets, *, gn=None, bcast=None, res=None,
             out_dtype=jnp.bfloat16):
    """x: (B, K, M) -> (B, N, M).   w_taps: (T, N, K), bias: (N, 1), masks: (T, 1, M).

    gn = (gmat, gamma, beta, inv_n, apply_silu) fuses GroupNorm(+SiLU) before the taps.
    bcast: (B, N, 1) per-batch add.   res: (x_res (B, Kr, M), w_res (N, Kr)) fused 1x1 add.
    """
    B, K, M = x.shape
    T, N, _ = w_taps.shape

    args = [x]
    in_specs = [pl.BlockSpec((1, K, M), lambda b: (b, 0, 0))]
    if gn is not None:
        gmat, gamma, beta, inv_n, apply_silu = gn
        args += [gmat, gamma, beta]
        in_specs += [pl.BlockSpec((K, K), lambda b: (0, 0)),
                     pl.BlockSpec((K, 1), lambda b: (0, 0)),
                     pl.BlockSpec((K, 1), lambda b: (0, 0))]
    else:
        inv_n, apply_silu = 1.0, False
    args += [w_taps, bias, masks]
    in_specs += [pl.BlockSpec((T, N, K), lambda b: (0, 0, 0)),
                 pl.BlockSpec((N, 1), lambda b: (0, 0)),
                 pl.BlockSpec((T, 1, M), lambda b: (0, 0, 0))]
    if bcast is not None:
        args.append(bcast)
        in_specs.append(pl.BlockSpec((1, N, 1), lambda b: (b, 0, 0)))
    if res is not None:
        x_res, w_res = res
        Kr = x_res.shape[1]
        args += [x_res, w_res]
        in_specs += [pl.BlockSpec((1, Kr, M), lambda b: (b, 0, 0)),
                     pl.BlockSpec((N, Kr), lambda b: (0, 0))]

    kernel = functools.partial(
        _gn_conv_kernel, offsets=tuple(int(o) for o in offsets),
        has_gn=gn is not None, apply_silu=apply_silu, inv_n=float(inv_n),
        has_bcast=bcast is not None, has_res=res is not None, eps=1e-5)

    # TODO(synk): tile the M (=H*W) axis with halos and a second "parallel" grid axis for
    # v7x (64 MiB VMEM, 2 TensorCores); unnecessary at these block sizes.
    return pl.pallas_call(
        kernel,
        out_shape=jax.ShapeDtypeStruct((B, N, M), out_dtype),
        grid=(B,),
        in_specs=in_specs,
        out_specs=pl.BlockSpec((1, N, M), lambda b: (b, 0, 0)),
        compiler_params=pltpu.CompilerParams(dimension_semantics=("parallel",)),
    )(*args)


def attn_block(h, gmat, gamma, beta, wq, bq, k_se, v, wo, bo, *, inv_n, eps=1e-5,
               out_dtype=jnp.bfloat16):
    """h: (B, C, M), k_se: (B, S, C), v: (B, C, S) -> (B, C, M)."""
    B, C, M = h.shape
    S = k_se.shape[1]
    kernel = functools.partial(_attn_block_kernel, inv_n=float(inv_n), eps=eps)
    return pl.pallas_call(
        kernel,
        out_shape=jax.ShapeDtypeStruct((B, C, M), out_dtype),
        grid=(B,),
        in_specs=[pl.BlockSpec((1, C, M), lambda b: (b, 0, 0)),
                  pl.BlockSpec((C, C), lambda b: (0, 0)),
                  pl.BlockSpec((C, 1), lambda b: (0, 0)),
                  pl.BlockSpec((C, 1), lambda b: (0, 0)),
                  pl.BlockSpec((C, C), lambda b: (0, 0)),
                  pl.BlockSpec((C, 1), lambda b: (0, 0)),
                  pl.BlockSpec((1, S, C), lambda b: (b, 0, 0)),
                  pl.BlockSpec((1, C, S), lambda b: (b, 0, 0)),
                  pl.BlockSpec((C, C), lambda b: (0, 0)),
                  pl.BlockSpec((C, 1), lambda b: (0, 0))],
        out_specs=pl.BlockSpec((1, C, M), lambda b: (b, 0, 0)),
        compiler_params=pltpu.CompilerParams(dimension_semantics=("parallel",)),
    )(h, gmat, gamma, beta, wq, bq, k_se, v, wo, bo)


# ----------------------------------------------------------------------------
# DownBlock forward
# ----------------------------------------------------------------------------

def down_block_forward(p, x_nchw, t_emb, c_emb, *, num_group):
    """p: prepared (kernel-layout) params.  Returns (x_down, h) in NCHW, f32."""
    B, Cin, H, W = x_nchw.shape
    Cout = p["conv1_w"].shape[1]
    M = H * W
    cd = p["conv1_w"].dtype                                 # bf16 MXU operand dtype

    offs, masks = _conv_geometry(H, W, cd)                  # trace-time constants
    inv_n_in = 1.0 / ((Cin // num_group) * M)
    inv_n_out = 1.0 / ((Cout // num_group) * M)

    x_t = x_nchw.reshape(B, Cin, M)                         # NCHW -> (B, C, HW), stays f32

    # time-embedding projection: tiny -> plain XLA (no lane-width-1 pallas_call).
    t_act = t_emb * jax.nn.sigmoid(t_emb)
    t_proj = (t_act @ p["t_w"].T + p["t_b"]).reshape(B, Cout, 1)           # f32

    # CTCA resnet block 1: conv3x3(silu(gn1(x))) + bias + t_proj   (one fused kernel)
    h1 = tap_conv(x_t, p["conv1_w"], p["conv1_b"], masks, offs,
                  gn=(p["gmat_in"], p["gn1_w"], p["gn1_b"], inv_n_in, True),
                  bcast=t_proj)

    # resnet block 2: conv3x3(silu(gn2(h1))) + bias + 1x1 residual conv of x (one kernel)
    h = tap_conv(h1, p["conv2_w"], p["conv2_b"], masks, offs,
                 gn=(p["gmat_out"], p["gn2_w"], p["gn2_b"], inv_n_out, True),
                 res=(x_t, p["res_w"]))

    # context -> k / v projections: tiny (S tokens) -> plain XLA
    kv = jnp.einsum("bsc,nc->bns", c_emb, p["kv_w"]) + p["kv_b"][None, :, None]
    k_se = jnp.swapaxes(kv[:, :Cout, :], 1, 2).astype(cd)                  # (B, S, Cout)
    v = kv[:, Cout:, :].astype(cd)                                         # (B, Cout, S)

    # GroupNorm + single-head cross-attention + out proj + residual (one fused kernel)
    h = attn_block(h, p["gmat_out"], p["attn_gn_w"], p["attn_gn_b"],
                   p["wq"], p["bq"], k_se, v, p["wo"], p["bo"], inv_n=inv_n_out)

    # ConvDown 4x4 / stride 2 / pad 1: space-to-depth (one XLA transpose pass, not 16x
    # im2col) then a 3x3-tap conv over 4*Cout phase-channels with zero-padded weights.
    Ho, Wo = H // 2, W // 2
    hs = (h.reshape(B, Cout, Ho, 2, Wo, 2)
            .transpose(0, 3, 5, 1, 2, 4)
            .reshape(B, 4 * Cout, Ho * Wo))
    offs_d, masks_d = _conv_geometry(Ho, Wo, cd)
    xd = tap_conv(hs, p["down_w"], p["down_b"], masks_d, offs_d, out_dtype=jnp.float32)

    return (xd.reshape(B, Cout, Ho, Wo),
            h.reshape(B, Cout, H, W).astype(jnp.float32))


# ----------------------------------------------------------------------------
# Parameters: PyTorch-convention init + kernel-layout preparation
# ----------------------------------------------------------------------------

def init_params(key, in_c, out_c, t_dim, c_dim):
    ks = iter(jax.random.split(key, 32))

    def w(shape, scale=0.05):
        return jax.random.normal(next(ks), shape, jnp.float32) * scale

    return dict(
        gn1_w=1.0 + w((in_c,)), gn1_b=w((in_c,)),
        conv1_w=w((out_c, in_c, 3, 3)), conv1_b=w((out_c,)),
        t_w=w((out_c, t_dim)), t_b=w((out_c,)),                 # Linear(t_dim, out_c)
        gn2_w=1.0 + w((out_c,)), gn2_b=w((out_c,)),
        conv2_w=w((out_c, out_c, 3, 3)), conv2_b=w((out_c,)),
        res_w=w((out_c, in_c, 1, 1)), res_b=w((out_c,)),
        attn_gn_w=1.0 + w((out_c,)), attn_gn_b=w((out_c,)),
        ctx_w=w((out_c, c_dim)), ctx_b=w((out_c,)),             # Linear(c_dim, out_c)
        wq=w((out_c, out_c)), bq=w((out_c,)),
        wk=w((out_c, out_c)), bk=w((out_c,)),
        wv=w((out_c, out_c)), bv=w((out_c,)),
        wo=w((out_c, out_c)), bo=w((out_c,)),
        down_w=w((out_c, out_c, 4, 4)), down_b=w((out_c,)),
    )


def prepare_params(p, *, num_group, compute_dtype=jnp.bfloat16):
    """PyTorch-convention weights -> kernel layout: per-tap stacked conv weights, (C,1) f32
    norm/bias columns, precomputed group-membership matrices, folded attention scale,
    composed context->k/v projections, space-to-depth'd ConvDown weights."""
    cd = compute_dtype
    out_c, in_c = p["conv1_w"].shape[0], p["conv1_w"].shape[1]

    def taps3(w):                                            # (N, C, 3, 3) -> (9, N, C)
        return jnp.stack([w[:, :, dh + 1, dw + 1] for dh, dw in _TAPS3]).astype(cd)

    def col(v):                                              # (C,) -> (C, 1) f32
        return v.astype(jnp.float32).reshape(-1, 1)

    def gmat(c):                                             # group-membership (C, C) f32
        gid = np.arange(c) // (c // num_group)
        return jnp.asarray((gid[:, None] == gid[None, :]).astype(np.float32))

    # 4x4 / stride-2 weights -> 3x3 taps over space-to-depth phase channels (zeros where
    # a (tap, phase) combination falls outside the 4x4 kernel).
    wd = p["down_w"]
    dblocks = []
    for ah, aw in _TAPS3:
        blk = jnp.zeros((out_c, 2, 2, out_c), wd.dtype)
        for ph in range(2):
            for pw in range(2):
                kh, kw = 2 * ah + ph + 1, 2 * aw + pw + 1
                if 0 <= kh < 4 and 0 <= kw < 4:
                    blk = blk.at[:, ph, pw, :].set(wd[:, :, kh, kw])
        dblocks.append(blk.reshape(out_c, 4 * out_c))
    down_w = jnp.stack(dblocks).astype(cd)                   # (9, out_c, 4*out_c)

    scale = 1.0 / float(out_c) ** 0.5                        # attention 1/sqrt(E) -> q proj
    w_kc = p["wk"] @ p["ctx_w"]                              # compose ctx proj into k / v
    b_kc = p["wk"] @ p["ctx_b"] + p["bk"]
    w_vc = p["wv"] @ p["ctx_w"]
    b_vc = p["wv"] @ p["ctx_b"] + p["bv"]

    return dict(
        gmat_in=gmat(in_c), gmat_out=gmat(out_c),
        gn1_w=col(p["gn1_w"]), gn1_b=col(p["gn1_b"]),
        conv1_w=taps3(p["conv1_w"]), conv1_b=col(p["conv1_b"]),
        t_w=p["t_w"], t_b=p["t_b"],
        gn2_w=col(p["gn2_w"]), gn2_b=col(p["gn2_b"]),
        conv2_w=taps3(p["conv2_w"]), conv2_b=col(p["conv2_b"] + p["res_b"]),
        res_w=p["res_w"].reshape(out_c, in_c).astype(cd),
        attn_gn_w=col(p["attn_gn_w"]), attn_gn_b=col(p["attn_gn_b"]),
        wq=(p["wq"] * scale).astype(cd), bq=col(p["bq"] * scale),
        kv_w=jnp.concatenate([w_kc, w_vc], axis=0),
        kv_b=jnp.concatenate([b_kc, b_vc], axis=0),
        wo=p["wo"].astype(cd), bo=col(p["bo"]),
        down_w=down_w, down_b=col(p["down_b"]),
    )


# ----------------------------------------------------------------------------
# Pure-JAX reference (f32, original params) for a tolerance check
# ----------------------------------------------------------------------------

def _reference_forward(p0, x, t_emb, c_emb, *, num_group):
    def gn(a, w, b):
        B, C, H, W = a.shape
        g = num_group
        ag = a.reshape(B, g, C // g, H, W)
        mu = ag.mean(axis=(2, 3, 4), keepdims=True)
        var = ((ag - mu) ** 2).mean(axis=(2, 3, 4), keepdims=True)
        an = ((ag - mu) / jnp.sqrt(var + 1e-5)).reshape(B, C, H, W)
        return an * w[None, :, None, None] + b[None, :, None, None]

    def silu(a):
        return a * jax.nn.sigmoid(a)

    def conv(a, w, b, stride=1, pad=1):
        out = jax.lax.conv_general_dilated(
            a, w, (stride, stride), [(pad, pad), (pad, pad)],
            dimension_numbers=("NCHW", "OIHW", "NCHW"))
        return out + b[None, :, None, None]

    B, _, H, W = x.shape
    Cout = p0["conv1_w"].shape[0]
    h = conv(silu(gn(x, p0["gn1_w"], p0["gn1_b"])), p0["conv1_w"], p0["conv1_b"])
    t = silu(t_emb) @ p0["t_w"].T + p0["t_b"]
    h = h + t[:, :, None, None]
    h2 = conv(silu(gn(h, p0["gn2_w"], p0["gn2_b"])), p0["conv2_w"], p0["conv2_b"])
    h = h2 + conv(x, p0["res_w"], p0["res_b"], pad=0)
    hn = gn(h, p0["attn_gn_w"], p0["attn_gn_b"])
    q = jnp.einsum("nc,bchw->bnhw", p0["wq"], hn) + p0["bq"][None, :, None, None]
    ctx = c_emb @ p0["ctx_w"].T + p0["ctx_b"]
    k = ctx @ p0["wk"].T + p0["bk"]
    v = ctx @ p0["wv"].T + p0["bv"]
    qf = q.reshape(B, Cout, H * W)
    scores = jnp.einsum("bel,bse->bsl", qf, k) / jnp.sqrt(float(Cout))
    probs = jax.nn.softmax(scores, axis=1)
    attn = jnp.einsum("bse,bsl->bel", v, probs)
    h = h + (jnp.einsum("nc,bcl->bnl", p0["wo"], attn)
             + p0["bo"][None, :, None]).reshape(B, Cout, H, W)
    xd = conv(h, p0["down_w"], p0["down_b"], stride=2, pad=1)
    return xd, h


# ----------------------------------------------------------------------------

if __name__ == "__main__":
    B, Cin, Cout = 2, 8, 16
    H = W = 16
    t_dim, c_dim, S, G = 32, 32, 8, 8

    key = jax.random.PRNGKey(0)
    kx, kt, kc, kp = jax.random.split(key, 4)
    x = jax.random.normal(kx, (B, Cin, H, W), jnp.float32)      # NCHW like PyTorch
    t_emb = jax.random.normal(kt, (B, t_dim), jnp.float32)
    c_emb = jax.random.normal(kc, (B, S, c_dim), jnp.float32)

    raw = init_params(kp, Cin, Cout, t_dim, c_dim)
    params = prepare_params(raw, num_group=G)
    fwd = jax.jit(functools.partial(down_block_forward, num_group=G))

    x_down, h = fwd(params, x, t_emb, c_emb)
    jax.block_until_ready((x_down, h))

    assert x_down.shape == (B, Cout, H // 2, W // 2), x_down.shape
    assert h.shape == (B, Cout, H, W), h.shape
    assert bool(jnp.all(jnp.isfinite(x_down))) and bool(jnp.all(jnp.isfinite(h)))

    # Tolerance check against a pure-JAX f32 reference (bf16 MXU operands + approx
    # softmax reciprocal -> loose absolute tolerance).
    xd_ref, h_ref = jax.jit(functools.partial(_reference_forward, num_group=G))(
        raw, x, t_emb, c_emb)
    err_h = float(jnp.max(jnp.abs(h - h_ref)))
    err_x = float(jnp.max(jnp.abs(x_down - xd_ref)))
    assert err_h < 0.1 and err_x < 0.1, (err_h, err_x)

    print("KERNEL_OK")
</pallas_src>

<mosaic_0001>
module attributes {stable_mosaic.version = 11 : i64} {
  func.func @_gn_conv_kernel(%arg0: i32, %arg1: memref<1x16x256xbf16, #tpu.memory_space<vmem>>, %arg2: memref<16x16xf32, #tpu.memory_space<vmem>>, %arg3: memref<16x1xf32, #tpu.memory_space<vmem>>, %arg4: memref<16x1xf32, #tpu.memory_space<vmem>>, %arg5: memref<9x16x16xbf16, #tpu.memory_space<vmem>>, %arg6: memref<16x1xf32, #tpu.memory_space<vmem>>, %arg7: memref<9x1x256xbf16, #tpu.memory_space<vmem>>, %arg8: memref<1x8x256xf32, #tpu.memory_space<vmem>>, %arg9: memref<16x8xbf16, #tpu.memory_space<vmem>>, %arg10: memref<1x16x256xbf16, #tpu.memory_space<vmem>>) attributes {dimension_semantics = [#tpu.dimension_semantics<parallel>], iteration_bounds = array<i64: 2>, scalar_prefetch = 0 : i64, scratch_operands = 0 : i64, tpu.core_type = #tpu.core_type<tc>, window_params = [{transform_indices = @transform_0, window_bounds = array<i64: 1, 16, 256>}, {pipeline_mode = #tpu.pipeline_mode<synchronous>, transform_indices = @transform_1, window_bounds = array<i64: 16, 16>}, {pipeline_mode = #tpu.pipeline_mode<synchronous>, transform_indices = @transform_2, window_bounds = array<i64: 16, 1>}, {pipeline_mode = #tpu.pipeline_mode<synchronous>, transform_indices = @transform_3, window_bounds = array<i64: 16, 1>}, {pipeline_mode = #tpu.pipeline_mode<synchronous>, transform_indices = @transform_4, window_bounds = array<i64: 9, 16, 16>}, {pipeline_mode = #tpu.pipeline_mode<synchronous>, transform_indices = @transform_5, window_bounds = array<i64: 16, 1>}, {pipeline_mode = #tpu.pipeline_mode<synchronous>, transform_indices = @transform_6, window_bounds = array<i64: 9, 1, 256>}, {transform_indices = @transform_7, window_bounds = array<i64: 1, 8, 256>}, {pipeline_mode = #tpu.pipeline_mode<synchronous>, transform_indices = @transform_8, window_bounds = array<i64: 16, 8>}, {transform_indices = @transform_9, window_bounds = array<i64: 1, 16, 256>}]} {
    %c0 = arith.constant 0 : index
    %c0_0 = arith.constant 0 : index
    %c0_1 = arith.constant 0 : index
    %0 = vector.load %arg1[%c0, %c0_0, %c0_1] : memref<1x16x256xbf16, #tpu.memory_space<vmem>>, vector<1x16x256xbf16>
    %1 = vector.shape_cast %0 : vector<1x16x256xbf16> to vector<16x256xbf16>
    %2 = arith.extf %1 : vector<16x256xbf16> to vector<16x256xf32>
    %cst = arith.constant dense<0.000000e+00> : vector<16xf32>
    %3 = vector.multi_reduction <add>, %2, %cst [1] : vector<16x256xf32> to vector<16xf32>
    %4 = vector.shape_cast %3 : vector<16xf32> to vector<16x1xf32>
    %c0_2 = arith.constant 0 : index
    %c0_3 = arith.constant 0 : index
    %5 = vector.load %arg2[%c0_2, %c0_3] : memref<16x16xf32, #tpu.memory_space<vmem>>, vector<16x16xf32>
    %cst_4 = arith.constant dense<0.000000e+00> : vector<16x1xf32>
    %6 = tpu.matmul %5, %4, %cst_4 {dimension_numbers = #tpu.dot_dimension_numbers<[1], [0], [0], [1], [0, 0, 1, 1], [], []>} : vector<16x16xf32>, vector<16x1xf32>, vector<16x1xf32> -> vector<16x1xf32>
    %cst_5 = arith.constant 0.001953125 : f32
    %7 = vector.broadcast %cst_5 : f32 to vector<16x1xf32>
    %8 = arith.mulf %6, %7 : vector<16x1xf32>
    %9 = vector.broadcast %8 : vector<16x1xf32> to vector<16x256xf32>
    %10 = arith.subf %2, %9 : vector<16x256xf32>
    %11 = arith.mulf %10, %10 : vector<16x256xf32>
    %cst_6 = arith.constant dense<0.000000e+00> : vector<16xf32>
    %12 = vector.multi_reduction <add>, %11, %cst_6 [1] : vector<16x256xf32> to vector<16xf32>
    %13 = vector.shape_cast %12 : vector<16xf32> to vector<16x1xf32>
    %c0_7 = arith.constant 0 : index
    %c0_8 = arith.constant 0 : index
    %14 = vector.load %arg2[%c0_7, %c0_8] : memref<16x16xf32, #tpu.memory_space<vmem>>, vector<16x16xf32>
    %cst_9 = arith.constant dense<0.000000e+00> : vector<16x1xf32>
    %15 = tpu.matmul %14, %13, %cst_9 {dimension_numbers = #tpu.dot_dimension_numbers<[1], [0], [0], [1], [0, 0, 1, 1], [], []>} : vector<16x16xf32>, vector<16x1xf32>, vector<16x1xf32> -> vector<16x1xf32>
    %cst_10 = arith.constant 0.001953125 : f32
    %16 = vector.broadcast %cst_10 : f32 to vector<16x1xf32>
    %17 = arith.mulf %15, %16 : vector<16x1xf32>
    %cst_11 = arith.constant 9.99999974E-6 : f32
    %18 = vector.broadcast %cst_11 : f32 to vector<16x1xf32>
    %19 = arith.addf %17, %18 : vector<16x1xf32>
    %20 = math.rsqrt %19 : vector<16x1xf32>
    %21 = vector.broadcast %20 : vector<16x1xf32> to vector<16x256xf32>
    %22 = arith.mulf %10, %21 : vector<16x256xf32>
    %c0_12 = arith.constant 0 : index
    %c0_13 = arith.constant 0 : index
    %23 = vector.load %arg3[%c0_12, %c0_13] : memref<16x1xf32, #tpu.memory_space<vmem>>, vector<16x1xf32>
    %24 = vector.broadcast %23 : vector<16x1xf32> to vector<16x256xf32>
    %25 = arith.mulf %22, %24 : vector<16x256xf32>
    %c0_14 = arith.constant 0 : index
    %c0_15 = arith.constant 0 : index
    %26 = vector.load %arg4[%c0_14, %c0_15] : memref<16x1xf32, #tpu.memory_space<vmem>>, vector<16x1xf32>
    %27 = vector.broadcast %26 : vector<16x1xf32> to vector<16x256xf32>
    %28 = arith.addf %25, %27 : vector<16x256xf32>
    %29 = arith.negf %28 : vector<16x256xf32>
    %30 = math.exp %29 : vector<16x256xf32>
    %cst_16 = arith.constant 1.000000e+00 : f32
    %31 = vector.broadcast %cst_16 : f32 to vector<16x256xf32>
    %32 = arith.addf %31, %30 : vector<16x256xf32>
    %33 = arith.divf %31, %32 : vector<16x256xf32>
    %34 = arith.mulf %28, %33 : vector<16x256xf32>
    %35 = arith.truncf %34 : vector<16x256xf32> to vector<16x256xbf16>
    %cst_17 = arith.constant 0.000000e+00 : f32
    %36 = vector.broadcast %cst_17 : f32 to vector<16x256xf32>
    %37 = vector.extract_strided_slice %35 {offsets = [0, 239], sizes = [16, 17], strides = [1, 1]} : vector<16x256xbf16> to vector<16x17xbf16>
    %38 = vector.extract_strided_slice %35 {offsets = [0, 0], sizes = [16, 239], strides = [1, 1]} : vector<16x256xbf16> to vector<16x239xbf16>
    %39 = tpu.concatenate %37, %38 in 1 : vector<16x17xbf16>, vector<16x239xbf16> -> vector<16x256xbf16>
    %c0_18 = arith.constant 0 : index
    %c0_19 = arith.constant 0 : index
    %c0_20 = arith.constant 0 : index
    %40 = vector.load %arg7[%c0_18, %c0_19, %c0_20] : memref<9x1x256xbf16, #tpu.memory_space<vmem>>, vector<1x1x256xbf16>
    %41 = vector.shape_cast %40 : vector<1x1x256xbf16> to vector<1x256xbf16>
    %42 = vector.broadcast %41 : vector<1x256xbf16> to vector<16x256xbf16>
    %43 = arith.mulf %39, %42 : vector<16x256xbf16>
    %c0_21 = arith.constant 0 : index
    %c0_22 = arith.constant 0 : index
    %c0_23 = arith.constant 0 : index
    %44 = vector.load %arg5[%c0_21, %c0_22, %c0_23] : memref<9x16x16xbf16, #tpu.memory_space<vmem>>, vector<1x16x16xbf16>
    %45 = vector.shape_cast %44 : vector<1x16x16xbf16> to vector<16x16xbf16>
    %cst_24 = arith.constant dense<0.000000e+00> : vector<16x256xf32>
    %46 = tpu.matmul %45, %43, %cst_24 {dimension_numbers = #tpu.dot_dimension_numbers<[1], [0], [0], [1], [0, 0, 1, 1], [], []>} : vector<16x16xbf16>, vector<16x256xbf16>, vector<16x256xf32> -> vector<16x256xf32>
    %47 = arith.addf %36, %46 : vector<16x256xf32>
    %48 = vector.extract_strided_slice %35 {offsets = [0, 240], sizes = [16, 16], strides = [1, 1]} : vector<16x256xbf16> to vector<16x16xbf16>
    %49 = vector.extract_strided_slice %35 {offsets = [0, 0], sizes = [16, 240], strides = [1, 1]} : vector<16x256xbf16> to vector<16x240xbf16>
    %50 = tpu.concatenate %48, %49 in 1 : vector<16x16xbf16>, vector<16x240xbf16> -> vector<16x256xbf16>
    %c1 = arith.constant 1 : index
    %c0_25 = arith.constant 0 : index
    %c0_26 = arith.constant 0 : index
    %51 = vector.load %arg7[%c1, %c0_25, %c0_26] : memref<9x1x256xbf16, #tpu.memory_space<vmem>>, vector<1x1x256xbf16>
    %52 = vector.shape_cast %51 : vector<1x1x256xbf16> to vector<1x256xbf16>
    %53 = vector.broadcast %52 : vector<1x256xbf16> to vector<16x256xbf16>
    %54 = arith.mulf %50, %53 : vector<16x256xbf16>
    %c1_27 = arith.constant 1 : index
    %c0_28 = arith.constant 0 : index
    %c0_29 = arith.constant 0 : index
    %55 = vector.load %arg5[%c1_27, %c0_28, %c0_29] : memref<9x16x16xbf16, #tpu.memory_space<vmem>>, vector<1x16x16xbf16>
    %56 = vector.shape_cast %55 : vector<1x16x16xbf16> to vector<16x16xbf16>
    %cst_30 = arith.constant dense<0.000000e+00> : vector<16x256xf32>
    %57 = tpu.matmul %56, %54, %cst_30 {dimension_numbers = #tpu.dot_dimension_numbers<[1], [0], [0], [1], [0, 0, 1, 1], [], []>} : vector<16x16xbf16>, vector<16x256xbf16>, vector<16x256xf32> -> vector<16x256xf32>
    %58 = arith.addf %47, %57 : vector<16x256xf32>
    %59 = vector.extract_strided_slice %35 {offsets = [0, 241], sizes = [16, 15], strides = [1, 1]} : vector<16x256xbf16> to vector<16x15xbf16>
    %60 = vector.extract_strided_slice %35 {offsets = [0, 0], sizes = [16, 241], strides = [1, 1]} : vector<16x256xbf16> to vector<16x241xbf16>
    %61 = tpu.concatenate %59, %60 in 1 : vector<16x15xbf16>, vector<16x241xbf16> -> vector<16x256xbf16>
    %c2 = arith.constant 2 : index
    %c0_31 = arith.constant 0 : index
    %c0_32 = arith.constant 0 : index
    %62 = vector.load %arg7[%c2, %c0_31, %c0_32] : memref<9x1x256xbf16, #tpu.memory_space<vmem>>, vector<1x1x256xbf16>
    %63 = vector.shape_cast %62 : vector<1x1x256xbf16> to vector<1x256xbf16>
    %64 = vector.broadcast %63 : vector<1x256xbf16> to vector<16x256xbf16>
    %65 = arith.mulf %61, %64 : vector<16x256xbf16>
    %c2_33 = arith.constant 2 : index
    %c0_34 = arith.constant 0 : index
    %c0_35 = arith.constant 0 : index
    %66 = vector.load %arg5[%c2_33, %c0_34, %c0_35] : memref<9x16x16xbf16, #tpu.memory_space<vmem>>, vector<1x16x16xbf16>
    %67 = vector.shape_cast %66 : vector<1x16x16xbf16> to vector<16x16xbf16>
    %cst_36 = arith.constant dense<0.000000e+00> : vector<16x256xf32>
    %68 = tpu.matmul %67, %65, %cst_36 {dimension_numbers = #tpu.dot_dimension_numbers<[1], [0], [0], [1], [0, 0, 1, 1], [], []>} : vector<16x16xbf16>, vector<16x256xbf16>, vector<16x256xf32> -> vector<16x256xf32>
    %69 = arith.addf %58, %68 : vector<16x256xf32>
    %70 = vector.extract_strided_slice %35 {offsets = [0, 255], sizes = [16, 1], strides = [1, 1]} : vector<16x256xbf16> to vector<16x1xbf16>
    %71 = vector.extract_strided_slice %35 {offsets = [0, 0], sizes = [16, 255], strides = [1, 1]} : vector<16x256xbf16> to vector<16x255xbf16>
    %72 = tpu.concatenate %70, %71 in 1 : vector<16x1xbf16>, vector<16x255xbf16> -> vector<16x256xbf16>
    %c3 = arith.constant 3 : index
    %c0_37 = arith.constant 0 : index
    %c0_38 = arith.constant 0 : index
    %73 = vector.load %arg7[%c3, %c0_37, %c0_38] : memref<9x1x256xbf16, #tpu.memory_space<vmem>>, vector<1x1x256xbf16>
    %74 = vector.shape_cast %73 : vector<1x1x256xbf16> to vector<1x256xbf16>
    %75 = vector.broadcast %74 : vector<1x256xbf16> to vector<16x256xbf16>
    %76 = arith.mulf %72, %75 : vector<16x256xbf16>
    %c3_39 = arith.constant 3 : index
    %c0_40 = arith.constant 0 : index
    %c0_41 = arith.constant 0 : index
    %77 = vector.load %arg5[%c3_39, %c0_40, %c0_41] : memref<9x16x16xbf16, #tpu.memory_space<vmem>>, vector<1x16x16xbf16>
    %78 = vector.shape_cast %77 : vector<1x16x16xbf16> to vector<16x16xbf16>
    %cst_42 = arith.constant dense<0.000000e+00> : vector<16x256xf32>
    %79 = tpu.matmul %78, %76, %cst_42 {dimension_numbers = #tpu.dot_dimension_numbers<[1], [0], [0], [1], [0, 0, 1, 1], [], []>} : vector<16x16xbf16>, vector<16x256xbf16>, vector<16x256xf32> -> vector<16x256xf32>
    %80 = arith.addf %69, %79 : vector<16x256xf32>
    %c4 = arith.constant 4 : index
    %c0_43 = arith.constant 0 : index
    %c0_44 = arith.constant 0 : index
    %81 = vector.load %arg5[%c4, %c0_43, %c0_44] : memref<9x16x16xbf16, #tpu.memory_space<vmem>>, vector<1x16x16xbf16>
    %82 = vector.shape_cast %81 : vector<1x16x16xbf16> to vector<16x16xbf16>
    %cst_45 = arith.constant dense<0.000000e+00> : vector<16x256xf32>
    %83 = tpu.matmul %82, %35, %cst_45 {dimension_numbers = #tpu.dot_dimension_numbers<[1], [0], [0], [1], [0, 0, 1, 1], [], []>} : vector<16x16xbf16>, vector<16x256xbf16>, vector<16x256xf32> -> vector<16x256xf32>
    %84 = arith.addf %80, %83 : vector<16x256xf32>
    %85 = vector.extract_strided_slice %35 {offsets = [0, 1], sizes = [16, 255], strides = [1, 1]} : vector<16x256xbf16> to vector<16x255xbf16>
    %86 = vector.extract_strided_slice %35 {offsets = [0, 0], sizes = [16, 1], strides = [1, 1]} : vector<16x256xbf16> to vector<16x1xbf16>
    %87 = tpu.concatenate %85, %86 in 1 : vector<16x255xbf16>, vector<16x1xbf16> -> vector<16x256xbf16>
    %c5 = arith.constant 5 : index
    %c0_46 = arith.constant 0 : index
    %c0_47 = arith.constant 0 : index
    %88 = vector.load %arg7[%c5, %c0_46, %c0_47] : memref<9x1x256xbf16, #tpu.memory_space<vmem>>, vector<1x1x256xbf16>
    %89 = vector.shape_cast %88 : vector<1x1x256xbf16> to vector<1x256xbf16>
    %90 = vector.broadcast %89 : vector<1x256xbf16> to vector<16x256xbf16>
    %91 = arith.mulf %87, %90 : vector<16x256xbf16>
    %c5_48 = arith.constant 5 : index
    %c0_49 = arith.constant 0 : index
    %c0_50 = arith.constant 0 : index
    %92 = vector.load %arg5[%c5_48, %c0_49, %c0_50] : memref<9x16x16xbf16, #tpu.memory_space<vmem>>, vector<1x16x16xbf16>
    %93 = vector.shape_cast %92 : vector<1x16x16xbf16> to vector<16x16xbf16>
    %cst_51 = arith.constant dense<0.000000e+00> : vector<16x256xf32>
    %94 = tpu.matmul %93, %91, %cst_51 {dimension_numbers = #tpu.dot_dimension_numbers<[1], [0], [0], [1], [0, 0, 1, 1], [], []>} : vector<16x16xbf16>, vector<16x256xbf16>, vector<16x256xf32> -> vector<16x256xf32>
    %95 = arith.addf %84, %94 : vector<16x256xf32>
    %96 = vector.extract_strided_slice %35 {offsets = [0, 15], sizes = [16, 241], strides = [1, 1]} : vector<16x256xbf16> to vector<16x241xbf16>
    %97 = vector.extract_strided_slice %35 {offsets = [0, 0], sizes = [16, 15], strides = [1, 1]} : vector<16x256xbf16> to vector<16x15xbf16>
    %98 = tpu.concatenate %96, %97 in 1 : vector<16x241xbf16>, vector<16x15xbf16> -> vector<16x256xbf16>
    %c6 = arith.constant 6 : index
    %c0_52 = arith.constant 0 : index
    %c0_53 = arith.constant 0 : index
    %99 = vector.load %arg7[%c6, %c0_52, %c0_53] : memref<9x1x256xbf16, #tpu.memory_space<vmem>>, vector<1x1x256xbf16>
    %100 = vector.shape_cast %99 : vector<1x1x256xbf16> to vector<1x256xbf16>
    %101 = vector.broadcast %100 : vector<1x256xbf16> to vector<16x256xbf16>
    %102 = arith.mulf %98, %101 : vector<16x256xbf16>
    %c6_54 = arith.constant 6 : index
    %c0_55 = arith.constant 0 : index
    %c0_56 = arith.constant 0 : index
    %103 = vector.load %arg5[%c6_54, %c0_55, %c0_56] : memref<9x16x16xbf16, #tpu.memory_space<vmem>>, vector<1x16x16xbf16>
    %104 = vector.shape_cast %103 : vector<1x16x16xbf16> to vector<16x16xbf16>
    %cst_57 = arith.constant dense<0.000000e+00> : vector<16x256xf32>
    %105 = tpu.matmul %104, %102, %cst_57 {dimension_numbers = #tpu.dot_dimension_numbers<[1], [0], [0], [1], [0, 0, 1, 1], [], []>} : vector<16x16xbf16>, vector<16x256xbf16>, vector<16x256xf32> -> vector<16x256xf32>
    %106 = arith.addf %95, %105 : vector<16x256xf32>
    %107 = vector.extract_strided_slice %35 {offsets = [0, 16], sizes = [16, 240], strides = [1, 1]} : vector<16x256xbf16> to vector<16x240xbf16>
    %108 = vector.extract_strided_slice %35 {offsets = [0, 0], sizes = [16, 16], strides = [1, 1]} : vector<16x256xbf16> to vector<16x16xbf16>
    %109 = tpu.concatenate %107, %108 in 1 : vector<16x240xbf16>, vector<16x16xbf16> -> vector<16x256xbf16>
    %c7 = arith.constant 7 : index
    %c0_58 = arith.constant 0 : index
    %c0_59 = arith.constant 0 : index
    %110 = vector.load %arg7[%c7, %c0_58, %c0_59] : memref<9x1x256xbf16, #tpu.memory_space<vmem>>, vector<1x1x256xbf16>
    %111 = vector.shape_cast %110 : vector<1x1x256xbf16> to vector<1x256xbf16>
    %112 = vector.broadcast %111 : vector<1x256xbf16> to vector<16x256xbf16>
    %113 = arith.mulf %109, %112 : vector<16x256xbf16>
    %c7_60 = arith.constant 7 : index
    %c0_61 = arith.constant 0 : index
    %c0_62 = arith.constant 0 : index
    %114 = vector.load %arg5[%c7_60, %c0_61, %c0_62] : memref<9x16x16xbf16, #tpu.memory_space<vmem>>, vector<1x16x16xbf16>
    %115 = vector.shape_cast %114 : vector<1x16x16xbf16> to vector<16x16xbf16>
    %cst_63 = arith.constant dense<0.000000e+00> : vector<16x256xf32>
    %116 = tpu.matmul %115, %113, %cst_63 {dimension_numbers = #tpu.dot_dimension_numbers<[1], [0], [0], [1], [0, 0, 1, 1], [], []>} : vector<16x16xbf16>, vector<16x256xbf16>, vector<16x256xf32> -> vector<16x256xf32>
    %117 = arith.addf %106, %116 : vector<16x256xf32>
    %118 = vector.extract_strided_slice %35 {offsets = [0, 17], sizes = [16, 239], strides = [1, 1]} : vector<16x256xbf16> to vector<16x239xbf16>
    %119 = vector.extract_strided_slice %35 {offsets = [0, 0], sizes = [16, 17], strides = [1, 1]} : vector<16x256xbf16> to vector<16x17xbf16>
    %120 = tpu.concatenate %118, %119 in 1 : vector<16x239xbf16>, vector<16x17xbf16> -> vector<16x256xbf16>
    %c8 = arith.constant 8 : index
    %c0_64 = arith.constant 0 : index
    %c0_65 = arith.constant 0 : index
    %121 = vector.load %arg7[%c8, %c0_64, %c0_65] : memref<9x1x256xbf16, #tpu.memory_space<vmem>>, vector<1x1x256xbf16>
    %122 = vector.shape_cast %121 : vector<1x1x256xbf16> to vector<1x256xbf16>
    %123 = vector.broadcast %122 : vector<1x256xbf16> to vector<16x256xbf16>
    %124 = arith.mulf %120, %123 : vector<16x256xbf16>
    %c8_66 = arith.constant 8 : index
    %c0_67 = arith.constant 0 : index
    %c0_68 = arith.constant 0 : index
    %125 = vector.load %arg5[%c8_66, %c0_67, %c0_68] : memref<9x16x16xbf16, #tpu.memory_space<vmem>>, vector<1x16x16xbf16>
    %126 = vector.shape_cast %125 : vector<1x16x16xbf16> to vector<16x16xbf16>
    %cst_69 = arith.constant dense<0.000000e+00> : vector<16x256xf32>
    %127 = tpu.matmul %126, %124, %cst_69 {dimension_numbers = #tpu.dot_dimension_numbers<[1], [0], [0], [1], [0, 0, 1, 1], [], []>} : vector<16x16xbf16>, vector<16x256xbf16>, vector<16x256xf32> -> vector<16x256xf32>
    %128 = arith.addf %117, %127 : vector<16x256xf32>
    %c0_70 = arith.constant 0 : index
    %c0_71 = arith.constant 0 : index
    %129 = vector.load %arg6[%c0_70, %c0_71] : memref<16x1xf32, #tpu.memory_space<vmem>>, vector<16x1xf32>
    %130 = vector.broadcast %129 : vector<16x1xf32> to vector<16x256xf32>
    %131 = arith.addf %128, %130 : vector<16x256xf32>
    %c0_72 = arith.constant 0 : index
    %c0_73 = arith.constant 0 : index
    %132 = vector.load %arg9[%c0_72, %c0_73] : memref<16x8xbf16, #tpu.memory_space<vmem>>, vector<16x8xbf16>
    %c0_74 = arith.constant 0 : index
    %c0_75 = arith.constant 0 : index
    %c0_76 = arith.constant 0 : index
    %133 = vector.load %arg8[%c0_74, %c0_75, %c0_76] : memref<1x8x256xf32, #tpu.memory_space<vmem>>, vector<1x8x256xf32>
    %134 = vector.shape_cast %133 : vector<1x8x256xf32> to vector<8x256xf32>
    %135 = arith.truncf %134 : vector<8x256xf32> to vector<8x256xbf16>
    %cst_77 = arith.constant dense<0.000000e+00> : vector<16x256xf32>
    %136 = tpu.matmul %132, %135, %cst_77 {dimension_numbers = #tpu.dot_dimension_numbers<[1], [0], [0], [1], [0, 0, 1, 1], [], []>} : vector<16x8xbf16>, vector<8x256xbf16>, vector<16x256xf32> -> vector<16x256xf32>
    %137 = arith.addf %131, %136 : vector<16x256xf32>
    %138 = arith.truncf %137 : vector<16x256xf32> to vector<16x256xbf16>
    %c0_78 = arith.constant 0 : index
    %c0_79 = arith.constant 0 : index
    %c0_80 = arith.constant 0 : index
    %139 = vector.load %arg10[%c0_78, %c0_79, %c0_80] : memref<1x16x256xbf16, #tpu.memory_space<vmem>>, vector<1x16x256xbf16>
    %140 = vector.shape_cast %139 : vector<1x16x256xbf16> to vector<16x256xbf16>
    %141 = vector.shape_cast %138 : vector<16x256xbf16> to vector<1x16x256xbf16>
    tpu.vector_store %arg10[%c0_78, %c0_79, %c0_80], %141 {strides = array<i32>} : memref<1x16x256xbf16, #tpu.memory_space<vmem>>, vector<1x16x256xbf16>,
    return
  }
  func.func @transform_0(%arg0: i32) -> (i32, i32, i32) {
    %c0_i32 = arith.constant 0 : i32
    %c0_i32_0 = arith.constant 0 : i32
    %c0_i32_1 = arith.constant 0 : i32
    return %arg0, %c0_i32, %c0_i32_0 : i32, i32, i32
  }
  func.func @transform_1(%arg0: i32) -> (i32, i32) {
    %c0_i32 = arith.constant 0 : i32
    %c0_i32_0 = arith.constant 0 : i32
    %c0_i32_1 = arith.constant 0 : i32
    return %c0_i32, %c0_i32_0 : i32, i32
  }
  func.func @transform_2(%arg0: i32) -> (i32, i32) {
    %c0_i32 = arith.constant 0 : i32
    %c0_i32_0 = arith.constant 0 : i32
    %c0_i32_1 = arith.constant 0 : i32
    return %c0_i32, %c0_i32_0 : i32, i32
  }
  func.func @transform_3(%arg0: i32) -> (i32, i32) {
    %c0_i32 = arith.constant 0 : i32
    %c0_i32_0 = arith.constant 0 : i32
    %c0_i32_1 = arith.constant 0 : i32
    return %c0_i32, %c0_i32_0 : i32, i32
  }
  func.func @transform_4(%arg0: i32) -> (i32, i32, i32) {
    %c0_i32 = arith.constant 0 : i32
    %c0_i32_0 = arith.constant 0 : i32
    %c0_i32_1 = arith.constant 0 : i32
    %c0_i32_2 = arith.constant 0 : i32
    return %c0_i32, %c0_i32_0, %c0_i32_1 : i32, i32, i32
  }
  func.func @transform_5(%arg0: i32) -> (i32, i32) {
    %c0_i32 = arith.constant 0 : i32
    %c0_i32_0 = arith.constant 0 : i32
    %c0_i32_1 = arith.constant 0 : i32
    return %c0_i32, %c0_i32_0 : i32, i32
  }
  func.func @transform_6(%arg0: i32) -> (i32, i32, i32) {
    %c0_i32 = arith.constant 0 : i32
    %c0_i32_0 = arith.constant 0 : i32
    %c0_i32_1 = arith.constant 0 : i32
    %c0_i32_2 = arith.constant 0 : i32
    return %c0_i32, %c0_i32_0, %c0_i32_1 : i32, i32, i32
  }
  func.func @transform_7(%arg0: i32) -> (i32, i32, i32) {
    %c0_i32 = arith.constant 0 : i32
    %c0_i32_0 = arith.constant 0 : i32
    %c0_i32_1 = arith.constant 0 : i32
    return %arg0, %c0_i32, %c0_i32_0 : i32, i32, i32
  }
  func.func @transform_8(%arg0: i32) -> (i32, i32) {
    %c0_i32 = arith.constant 0 : i32
    %c0_i32_0 = arith.constant 0 : i32
    %c0_i32_1 = arith.constant 0 : i32
    return %c0_i32, %c0_i32_0 : i32, i32
  }
  func.func @transform_9(%arg0: i32) -> (i32, i32, i32) {
    %c0_i32 = arith.constant 0 : i32
    %c0_i32_0 = arith.constant 0 : i32
    %c0_i32_1 = arith.constant 0 : i32
    return %arg0, %c0_i32, %c0_i32_0 : i32, i32, i32
  }
}

module attributes {stable_mosaic.version = 11 : i64} {
  func.func @_attn_block_kernel(%arg0: i32, %arg1: memref<1x16x256xbf16, #tpu.memory_space<vmem>>, %arg2: memref<16x16xf32, #tpu.memory_space<vmem>>, %arg3: memref<16x1xf32, #tpu.memory_space<vmem>>, %arg4: memref<16x1xf32, #tpu.memory_space<vmem>>, %arg5: memref<16x16xbf16, #tpu.memory_space<vmem>>, %arg6: memref<16x1xf32, #tpu.memory_space<vmem>>, %arg7: memref<1x8x16xbf16, #tpu.memory_space<vmem>>, %arg8: memref<1x16x8xbf16, #tpu.memory_space<vmem>>, %arg9: memref<16x16xbf16, #tpu.memory_space<vmem>>, %arg10: memref<16x1xf32, #tpu.memory_space<vmem>>, %arg11: memref<1x16x256xbf16, #tpu.memory_space<vmem>>) attributes {dimension_semantics = [#tpu.dimension_semantics<parallel>], iteration_bounds = array<i64: 2>, scalar_prefetch = 0 : i64, scratch_operands = 0 : i64, tpu.core_type = #tpu.core_type<tc>, window_params = [{transform_indices = @transform_0, window_bounds = array<i64: 1, 16, 256>}, {pipeline_mode = #tpu.pipeline_mode<synchronous>, transform_indices = @transform_1, window_bounds = array<i64: 16, 16>}, {pipeline_mode = #tpu.pipeline_mode<synchronous>, transform_indices = @transform_2, window_bounds = array<i64: 16, 1>}, {pipeline_mode = #tpu.pipeline_mode<synchronous>, transform_indices = @transform_3, window_bounds = array<i64: 16, 1>}, {pipeline_mode = #tpu.pipeline_mode<synchronous>, transform_indices = @transform_4, window_bounds = array<i64: 16, 16>}, {pipeline_mode = #tpu.pipeline_mode<synchronous>, transform_indices = @transform_5, window_bounds = array<i64: 16, 1>}, {transform_indices = @transform_6, window_bounds = array<i64: 1, 8, 16>}, {transform_indices = @transform_7, window_bounds = array<i64: 1, 16, 8>}, {pipeline_mode = #tpu.pipeline_mode<synchronous>, transform_indices = @transform_8, window_bounds = array<i64: 16, 16>}, {pipeline_mode = #tpu.pipeline_mode<synchronous>, transform_indices = @transform_9, window_bounds = array<i64: 16, 1>}, {transform_indices = @transform_10, window_bounds = array<i64: 1, 16, 256>}]} {
    %c0 = arith.constant 0 : index
    %c0_0 = arith.constant 0 : index
    %c0_1 = arith.constant 0 : index
    %0 = vector.load %arg1[%c0, %c0_0, %c0_1] : memref<1x16x256xbf16, #tpu.memory_space<vmem>>, vector<1x16x256xbf16>
    %1 = vector.shape_cast %0 : vector<1x16x256xbf16> to vector<16x256xbf16>
    %2 = arith.extf %1 : vector<16x256xbf16> to vector<16x256xf32>
    %cst = arith.constant dense<0.000000e+00> : vector<16xf32>
    %3 = vector.multi_reduction <add>, %2, %cst [1] : vector<16x256xf32> to vector<16xf32>
    %4 = vector.shape_cast %3 : vector<16xf32> to vector<16x1xf32>
    %c0_2 = arith.constant 0 : index
    %c0_3 = arith.constant 0 : index
    %5 = vector.load %arg2[%c0_2, %c0_3] : memref<16x16xf32, #tpu.memory_space<vmem>>, vector<16x16xf32>
    %cst_4 = arith.constant dense<0.000000e+00> : vector<16x1xf32>
    %6 = tpu.matmul %5, %4, %cst_4 {dimension_numbers = #tpu.dot_dimension_numbers<[1], [0], [0], [1], [0, 0, 1, 1], [], []>} : vector<16x16xf32>, vector<16x1xf32>, vector<16x1xf32> -> vector<16x1xf32>
    %cst_5 = arith.constant 0.001953125 : f32
    %7 = vector.broadcast %cst_5 : f32 to vector<16x1xf32>
    %8 = arith.mulf %6, %7 : vector<16x1xf32>
    %9 = vector.broadcast %8 : vector<16x1xf32> to vector<16x256xf32>
    %10 = arith.subf %2, %9 : vector<16x256xf32>
    %11 = arith.mulf %10, %10 : vector<16x256xf32>
    %cst_6 = arith.constant dense<0.000000e+00> : vector<16xf32>
    %12 = vector.multi_reduction <add>, %11, %cst_6 [1] : vector<16x256xf32> to vector<16xf32>
    %13 = vector.shape_cast %12 : vector<16xf32> to vector<16x1xf32>
    %c0_7 = arith.constant 0 : index
    %c0_8 = arith.constant 0 : index
    %14 = vector.load %arg2[%c0_7, %c0_8] : memref<16x16xf32, #tpu.memory_space<vmem>>, vector<16x16xf32>
    %cst_9 = arith.constant dense<0.000000e+00> : vector<16x1xf32>
    %15 = tpu.matmul %14, %13, %cst_9 {dimension_numbers = #tpu.dot_dimension_numbers<[1], [0], [0], [1], [0, 0, 1, 1], [], []>} : vector<16x16xf32>, vector<16x1xf32>, vector<16x1xf32> -> vector<16x1xf32>
    %cst_10 = arith.constant 0.001953125 : f32
    %16 = vector.broadcast %cst_10 : f32 to vector<16x1xf32>
    %17 = arith.mulf %15, %16 : vector<16x1xf32>
    %cst_11 = arith.constant 9.99999974E-6 : f32
    %18 = vector.broadcast %cst_11 : f32 to vector<16x1xf32>
    %19 = arith.addf %17, %18 : vector<16x1xf32>
    %20 = math.rsqrt %19 : vector<16x1xf32>
    %21 = vector.broadcast %20 : vector<16x1xf32> to vector<16x256xf32>
    %22 = arith.mulf %10, %21 : vector<16x256xf32>
    %c0_12 = arith.constant 0 : index
    %c0_13 = arith.constant 0 : index
    %23 = vector.load %arg3[%c0_12, %c0_13] : memref<16x1xf32, #tpu.memory_space<vmem>>, vector<16x1xf32>
    %24 = vector.broadcast %23 : vector<16x1xf32> to vector<16x256xf32>
    %25 = arith.mulf %22, %24 : vector<16x256xf32>
    %c0_14 = arith.constant 0 : index
    %c0_15 = arith.constant 0 : index
    %26 = vector.load %arg4[%c0_14, %c0_15] : memref<16x1xf32, #tpu.memory_space<vmem>>, vector<16x1xf32>
    %27 = vector.broadcast %26 : vector<16x1xf32> to vector<16x256xf32>
    %28 = arith.addf %25, %27 : vector<16x256xf32>
    %c0_16 = arith.constant 0 : index
    %c0_17 = arith.constant 0 : index
    %29 = vector.load %arg5[%c0_16, %c0_17] : memref<16x16xbf16, #tpu.memory_space<vmem>>, vector<16x16xbf16>
    %30 = arith.truncf %28 : vector<16x256xf32> to vector<16x256xbf16>
    %cst_18 = arith.constant dense<0.000000e+00> : vector<16x256xf32>
    %31 = tpu.matmul %29, %30, %cst_18 {dimension_numbers = #tpu.dot_dimension_numbers<[1], [0], [0], [1], [0, 0, 1, 1], [], []>} : vector<16x16xbf16>, vector<16x256xbf16>, vector<16x256xf32> -> vector<16x256xf32>
    %c0_19 = arith.constant 0 : index
    %c0_20 = arith.constant 0 : index
    %32 = vector.load %arg6[%c0_19, %c0_20] : memref<16x1xf32, #tpu.memory_space<vmem>>, vector<16x1xf32>
    %33 = vector.broadcast %32 : vector<16x1xf32> to vector<16x256xf32>
    %34 = arith.addf %31, %33 : vector<16x256xf32>
    %c0_21 = arith.constant 0 : index
    %c0_22 = arith.constant 0 : index
    %c0_23 = arith.constant 0 : index
    %35 = vector.load %arg7[%c0_21, %c0_22, %c0_23] : memref<1x8x16xbf16, #tpu.memory_space<vmem>>, vector<1x8x16xbf16>
    %36 = vector.shape_cast %35 : vector<1x8x16xbf16> to vector<8x16xbf16>
    %37 = arith.truncf %34 : vector<16x256xf32> to vector<16x256xbf16>
    %cst_24 = arith.constant dense<0.000000e+00> : vector<8x256xf32>
    %38 = tpu.matmul %36, %37, %cst_24 {dimension_numbers = #tpu.dot_dimension_numbers<[1], [0], [0], [1], [0, 0, 1, 1], [], []>} : vector<8x16xbf16>, vector<16x256xbf16>, vector<8x256xf32> -> vector<8x256xf32>
    %cst_25 = arith.constant dense<0xFF800000> : vector<256xf32>
    %39 = vector.multi_reduction <maximumf>, %38, %cst_25 [0] : vector<8x256xf32> to vector<256xf32>
    %40 = vector.shape_cast %39 : vector<256xf32> to vector<1x256xf32>
    %41 = vector.broadcast %40 : vector<1x256xf32> to vector<8x256xf32>
    %42 = arith.subf %38, %41 : vector<8x256xf32>
    %43 = math.exp %42 : vector<8x256xf32>
    %cst_26 = arith.constant dense<0.000000e+00> : vector<256xf32>
    %44 = vector.multi_reduction <add>, %43, %cst_26 [0] : vector<8x256xf32> to vector<256xf32>
    %45 = vector.shape_cast %44 : vector<256xf32> to vector<1x256xf32>
    %46 = tpu.reciprocal %45 {approx = true} : vector<1x256xf32> -> vector<1x256xf32>
    %47 = vector.broadcast %46 : vector<1x256xf32> to vector<8x256xf32>
    %48 = arith.mulf %43, %47 : vector<8x256xf32>
    %c0_27 = arith.constant 0 : index
    %c0_28 = arith.constant 0 : index
    %c0_29 = arith.constant 0 : index
    %49 = vector.load %arg8[%c0_27, %c0_28, %c0_29] : memref<1x16x8xbf16, #tpu.memory_space<vmem>>, vector<1x16x8xbf16>
    %50 = vector.shape_cast %49 : vector<1x16x8xbf16> to vector<16x8xbf16>
    %51 = arith.truncf %48 : vector<8x256xf32> to vector<8x256xbf16>
    %cst_30 = arith.constant dense<0.000000e+00> : vector<16x256xf32>
    %52 = tpu.matmul %50, %51, %cst_30 {dimension_numbers = #tpu.dot_dimension_numbers<[1], [0], [0], [1], [0, 0, 1, 1], [], []>} : vector<16x8xbf16>, vector<8x256xbf16>, vector<16x256xf32> -> vector<16x256xf32>
    %c0_31 = arith.constant 0 : index
    %c0_32 = arith.constant 0 : index
    %53 = vector.load %arg9[%c0_31, %c0_32] : memref<16x16xbf16, #tpu.memory_space<vmem>>, vector<16x16xbf16>
    %54 = arith.truncf %52 : vector<16x256xf32> to vector<16x256xbf16>
    %cst_33 = arith.constant dense<0.000000e+00> : vector<16x256xf32>
    %55 = tpu.matmul %53, %54, %cst_33 {dimension_numbers = #tpu.dot_dimension_numbers<[1], [0], [0], [1], [0, 0, 1, 1], [], []>} : vector<16x16xbf16>, vector<16x256xbf16>, vector<16x256xf32> -> vector<16x256xf32>
    %c0_34 = arith.constant 0 : index
    %c0_35 = arith.constant 0 : index
    %56 = vector.load %arg10[%c0_34, %c0_35] : memref<16x1xf32, #tpu.memory_space<vmem>>, vector<16x1xf32>
    %57 = vector.broadcast %56 : vector<16x1xf32> to vector<16x256xf32>
    %58 = arith.addf %55, %57 : vector<16x256xf32>
    %59 = arith.addf %58, %2 : vector<16x256xf32>
    %60 = arith.truncf %59 : vector<16x256xf32> to vector<16x256xbf16>
    %c0_36 = arith.constant 0 : index
    %c0_37 = arith.constant 0 : index
    %c0_38 = arith.constant 0 : index
    %61 = vector.load %arg11[%c0_36, %c0_37, %c0_38] : memref<1x16x256xbf16, #tpu.memory_space<vmem>>, vector<1x16x256xbf16>
    %62 = vector.shape_cast %61 : vector<1x16x256xbf16> to vector<16x256xbf16>
    %63 = vector.shape_cast %60 : vector<16x256xbf16> to vector<1x16x256xbf16>
    tpu.vector_store %arg11[%c0_36, %c0_37, %c0_38], %63 {strides = array<i32>} : memref<1x16x256xbf16, #tpu.memory_space<vmem>>, vector<1x16x256xbf16>,
    return
  }
  func.func @transform_0(%arg0: i32) -> (i32, i32, i32) {
    %c0_i32 = arith.constant 0 : i32
    %c0_i32_0 = arith.constant 0 : i32
    %c0_i32_1 = arith.constant 0 : i32
    return %arg0, %c0_i32, %c0_i32_0 : i32, i32, i32
  }
  func.func @transform_1(%arg0: i32) -> (i32, i32) {
    %c0_i32 = arith.constant 0 : i32
    %c0_i32_0 = arith.constant 0 : i32
    %c0_i32_1 = arith.constant 0 : i32
    return %c0_i32, %c0_i32_0 : i32, i32
  }
  func.func @transform_2(%arg0: i32) -> (i32, i32) {
    %c0_i32 = arith.constant 0 : i32
    %c0_i32_0 = arith.constant 0 : i32
    %c0_i32_1 = arith.constant 0 : i32
    return %c0_i32, %c0_i32_0 : i32, i32
  }
  func.func @transform_3(%arg0: i32) -> (i32, i32) {
    %c0_i32 = arith.constant 0 : i32
    %c0_i32_0 = arith.constant 0 : i32
    %c0_i32_1 = arith.constant 0 : i32
    return %c0_i32, %c0_i32_0 : i32, i32
  }
  func.func @transform_4(%arg0: i32) -> (i32, i32) {
    %c0_i32 = arith.constant 0 : i32
    %c0_i32_0 = arith.constant 0 : i32
    %c0_i32_1 = arith.constant 0 : i32
    return %c0_i32, %c0_i32_0 : i32, i32
  }
  func.func @transform_5(%arg0: i32) -> (i32, i32) {
    %c0_i32 = arith.constant 0 : i32
    %c0_i32_0 = arith.constant 0 : i32
    %c0_i32_1 = arith.constant 0 : i32
    return %c0_i32, %c0_i32_0 : i32, i32
  }
  func.func @transform_6(%arg0: i32) -> (i32, i32, i32) {
    %c0_i32 = arith.constant 0 : i32
    %c0_i32_0 = arith.constant 0 : i32
    %c0_i32_1 = arith.constant 0 : i32
    return %arg0, %c0_i32, %c0_i32_0 : i32, i32, i32
  }
  func.func @transform_7(%arg0: i32) -> (i32, i32, i32) {
    %c0_i32 = arith.constant 0 : i32
    %c0_i32_0 = arith.constant 0 : i32
    %c0_i32_1 = arith.constant 0 : i32
    return %arg0, %c0_i32, %c0_i32_0 : i32, i32, i32
  }
  func.func @transform_8(%arg0: i32) -> (i32, i32) {
    %c0_i32 = arith.constant 0 : i32
    %c0_i32_0 = arith.constant 0 : i32
    %c0_i32_1 = arith.constant 0 : i32
    return %c0_i32, %c0_i32_0 : i32, i32
  }
  func.func @transform_9(%arg0: i32) -> (i32, i32) {
    %c0_i32 = arith.constant 0 : i32
    %c0_i32_0 = arith.constant 0 : i32
    %c0_i32_1 = arith.constant 0 : i32
    return %c0_i32, %c0_i32_0 : i32, i32
  }
  func.func @transform_10(%arg0: i32) -> (i32, i32, i32) {
    %c0_i32 = arith.constant 0 : i32
    %c0_i32_0 = arith.constant 0 : i32
    %c0_i32_1 = arith.constant 0 : i32
    return %arg0, %c0_i32, %c0_i32_0 : i32, i32, i32
  }
}

module attributes {stable_mosaic.version = 11 : i64} {
  func.func @_gn_conv_kernel(%arg0: i32, %arg1: memref<1x8x256xf32, #tpu.memory_space<vmem>>, %arg2: memref<8x8xf32, #tpu.memory_space<vmem>>, %arg3: memref<8x1xf32, #tpu.memory_space<vmem>>, %arg4: memref<8x1xf32, #tpu.memory_space<vmem>>, %arg5: memref<9x16x8xbf16, #tpu.memory_space<vmem>>, %arg6: memref<16x1xf32, #tpu.memory_space<vmem>>, %arg7: memref<9x1x256xbf16, #tpu.memory_space<vmem>>, %arg8: memref<1x16x1xf32, #tpu.memory_space<vmem>>, %arg9: memref<1x16x256xbf16, #tpu.memory_space<vmem>>) attributes {dimension_semantics = [#tpu.dimension_semantics<parallel>], iteration_bounds = array<i64: 2>, scalar_prefetch = 0 : i64, scratch_operands = 0 : i64, tpu.core_type = #tpu.core_type<tc>, window_params = [{transform_indices = @transform_0, window_bounds = array<i64: 1, 8, 256>}, {pipeline_mode = #tpu.pipeline_mode<synchronous>, transform_indices = @transform_1, window_bounds = array<i64: 8, 8>}, {pipeline_mode = #tpu.pipeline_mode<synchronous>, transform_indices = @transform_2, window_bounds = array<i64: 8, 1>}, {pipeline_mode = #tpu.pipeline_mode<synchronous>, transform_indices = @transform_3, window_bounds = array<i64: 8, 1>}, {pipeline_mode = #tpu.pipeline_mode<synchronous>, transform_indices = @transform_4, window_bounds = array<i64: 9, 16, 8>}, {pipeline_mode = #tpu.pipeline_mode<synchronous>, transform_indices = @transform_5, window_bounds = array<i64: 16, 1>}, {pipeline_mode = #tpu.pipeline_mode<synchronous>, transform_indices = @transform_6, window_bounds = array<i64: 9, 1, 256>}, {transform_indices = @transform_7, window_bounds = array<i64: 1, 16, 1>}, {transform_indices = @transform_8, window_bounds = array<i64: 1, 16, 256>}]} {
    %c0 = arith.constant 0 : index
    %c0_0 = arith.constant 0 : index
    %c0_1 = arith.constant 0 : index
    %0 = vector.load %arg1[%c0, %c0_0, %c0_1] : memref<1x8x256xf32, #tpu.memory_space<vmem>>, vector<1x8x256xf32>
    %1 = vector.shape_cast %0 : vector<1x8x256xf32> to vector<8x256xf32>
    %cst = arith.constant dense<0.000000e+00> : vector<8xf32>
    %2 = vector.multi_reduction <add>, %1, %cst [1] : vector<8x256xf32> to vector<8xf32>
    %3 = vector.shape_cast %2 : vector<8xf32> to vector<8x1xf32>
    %c0_2 = arith.constant 0 : index
    %c0_3 = arith.constant 0 : index
    %4 = vector.load %arg2[%c0_2, %c0_3] : memref<8x8xf32, #tpu.memory_space<vmem>>, vector<8x8xf32>
    %cst_4 = arith.constant dense<0.000000e+00> : vector<8x1xf32>
    %5 = tpu.matmul %4, %3, %cst_4 {dimension_numbers = #tpu.dot_dimension_numbers<[1], [0], [0], [1], [0, 0, 1, 1], [], []>} : vector<8x8xf32>, vector<8x1xf32>, vector<8x1xf32> -> vector<8x1xf32>
    %cst_5 = arith.constant 3.906250e-03 : f32
    %6 = vector.broadcast %cst_5 : f32 to vector<8x1xf32>
    %7 = arith.mulf %5, %6 : vector<8x1xf32>
    %8 = vector.broadcast %7 : vector<8x1xf32> to vector<8x256xf32>
    %9 = arith.subf %1, %8 : vector<8x256xf32>
    %10 = arith.mulf %9, %9 : vector<8x256xf32>
    %cst_6 = arith.constant dense<0.000000e+00> : vector<8xf32>
    %11 = vector.multi_reduction <add>, %10, %cst_6 [1] : vector<8x256xf32> to vector<8xf32>
    %12 = vector.shape_cast %11 : vector<8xf32> to vector<8x1xf32>
    %c0_7 = arith.constant 0 : index
    %c0_8 = arith.constant 0 : index
    %13 = vector.load %arg2[%c0_7, %c0_8] : memref<8x8xf32, #tpu.memory_space<vmem>>, vector<8x8xf32>
    %cst_9 = arith.constant dense<0.000000e+00> : vector<8x1xf32>
    %14 = tpu.matmul %13, %12, %cst_9 {dimension_numbers = #tpu.dot_dimension_numbers<[1], [0], [0], [1], [0, 0, 1, 1], [], []>} : vector<8x8xf32>, vector<8x1xf32>, vector<8x1xf32> -> vector<8x1xf32>
    %cst_10 = arith.constant 3.906250e-03 : f32
    %15 = vector.broadcast %cst_10 : f32 to vector<8x1xf32>
    %16 = arith.mulf %14, %15 : vector<8x1xf32>
    %cst_11 = arith.constant 9.99999974E-6 : f32
    %17 = vector.broadcast %cst_11 : f32 to vector<8x1xf32>
    %18 = arith.addf %16, %17 : vector<8x1xf32>
    %19 = math.rsqrt %18 : vector<8x1xf32>
    %20 = vector.broadcast %19 : vector<8x1xf32> to vector<8x256xf32>
    %21 = arith.mulf %9, %20 : vector<8x256xf32>
    %c0_12 = arith.constant 0 : index
    %c0_13 = arith.constant 0 : index
    %22 = vector.load %arg3[%c0_12, %c0_13] : memref<8x1xf32, #tpu.memory_space<vmem>>, vector<8x1xf32>
    %23 = vector.broadcast %22 : vector<8x1xf32> to vector<8x256xf32>
    %24 = arith.mulf %21, %23 : vector<8x256xf32>
    %c0_14 = arith.constant 0 : index
    %c0_15 = arith.constant 0 : index
    %25 = vector.load %arg4[%c0_14, %c0_15] : memref<8x1xf32, #tpu.memory_space<vmem>>, vector<8x1xf32>
    %26 = vector.broadcast %25 : vector<8x1xf32> to vector<8x256xf32>
    %27 = arith.addf %24, %26 : vector<8x256xf32>
    %28 = arith.negf %27 : vector<8x256xf32>
    %29 = math.exp %28 : vector<8x256xf32>
    %cst_16 = arith.constant 1.000000e+00 : f32
    %30 = vector.broadcast %cst_16 : f32 to vector<8x256xf32>
    %31 = arith.addf %30, %29 : vector<8x256xf32>
    %32 = arith.divf %30, %31 : vector<8x256xf32>
    %33 = arith.mulf %27, %32 : vector<8x256xf32>
    %34 = arith.truncf %33 : vector<8x256xf32> to vector<8x256xbf16>
    %cst_17 = arith.constant 0.000000e+00 : f32
    %35 = vector.broadcast %cst_17 : f32 to vector<16x256xf32>
    %36 = vector.extract_strided_slice %34 {offsets = [0, 239], sizes = [8, 17], strides = [1, 1]} : vector<8x256xbf16> to vector<8x17xbf16>
    %37 = vector.extract_strided_slice %34 {offsets = [0, 0], sizes = [8, 239], strides = [1, 1]} : vector<8x256xbf16> to vector<8x239xbf16>
    %38 = tpu.concatenate %36, %37 in 1 : vector<8x17xbf16>, vector<8x239xbf16> -> vector<8x256xbf16>
    %c0_18 = arith.constant 0 : index
    %c0_19 = arith.constant 0 : index
    %c0_20 = arith.constant 0 : index
    %39 = vector.load %arg7[%c0_18, %c0_19, %c0_20] : memref<9x1x256xbf16, #tpu.memory_space<vmem>>, vector<1x1x256xbf16>
    %40 = vector.shape_cast %39 : vector<1x1x256xbf16> to vector<1x256xbf16>
    %41 = vector.broadcast %40 : vector<1x256xbf16> to vector<8x256xbf16>
    %42 = arith.mulf %38, %41 : vector<8x256xbf16>
    %c0_21 = arith.constant 0 : index
    %c0_22 = arith.constant 0 : index
    %c0_23 = arith.constant 0 : index
    %43 = vector.load %arg5[%c0_21, %c0_22, %c0_23] : memref<9x16x8xbf16, #tpu.memory_space<vmem>>, vector<1x16x8xbf16>
    %44 = vector.shape_cast %43 : vector<1x16x8xbf16> to vector<16x8xbf16>
    %cst_24 = arith.constant dense<0.000000e+00> : vector<16x256xf32>
    %45 = tpu.matmul %44, %42, %cst_24 {dimension_numbers = #tpu.dot_dimension_numbers<[1], [0], [0], [1], [0, 0, 1, 1], [], []>} : vector<16x8xbf16>, vector<8x256xbf16>, vector<16x256xf32> -> vector<16x256xf32>
    %46 = arith.addf %35, %45 : vector<16x256xf32>
    %47 = vector.extract_strided_slice %34 {offsets = [0, 240], sizes = [8, 16], strides = [1, 1]} : vector<8x256xbf16> to vector<8x16xbf16>
    %48 = vector.extract_strided_slice %34 {offsets = [0, 0], sizes = [8, 240], strides = [1, 1]} : vector<8x256xbf16> to vector<8x240xbf16>
    %49 = tpu.concatenate %47, %48 in 1 : vector<8x16xbf16>, vector<8x240xbf16> -> vector<8x256xbf16>
    %c1 = arith.constant 1 : index
    %c0_25 = arith.constant 0 : index
    %c0_26 = arith.constant 0 : index
    %50 = vector.load %arg7[%c1, %c0_25, %c0_26] : memref<9x1x256xbf16, #tpu.memory_space<vmem>>, vector<1x1x256xbf16>
    %51 = vector.shape_cast %50 : vector<1x1x256xbf16> to vector<1x256xbf16>
    %52 = vector.broadcast %51 : vector<1x256xbf16> to vector<8x256xbf16>
    %53 = arith.mulf %49, %52 : vector<8x256xbf16>
    %c1_27 = arith.constant 1 : index
    %c0_28 = arith.constant 0 : index
    %c0_29 = arith.constant 0 : index
    %54 = vector.load %arg5[%c1_27, %c0_28, %c0_29] : memref<9x16x8xbf16, #tpu.memory_space<vmem>>, vector<1x16x8xbf16>
    %55 = vector.shape_cast %54 : vector<1x16x8xbf16> to vector<16x8xbf16>
    %cst_30 = arith.constant dense<0.000000e+00> : vector<16x256xf32>
    %56 = tpu.matmul %55, %53, %cst_30 {dimension_numbers = #tpu.dot_dimension_numbers<[1], [0], [0], [1], [0, 0, 1, 1], [], []>} : vector<16x8xbf16>, vector<8x256xbf16>, vector<16x256xf32> -> vector<16x256xf32>
    %57 = arith.addf %46, %56 : vector<16x256xf32>
    %58 = vector.extract_strided_slice %34 {offsets = [0, 241], sizes = [8, 15], strides = [1, 1]} : vector<8x256xbf16> to vector<8x15xbf16>
    %59 = vector.extract_strided_slice %34 {offsets = [0, 0], sizes = [8, 241], strides = [1, 1]} : vector<8x256xbf16> to vector<8x241xbf16>
    %60 = tpu.concatenate %58, %59 in 1 : vector<8x15xbf16>, vector<8x241xbf16> -> vector<8x256xbf16>
    %c2 = arith.constant 2 : index
    %c0_31 = arith.constant 0 : index
    %c0_32 = arith.constant 0 : index
    %61 = vector.load %arg7[%c2, %c0_31, %c0_32] : memref<9x1x256xbf16, #tpu.memory_space<vmem>>, vector<1x1x256xbf16>
    %62 = vector.shape_cast %61 : vector<1x1x256xbf16> to vector<1x256xbf16>
    %63 = vector.broadcast %62 : vector<1x256xbf16> to vector<8x256xbf16>
    %64 = arith.mulf %60, %63 : vector<8x256xbf16>
    %c2_33 = arith.constant 2 : index
    %c0_34 = arith.constant 0 : index
    %c0_35 = arith.constant 0 : index
    %65 = vector.load %arg5[%c2_33, %c0_34, %c0_35] : memref<9x16x8xbf16, #tpu.memory_space<vmem>>, vector<1x16x8xbf16>
    %66 = vector.shape_cast %65 : vector<1x16x8xbf16> to vector<16x8xbf16>
    %cst_36 = arith.constant dense<0.000000e+00> : vector<16x256xf32>
    %67 = tpu.matmul %66, %64, %cst_36 {dimension_numbers = #tpu.dot_dimension_numbers<[1], [0], [0], [1], [0, 0, 1, 1], [], []>} : vector<16x8xbf16>, vector<8x256xbf16>, vector<16x256xf32> -> vector<16x256xf32>
    %68 = arith.addf %57, %67 : vector<16x256xf32>
    %69 = vector.extract_strided_slice %34 {offsets = [0, 255], sizes = [8, 1], strides = [1, 1]} : vector<8x256xbf16> to vector<8x1xbf16>
    %70 = vector.extract_strided_slice %34 {offsets = [0, 0], sizes = [8, 255], strides = [1, 1]} : vector<8x256xbf16> to vector<8x255xbf16>
    %71 = tpu.concatenate %69, %70 in 1 : vector<8x1xbf16>, vector<8x255xbf16> -> vector<8x256xbf16>
    %c3 = arith.constant 3 : index
    %c0_37 = arith.constant 0 : index
    %c0_38 = arith.constant 0 : index
    %72 = vector.load %arg7[%c3, %c0_37, %c0_38] : memref<9x1x256xbf16, #tpu.memory_space<vmem>>, vector<1x1x256xbf16>
    %73 = vector.shape_cast %72 : vector<1x1x256xbf16> to vector<1x256xbf16>
    %74 = vector.broadcast %73 : vector<1x256xbf16> to vector<8x256xbf16>
    %75 = arith.mulf %71, %74 : vector<8x256xbf16>
    %c3_39 = arith.constant 3 : index
    %c0_40 = arith.constant 0 : index
    %c0_41 = arith.constant 0 : index
    %76 = vector.load %arg5[%c3_39, %c0_40, %c0_41] : memref<9x16x8xbf16, #tpu.memory_space<vmem>>, vector<1x16x8xbf16>
    %77 = vector.shape_cast %76 : vector<1x16x8xbf16> to vector<16x8xbf16>
    %cst_42 = arith.constant dense<0.000000e+00> : vector<16x256xf32>
    %78 = tpu.matmul %77, %75, %cst_42 {dimension_numbers = #tpu.dot_dimension_numbers<[1], [0], [0], [1], [0, 0, 1, 1], [], []>} : vector<16x8xbf16>, vector<8x256xbf16>, vector<16x256xf32> -> vector<16x256xf32>
    %79 = arith.addf %68, %78 : vector<16x256xf32>
    %c4 = arith.constant 4 : index
    %c0_43 = arith.constant 0 : index
    %c0_44 = arith.constant 0 : index
    %80 = vector.load %arg5[%c4, %c0_43, %c0_44] : memref<9x16x8xbf16, #tpu.memory_space<vmem>>, vector<1x16x8xbf16>
    %81 = vector.shape_cast %80 : vector<1x16x8xbf16> to vector<16x8xbf16>
    %cst_45 = arith.constant dense<0.000000e+00> : vector<16x256xf32>
    %82 = tpu.matmul %81, %34, %cst_45 {dimension_numbers = #tpu.dot_dimension_numbers<[1], [0], [0], [1], [0, 0, 1, 1], [], []>} : vector<16x8xbf16>, vector<8x256xbf16>, vector<16x256xf32> -> vector<16x256xf32>
    %83 = arith.addf %79, %82 : vector<16x256xf32>
    %84 = vector.extract_strided_slice %34 {offsets = [0, 1], sizes = [8, 255], strides = [1, 1]} : vector<8x256xbf16> to vector<8x255xbf16>
    %85 = vector.extract_strided_slice %34 {offsets = [0, 0], sizes = [8, 1], strides = [1, 1]} : vector<8x256xbf16> to vector<8x1xbf16>
    %86 = tpu.concatenate %84, %85 in 1 : vector<8x255xbf16>, vector<8x1xbf16> -> vector<8x256xbf16>
    %c5 = arith.constant 5 : index
    %c0_46 = arith.constant 0 : index
    %c0_47 = arith.constant 0 : index
    %87 = vector.load %arg7[%c5, %c0_46, %c0_47] : memref<9x1x256xbf16, #tpu.memory_space<vmem>>, vector<1x1x256xbf16>
    %88 = vector.shape_cast %87 : vector<1x1x256xbf16> to vector<1x256xbf16>
    %89 = vector.broadcast %88 : vector<1x256xbf16> to vector<8x256xbf16>
    %90 = arith.mulf %86, %89 : vector<8x256xbf16>
    %c5_48 = arith.constant 5 : index
    %c0_49 = arith.constant 0 : index
    %c0_50 = arith.constant 0 : index
    %91 = vector.load %arg5[%c5_48, %c0_49, %c0_50] : memref<9x16x8xbf16, #tpu.memory_space<vmem>>, vector<1x16x8xbf16>
    %92 = vector.shape_cast %91 : vector<1x16x8xbf16> to vector<16x8xbf16>
    %cst_51 = arith.constant dense<0.000000e+00> : vector<16x256xf32>
    %93 = tpu.matmul %92, %90, %cst_51 {dimension_numbers = #tpu.dot_dimension_numbers<[1], [0], [0], [1], [0, 0, 1, 1], [], []>} : vector<16x8xbf16>, vector<8x256xbf16>, vector<16x256xf32> -> vector<16x256xf32>
    %94 = arith.addf %83, %93 : vector<16x256xf32>
    %95 = vector.extract_strided_slice %34 {offsets = [0, 15], sizes = [8, 241], strides = [1, 1]} : vector<8x256xbf16> to vector<8x241xbf16>
    %96 = vector.extract_strided_slice %34 {offsets = [0, 0], sizes = [8, 15], strides = [1, 1]} : vector<8x256xbf16> to vector<8x15xbf16>
    %97 = tpu.concatenate %95, %96 in 1 : vector<8x241xbf16>, vector<8x15xbf16> -> vector<8x256xbf16>
    %c6 = arith.constant 6 : index
    %c0_52 = arith.constant 0 : index
    %c0_53 = arith.constant 0 : index
    %98 = vector.load %arg7[%c6, %c0_52, %c0_53] : memref<9x1x256xbf16, #tpu.memory_space<vmem>>, vector<1x1x256xbf16>
    %99 = vector.shape_cast %98 : vector<1x1x256xbf16> to vector<1x256xbf16>
    %100 = vector.broadcast %99 : vector<1x256xbf16> to vector<8x256xbf16>
    %101 = arith.mulf %97, %100 : vector<8x256xbf16>
    %c6_54 = arith.constant 6 : index
    %c0_55 = arith.constant 0 : index
    %c0_56 = arith.constant 0 : index
    %102 = vector.load %arg5[%c6_54, %c0_55, %c0_56] : memref<9x16x8xbf16, #tpu.memory_space<vmem>>, vector<1x16x8xbf16>
    %103 = vector.shape_cast %102 : vector<1x16x8xbf16> to vector<16x8xbf16>
    %cst_57 = arith.constant dense<0.000000e+00> : vector<16x256xf32>
    %104 = tpu.matmul %103, %101, %cst_57 {dimension_numbers = #tpu.dot_dimension_numbers<[1], [0], [0], [1], [0, 0, 1, 1], [], []>} : vector<16x8xbf16>, vector<8x256xbf16>, vector<16x256xf32> -> vector<16x256xf32>
    %105 = arith.addf %94, %104 : vector<16x256xf32>
    %106 = vector.extract_strided_slice %34 {offsets = [0, 16], sizes = [8, 240], strides = [1, 1]} : vector<8x256xbf16> to vector<8x240xbf16>
    %107 = vector.extract_strided_slice %34 {offsets = [0, 0], sizes = [8, 16], strides = [1, 1]} : vector<8x256xbf16> to vector<8x16xbf16>
    %108 = tpu.concatenate %106, %107 in 1 : vector<8x240xbf16>, vector<8x16xbf16> -> vector<8x256xbf16>
    %c7 = arith.constant 7 : index
    %c0_58 = arith.constant 0 : index
    %c0_59 = arith.constant 0 : index
    %109 = vector.load %arg7[%c7, %c0_58, %c0_59] : memref<9x1x256xbf16, #tpu.memory_space<vmem>>, vector<1x1x256xbf16>
    %110 = vector.shape_cast %109 : vector<1x1x256xbf16> to vector<1x256xbf16>
    %111 = vector.broadcast %110 : vector<1x256xbf16> to vector<8x256xbf16>
    %112 = arith.mulf %108, %111 : vector<8x256xbf16>
    %c7_60 = arith.constant 7 : index
    %c0_61 = arith.constant 0 : index
    %c0_62 = arith.constant 0 : index
    %113 = vector.load %arg5[%c7_60, %c0_61, %c0_62] : memref<9x16x8xbf16, #tpu.memory_space<vmem>>, vector<1x16x8xbf16>
    %114 = vector.shape_cast %113 : vector<1x16x8xbf16> to vector<16x8xbf16>
    %cst_63 = arith.constant dense<0.000000e+00> : vector<16x256xf32>
    %115 = tpu.matmul %114, %112, %cst_63 {dimension_numbers = #tpu.dot_dimension_numbers<[1], [0], [0], [1], [0, 0, 1, 1], [], []>} : vector<16x8xbf16>, vector<8x256xbf16>, vector<16x256xf32> -> vector<16x256xf32>
    %116 = arith.addf %105, %115 : vector<16x256xf32>
    %117 = vector.extract_strided_slice %34 {offsets = [0, 17], sizes = [8, 239], strides = [1, 1]} : vector<8x256xbf16> to vector<8x239xbf16>
    %118 = vector.extract_strided_slice %34 {offsets = [0, 0], sizes = [8, 17], strides = [1, 1]} : vector<8x256xbf16> to vector<8x17xbf16>
    %119 = tpu.concatenate %117, %118 in 1 : vector<8x239xbf16>, vector<8x17xbf16> -> vector<8x256xbf16>
    %c8 = arith.constant 8 : index
    %c0_64 = arith.constant 0 : index
    %c0_65 = arith.constant 0 : index
    %120 = vector.load %arg7[%c8, %c0_64, %c0_65] : memref<9x1x256xbf16, #tpu.memory_space<vmem>>, vector<1x1x256xbf16>
    %121 = vector.shape_cast %120 : vector<1x1x256xbf16> to vector<1x256xbf16>
    %122 = vector.broadcast %121 : vector<1x256xbf16> to vector<8x256xbf16>
    %123 = arith.mulf %119, %122 : vector<8x256xbf16>
    %c8_66 = arith.constant 8 : index
    %c0_67 = arith.constant 0 : index
    %c0_68 = arith.constant 0 : index
    %124 = vector.load %arg5[%c8_66, %c0_67, %c0_68] : memref<9x16x8xbf16, #tpu.memory_space<vmem>>, vector<1x16x8xbf16>
    %125 = vector.shape_cast %124 : vector<1x16x8xbf16> to vector<16x8xbf16>
    %cst_69 = arith.constant dense<0.000000e+00> : vector<16x256xf32>
    %126 = tpu.matmul %125, %123, %cst_69 {dimension_numbers = #tpu.dot_dimension_numbers<[1], [0], [0], [1], [0, 0, 1, 1], [], []>} : vector<16x8xbf16>, vector<8x256xbf16>, vector<16x256xf32> -> vector<16x256xf32>
    %127 = arith.addf %116, %126 : vector<16x256xf32>
    %c0_70 = arith.constant 0 : index
    %c0_71 = arith.constant 0 : index
    %128 = vector.load %arg6[%c0_70, %c0_71] : memref<16x1xf32, #tpu.memory_space<vmem>>, vector<16x1xf32>
    %129 = vector.broadcast %128 : vector<16x1xf32> to vector<16x256xf32>
    %130 = arith.addf %127, %129 : vector<16x256xf32>
    %c0_72 = arith.constant 0 : index
    %c0_73 = arith.constant 0 : index
    %c0_74 = arith.constant 0 : index
    %131 = vector.load %arg8[%c0_72, %c0_73, %c0_74] : memref<1x16x1xf32, #tpu.memory_space<vmem>>, vector<1x16x1xf32>
    %132 = vector.shape_cast %131 : vector<1x16x1xf32> to vector<16x1xf32>
    %133 = vector.broadcast %132 : vector<16x1xf32> to vector<16x256xf32>
    %134 = arith.addf %130, %133 : vector<16x256xf32>
    %135 = arith.truncf %134 : vector<16x256xf32> to vector<16x256xbf16>
    %c0_75 = arith.constant 0 : index
    %c0_76 = arith.constant 0 : index
    %c0_77 = arith.constant 0 : index
    %136 = vector.load %arg9[%c0_75, %c0_76, %c0_77] : memref<1x16x256xbf16, #tpu.memory_space<vmem>>, vector<1x16x256xbf16>
    %137 = vector.shape_cast %136 : vector<1x16x256xbf16> to vector<16x256xbf16>
    %138 = vector.shape_cast %135 : vector<16x256xbf16> to vector<1x16x256xbf16>
    tpu.vector_store %arg9[%c0_75, %c0_76, %c0_77], %138 {strides = array<i32>} : memref<1x16x256xbf16, #tpu.memory_space<vmem>>, vector<1x16x256xbf16>,
    return
  }
  func.func @transform_0(%arg0: i32) -> (i32, i32, i32) {
    %c0_i32 = arith.constant 0 : i32
    %c0_i32_0 = arith.constant 0 : i32
    %c0_i32_1 = arith.constant 0 : i32
    return %arg0, %c0_i32, %c0_i32_0 : i32, i32, i32
  }
  func.func @transform_1(%arg0: i32) -> (i32, i32) {
    %c0_i32 = arith.constant 0 : i32
    %c0_i32_0 = arith.constant 0 : i32
    %c0_i32_1 = arith.constant 0 : i32
    return %c0_i32, %c0_i32_0 : i32, i32
  }
  func.func @transform_2(%arg0: i32) -> (i32, i32) {
    %c0_i32 = arith.constant 0 : i32
    %c0_i32_0 = arith.constant 0 : i32
    %c0_i32_1 = arith.constant 0 : i32
    return %c0_i32, %c0_i32_0 : i32, i32
  }
  func.func @transform_3(%arg0: i32) -> (i32, i32) {
    %c0_i32 = arith.constant 0 : i32
    %c0_i32_0 = arith.constant 0 : i32
    %c0_i32_1 = arith.constant 0 : i32
    return %c0_i32, %c0_i32_0 : i32, i32
  }
  func.func @transform_4(%arg0: i32) -> (i32, i32, i32) {
    %c0_i32 = arith.constant 0 : i32
    %c0_i32_0 = arith.constant 0 : i32
    %c0_i32_1 = arith.constant 0 : i32
    %c0_i32_2 = arith.constant 0 : i32
    return %c0_i32, %c0_i32_0, %c0_i32_1 : i32, i32, i32
  }
  func.func @transform_5(%arg0: i32) -> (i32, i32) {
    %c0_i32 = arith.constant 0 : i32
    %c0_i32_0 = arith.constant 0 : i32
    %c0_i32_1 = arith.constant 0 : i32
    return %c0_i32, %c0_i32_0 : i32, i32
  }
  func.func @transform_6(%arg0: i32) -> (i32, i32, i32) {
    %c0_i32 = arith.constant 0 : i32
    %c0_i32_0 = arith.constant 0 : i32
    %c0_i32_1 = arith.constant 0 : i32
    %c0_i32_2 = arith.constant 0 : i32
    return %c0_i32, %c0_i32_0, %c0_i32_1 : i32, i32, i32
  }
  func.func @transform_7(%arg0: i32) -> (i32, i32, i32) {
    %c0_i32 = arith.constant 0 : i32
    %c0_i32_0 = arith.constant 0 : i32
    %c0_i32_1 = arith.constant 0 : i32
    return %arg0, %c0_i32, %c0_i32_0 : i32, i32, i32
  }
  func.func @transform_8(%arg0: i32) -> (i32, i32, i32) {
    %c0_i32 = arith.constant 0 : i32
    %c0_i32_0 = arith.constant 0 : i32
    %c0_i32_1 = arith.constant 0 : i32
    return %arg0, %c0_i32, %c0_i32_0 : i32, i32, i32
  }
}

module attributes {stable_mosaic.version = 11 : i64} {
  func.func @_gn_conv_kernel(%arg0: i32, %arg1: memref<1x64x64xbf16, #tpu.memory_space<vmem>>, %arg2: memref<9x16x64xbf16, #tpu.memory_space<vmem>>, %arg3: memref<16x1xf32, #tpu.memory_space<vmem>>, %arg4: memref<9x1x64xbf16, #tpu.memory_space<vmem>>, %arg5: memref<1x16x64xf32, #tpu.memory_space<vmem>>) attributes {dimension_semantics = [#tpu.dimension_semantics<parallel>], iteration_bounds = array<i64: 2>, scalar_prefetch = 0 : i64, scratch_operands = 0 : i64, tpu.core_type = #tpu.core_type<tc>, window_params = [{transform_indices = @transform_0, window_bounds = array<i64: 1, 64, 64>}, {pipeline_mode = #tpu.pipeline_mode<synchronous>, transform_indices = @transform_1, window_bounds = array<i64: 9, 16, 64>}, {pipeline_mode = #tpu.pipeline_mode<synchronous>, transform_indices = @transform_2, window_bounds = array<i64: 16, 1>}, {pipeline_mode = #tpu.pipeline_mode<synchronous>, transform_indices = @transform_3, window_bounds = array<i64: 9, 1, 64>}, {transform_indices = @transform_4, window_bounds = array<i64: 1, 16, 64>}]} {
    %c0 = arith.constant 0 : index
    %c0_0 = arith.constant 0 : index
    %c0_1 = arith.constant 0 : index
    %0 = vector.load %arg1[%c0, %c0_0, %c0_1] : memref<1x64x64xbf16, #tpu.memory_space<vmem>>, vector<1x64x64xbf16>
    %1 = vector.shape_cast %0 : vector<1x64x64xbf16> to vector<64x64xbf16>
    %cst = arith.constant 0.000000e+00 : f32
    %2 = vector.broadcast %cst : f32 to vector<16x64xf32>
    %3 = vector.extract_strided_slice %1 {offsets = [0, 55], sizes = [64, 9], strides = [1, 1]} : vector<64x64xbf16> to vector<64x9xbf16>
    %4 = vector.extract_strided_slice %1 {offsets = [0, 0], sizes = [64, 55], strides = [1, 1]} : vector<64x64xbf16> to vector<64x55xbf16>
    %5 = tpu.concatenate %3, %4 in 1 : vector<64x9xbf16>, vector<64x55xbf16> -> vector<64x64xbf16>
    %c0_2 = arith.constant 0 : index
    %c0_3 = arith.constant 0 : index
    %c0_4 = arith.constant 0 : index
    %6 = vector.load %arg4[%c0_2, %c0_3, %c0_4] : memref<9x1x64xbf16, #tpu.memory_space<vmem>>, vector<1x1x64xbf16>
    %7 = vector.shape_cast %6 : vector<1x1x64xbf16> to vector<1x64xbf16>
    %8 = vector.broadcast %7 : vector<1x64xbf16> to vector<64x64xbf16>
    %9 = arith.mulf %5, %8 : vector<64x64xbf16>
    %c0_5 = arith.constant 0 : index
    %c0_6 = arith.constant 0 : index
    %c0_7 = arith.constant 0 : index
    %10 = vector.load %arg2[%c0_5, %c0_6, %c0_7] : memref<9x16x64xbf16, #tpu.memory_space<vmem>>, vector<1x16x64xbf16>
    %11 = vector.shape_cast %10 : vector<1x16x64xbf16> to vector<16x64xbf16>
    %cst_8 = arith.constant dense<0.000000e+00> : vector<16x64xf32>
    %12 = tpu.matmul %11, %9, %cst_8 {dimension_numbers = #tpu.dot_dimension_numbers<[1], [0], [0], [1], [0, 0, 1, 1], [], []>} : vector<16x64xbf16>, vector<64x64xbf16>, vector<16x64xf32> -> vector<16x64xf32>
    %13 = arith.addf %2, %12 : vector<16x64xf32>
    %14 = vector.extract_strided_slice %1 {offsets = [0, 56], sizes = [64, 8], strides = [1, 1]} : vector<64x64xbf16> to vector<64x8xbf16>
    %15 = vector.extract_strided_slice %1 {offsets = [0, 0], sizes = [64, 56], strides = [1, 1]} : vector<64x64xbf16> to vector<64x56xbf16>
    %16 = tpu.concatenate %14, %15 in 1 : vector<64x8xbf16>, vector<64x56xbf16> -> vector<64x64xbf16>
    %c1 = arith.constant 1 : index
    %c0_9 = arith.constant 0 : index
    %c0_10 = arith.constant 0 : index
    %17 = vector.load %arg4[%c1, %c0_9, %c0_10] : memref<9x1x64xbf16, #tpu.memory_space<vmem>>, vector<1x1x64xbf16>
    %18 = vector.shape_cast %17 : vector<1x1x64xbf16> to vector<1x64xbf16>
    %19 = vector.broadcast %18 : vector<1x64xbf16> to vector<64x64xbf16>
    %20 = arith.mulf %16, %19 : vector<64x64xbf16>
    %c1_11 = arith.constant 1 : index
    %c0_12 = arith.constant 0 : index
    %c0_13 = arith.constant 0 : index
    %21 = vector.load %arg2[%c1_11, %c0_12, %c0_13] : memref<9x16x64xbf16, #tpu.memory_space<vmem>>, vector<1x16x64xbf16>
    %22 = vector.shape_cast %21 : vector<1x16x64xbf16> to vector<16x64xbf16>
    %cst_14 = arith.constant dense<0.000000e+00> : vector<16x64xf32>
    %23 = tpu.matmul %22, %20, %cst_14 {dimension_numbers = #tpu.dot_dimension_numbers<[1], [0], [0], [1], [0, 0, 1, 1], [], []>} : vector<16x64xbf16>, vector<64x64xbf16>, vector<16x64xf32> -> vector<16x64xf32>
    %24 = arith.addf %13, %23 : vector<16x64xf32>
    %25 = vector.extract_strided_slice %1 {offsets = [0, 57], sizes = [64, 7], strides = [1, 1]} : vector<64x64xbf16> to vector<64x7xbf16>
    %26 = vector.extract_strided_slice %1 {offsets = [0, 0], sizes = [64, 57], strides = [1, 1]} : vector<64x64xbf16> to vector<64x57xbf16>
    %27 = tpu.concatenate %25, %26 in 1 : vector<64x7xbf16>, vector<64x57xbf16> -> vector<64x64xbf16>
    %c2 = arith.constant 2 : index
    %c0_15 = arith.constant 0 : index
    %c0_16 = arith.constant 0 : index
    %28 = vector.load %arg4[%c2, %c0_15, %c0_16] : memref<9x1x64xbf16, #tpu.memory_space<vmem>>, vector<1x1x64xbf16>
    %29 = vector.shape_cast %28 : vector<1x1x64xbf16> to vector<1x64xbf16>
    %30 = vector.broadcast %29 : vector<1x64xbf16> to vector<64x64xbf16>
    %31 = arith.mulf %27, %30 : vector<64x64xbf16>
    %c2_17 = arith.constant 2 : index
    %c0_18 = arith.constant 0 : index
    %c0_19 = arith.constant 0 : index
    %32 = vector.load %arg2[%c2_17, %c0_18, %c0_19] : memref<9x16x64xbf16, #tpu.memory_space<vmem>>, vector<1x16x64xbf16>
    %33 = vector.shape_cast %32 : vector<1x16x64xbf16> to vector<16x64xbf16>
    %cst_20 = arith.constant dense<0.000000e+00> : vector<16x64xf32>
    %34 = tpu.matmul %33, %31, %cst_20 {dimension_numbers = #tpu.dot_dimension_numbers<[1], [0], [0], [1], [0, 0, 1, 1], [], []>} : vector<16x64xbf16>, vector<64x64xbf16>, vector<16x64xf32> -> vector<16x64xf32>
    %35 = arith.addf %24, %34 : vector<16x64xf32>
    %36 = vector.extract_strided_slice %1 {offsets = [0, 63], sizes = [64, 1], strides = [1, 1]} : vector<64x64xbf16> to vector<64x1xbf16>
    %37 = vector.extract_strided_slice %1 {offsets = [0, 0], sizes = [64, 63], strides = [1, 1]} : vector<64x64xbf16> to vector<64x63xbf16>
    %38 = tpu.concatenate %36, %37 in 1 : vector<64x1xbf16>, vector<64x63xbf16> -> vector<64x64xbf16>
    %c3 = arith.constant 3 : index
    %c0_21 = arith.constant 0 : index
    %c0_22 = arith.constant 0 : index
    %39 = vector.load %arg4[%c3, %c0_21, %c0_22] : memref<9x1x64xbf16, #tpu.memory_space<vmem>>, vector<1x1x64xbf16>
    %40 = vector.shape_cast %39 : vector<1x1x64xbf16> to vector<1x64xbf16>
    %41 = vector.broadcast %40 : vector<1x64xbf16> to vector<64x64xbf16>
    %42 = arith.mulf %38, %41 : vector<64x64xbf16>
    %c3_23 = arith.constant 3 : index
    %c0_24 = arith.constant 0 : index
    %c0_25 = arith.constant 0 : index
    %43 = vector.load %arg2[%c3_23, %c0_24, %c0_25] : memref<9x16x64xbf16, #tpu.memory_space<vmem>>, vector<1x16x64xbf16>
    %44 = vector.shape_cast %43 : vector<1x16x64xbf16> to vector<16x64xbf16>
    %cst_26 = arith.constant dense<0.000000e+00> : vector<16x64xf32>
    %45 = tpu.matmul %44, %42, %cst_26 {dimension_numbers = #tpu.dot_dimension_numbers<[1], [0], [0], [1], [0, 0, 1, 1], [], []>} : vector<16x64xbf16>, vector<64x64xbf16>, vector<16x64xf32> -> vector<16x64xf32>
    %46 = arith.addf %35, %45 : vector<16x64xf32>
    %c4 = arith.constant 4 : index
    %c0_27 = arith.constant 0 : index
    %c0_28 = arith.constant 0 : index
    %47 = vector.load %arg2[%c4, %c0_27, %c0_28] : memref<9x16x64xbf16, #tpu.memory_space<vmem>>, vector<1x16x64xbf16>
    %48 = vector.shape_cast %47 : vector<1x16x64xbf16> to vector<16x64xbf16>
    %cst_29 = arith.constant dense<0.000000e+00> : vector<16x64xf32>
    %49 = tpu.matmul %48, %1, %cst_29 {dimension_numbers = #tpu.dot_dimension_numbers<[1], [0], [0], [1], [0, 0, 1, 1], [], []>} : vector<16x64xbf16>, vector<64x64xbf16>, vector<16x64xf32> -> vector<16x64xf32>
    %50 = arith.addf %46, %49 : vector<16x64xf32>
    %51 = vector.extract_strided_slice %1 {offsets = [0, 1], sizes = [64, 63], strides = [1, 1]} : vector<64x64xbf16> to vector<64x63xbf16>
    %52 = vector.extract_strided_slice %1 {offsets = [0, 0], sizes = [64, 1], strides = [1, 1]} : vector<64x64xbf16> to vector<64x1xbf16>
    %53 = tpu.concatenate %51, %52 in 1 : vector<64x63xbf16>, vector<64x1xbf16> -> vector<64x64xbf16>
    %c5 = arith.constant 5 : index
    %c0_30 = arith.constant 0 : index
    %c0_31 = arith.constant 0 : index
    %54 = vector.load %arg4[%c5, %c0_30, %c0_31] : memref<9x1x64xbf16, #tpu.memory_space<vmem>>, vector<1x1x64xbf16>
    %55 = vector.shape_cast %54 : vector<1x1x64xbf16> to vector<1x64xbf16>
    %56 = vector.broadcast %55 : vector<1x64xbf16> to vector<64x64xbf16>
    %57 = arith.mulf %53, %56 : vector<64x64xbf16>
    %c5_32 = arith.constant 5 : index
    %c0_33 = arith.constant 0 : index
    %c0_34 = arith.constant 0 : index
    %58 = vector.load %arg2[%c5_32, %c0_33, %c0_34] : memref<9x16x64xbf16, #tpu.memory_space<vmem>>, vector<1x16x64xbf16>
    %59 = vector.shape_cast %58 : vector<1x16x64xbf16> to vector<16x64xbf16>
    %cst_35 = arith.constant dense<0.000000e+00> : vector<16x64xf32>
    %60 = tpu.matmul %59, %57, %cst_35 {dimension_numbers = #tpu.dot_dimension_numbers<[1], [0], [0], [1], [0, 0, 1, 1], [], []>} : vector<16x64xbf16>, vector<64x64xbf16>, vector<16x64xf32> -> vector<16x64xf32>
    %61 = arith.addf %50, %60 : vector<16x64xf32>
    %62 = vector.extract_strided_slice %1 {offsets = [0, 7], sizes = [64, 57], strides = [1, 1]} : vector<64x64xbf16> to vector<64x57xbf16>
    %63 = vector.extract_strided_slice %1 {offsets = [0, 0], sizes = [64, 7], strides = [1, 1]} : vector<64x64xbf16> to vector<64x7xbf16>
    %64 = tpu.concatenate %62, %63 in 1 : vector<64x57xbf16>, vector<64x7xbf16> -> vector<64x64xbf16>
    %c6 = arith.constant 6 : index
    %c0_36 = arith.constant 0 : index
    %c0_37 = arith.constant 0 : index
    %65 = vector.load %arg4[%c6, %c0_36, %c0_37] : memref<9x1x64xbf16, #tpu.memory_space<vmem>>, vector<1x1x64xbf16>
    %66 = vector.shape_cast %65 : vector<1x1x64xbf16> to vector<1x64xbf16>
    %67 = vector.broadcast %66 : vector<1x64xbf16> to vector<64x64xbf16>
    %68 = arith.mulf %64, %67 : vector<64x64xbf16>
    %c6_38 = arith.constant 6 : index
    %c0_39 = arith.constant 0 : index
    %c0_40 = arith.constant 0 : index
    %69 = vector.load %arg2[%c6_38, %c0_39, %c0_40] : memref<9x16x64xbf16, #tpu.memory_space<vmem>>, vector<1x16x64xbf16>
    %70 = vector.shape_cast %69 : vector<1x16x64xbf16> to vector<16x64xbf16>
    %cst_41 = arith.constant dense<0.000000e+00> : vector<16x64xf32>
    %71 = tpu.matmul %70, %68, %cst_41 {dimension_numbers = #tpu.dot_dimension_numbers<[1], [0], [0], [1], [0, 0, 1, 1], [], []>} : vector<16x64xbf16>, vector<64x64xbf16>, vector<16x64xf32> -> vector<16x64xf32>
    %72 = arith.addf %61, %71 : vector<16x64xf32>
    %73 = vector.extract_strided_slice %1 {offsets = [0, 8], sizes = [64, 56], strides = [1, 1]} : vector<64x64xbf16> to vector<64x56xbf16>
    %74 = vector.extract_strided_slice %1 {offsets = [0, 0], sizes = [64, 8], strides = [1, 1]} : vector<64x64xbf16> to vector<64x8xbf16>
    %75 = tpu.concatenate %73, %74 in 1 : vector<64x56xbf16>, vector<64x8xbf16> -> vector<64x64xbf16>
    %c7 = arith.constant 7 : index
    %c0_42 = arith.constant 0 : index
    %c0_43 = arith.constant 0 : index
    %76 = vector.load %arg4[%c7, %c0_42, %c0_43] : memref<9x1x64xbf16, #tpu.memory_space<vmem>>, vector<1x1x64xbf16>
    %77 = vector.shape_cast %76 : vector<1x1x64xbf16> to vector<1x64xbf16>
    %78 = vector.broadcast %77 : vector<1x64xbf16> to vector<64x64xbf16>
    %79 = arith.mulf %75, %78 : vector<64x64xbf16>
    %c7_44 = arith.constant 7 : index
    %c0_45 = arith.constant 0 : index
    %c0_46 = arith.constant 0 : index
    %80 = vector.load %arg2[%c7_44, %c0_45, %c0_46] : memref<9x16x64xbf16, #tpu.memory_space<vmem>>, vector<1x16x64xbf16>
    %81 = vector.shape_cast %80 : vector<1x16x64xbf16> to vector<16x64xbf16>
    %cst_47 = arith.constant dense<0.000000e+00> : vector<16x64xf32>
    %82 = tpu.matmul %81, %79, %cst_47 {dimension_numbers = #tpu.dot_dimension_numbers<[1], [0], [0], [1], [0, 0, 1, 1], [], []>} : vector<16x64xbf16>, vector<64x64xbf16>, vector<16x64xf32> -> vector<16x64xf32>
    %83 = arith.addf %72, %82 : vector<16x64xf32>
    %84 = vector.extract_strided_slice %1 {offsets = [0, 9], sizes = [64, 55], strides = [1, 1]} : vector<64x64xbf16> to vector<64x55xbf16>
    %85 = vector.extract_strided_slice %1 {offsets = [0, 0], sizes = [64, 9], strides = [1, 1]} : vector<64x64xbf16> to vector<64x9xbf16>
    %86 = tpu.concatenate %84, %85 in 1 : vector<64x55xbf16>, vector<64x9xbf16> -> vector<64x64xbf16>
    %c8 = arith.constant 8 : index
    %c0_48 = arith.constant 0 : index
    %c0_49 = arith.constant 0 : index
    %87 = vector.load %arg4[%c8, %c0_48, %c0_49] : memref<9x1x64xbf16, #tpu.memory_space<vmem>>, vector<1x1x64xbf16>
    %88 = vector.shape_cast %87 : vector<1x1x64xbf16> to vector<1x64xbf16>
    %89 = vector.broadcast %88 : vector<1x64xbf16> to vector<64x64xbf16>
    %90 = arith.mulf %86, %89 : vector<64x64xbf16>
    %c8_50 = arith.constant 8 : index
    %c0_51 = arith.constant 0 : index
    %c0_52 = arith.constant 0 : index
    %91 = vector.load %arg2[%c8_50, %c0_51, %c0_52] : memref<9x16x64xbf16, #tpu.memory_space<vmem>>, vector<1x16x64xbf16>
    %92 = vector.shape_cast %91 : vector<1x16x64xbf16> to vector<16x64xbf16>
    %cst_53 = arith.constant dense<0.000000e+00> : vector<16x64xf32>
    %93 = tpu.matmul %92, %90, %cst_53 {dimension_numbers = #tpu.dot_dimension_numbers<[1], [0], [0], [1], [0, 0, 1, 1], [], []>} : vector<16x64xbf16>, vector<64x64xbf16>, vector<16x64xf32> -> vector<16x64xf32>
    %94 = arith.addf %83, %93 : vector<16x64xf32>
    %c0_54 = arith.constant 0 : index
    %c0_55 = arith.constant 0 : index
    %95 = vector.load %arg3[%c0_54, %c0_55] : memref<16x1xf32, #tpu.memory_space<vmem>>, vector<16x1xf32>
    %96 = vector.broadcast %95 : vector<16x1xf32> to vector<16x64xf32>
    %97 = arith.addf %94, %96 : vector<16x64xf32>
    %c0_56 = arith.constant 0 : index
    %c0_57 = arith.constant 0 : index
    %c0_58 = arith.constant 0 : index
    %98 = vector.load %arg5[%c0_56, %c0_57, %c0_58] : memref<1x16x64xf32, #tpu.memory_space<vmem>>, vector<1x16x64xf32>
    %99 = vector.shape_cast %98 : vector<1x16x64xf32> to vector<16x64xf32>
    %100 = vector.shape_cast %97 : vector<16x64xf32> to vector<1x16x64xf32>
    tpu.vector_store %arg5[%c0_56, %c0_57, %c0_58], %100 {strides = array<i32>} : memref<1x16x64xf32, #tpu.memory_space<vmem>>, vector<1x16x64xf32>,
    return
  }
  func.func @transform_0(%arg0: i32) -> (i32, i32, i32) {
    %c0_i32 = arith.constant 0 : i32
    %c0_i32_0 = arith.constant 0 : i32
    %c0_i32_1 = arith.constant 0 : i32
    return %arg0, %c0_i32, %c0_i32_0 : i32, i32, i32
  }
  func.func @transform_1(%arg0: i32) -> (i32, i32, i32) {
    %c0_i32 = arith.constant 0 : i32
    %c0_i32_0 = arith.constant 0 : i32
    %c0_i32_1 = arith.constant 0 : i32
    %c0_i32_2 = arith.constant 0 : i32
    return %c0_i32, %c0_i32_0, %c0_i32_1 : i32, i32, i32
  }
  func.func @transform_2(%arg0: i32) -> (i32, i32) {
    %c0_i32 = arith.constant 0 : i32
    %c0_i32_0 = arith.constant 0 : i32
    %c0_i32_1 = arith.constant 0 : i32
    return %c0_i32, %c0_i32_0 : i32, i32
  }
  func.func @transform_3(%arg0: i32) -> (i32, i32, i32) {
    %c0_i32 = arith.constant 0 : i32
    %c0_i32_0 = arith.constant 0 : i32
    %c0_i32_1 = arith.constant 0 : i32
    %c0_i32_2 = arith.constant 0 : i32
    return %c0_i32, %c0_i32_0, %c0_i32_1 : i32, i32, i32
  }
  func.func @transform_4(%arg0: i32) -> (i32, i32, i32) {
    %c0_i32 = arith.constant 0 : i32
    %c0_i32_0 = arith.constant 0 : i32
    %c0_i32_1 = arith.constant 0 : i32
    return %arg0, %c0_i32, %c0_i32_0 : i32, i32, i32
  }
}

</mosaic_0001>

<llo_original>
// kernel: down_block_forward.6
$region0: #{down_block_forward.6}
  #allocation0 [shape = 'u32[]', space=smem, size = 0x4, offset = 0x4, fixed_abs, tag = 'smem constant byte address 0x4 - core index']
  #allocation1 [shape = 'u32[144,128]{1,0:T(1,128)}', space=vmem, size = 0x12000, scoped, tag = 'internal scratch']
  %s0 = inlined_call_operand.vmem [shape: bf16[2,16,256], index: 0, kind: input, shape index: {}]
  %s1 = inlined_call_operand.vmem [shape: f32[16,16], index: 1, kind: input, shape index: {}]
  %s2 = inlined_call_operand.vmem [shape: f32[16,1], index: 2, kind: input, shape index: {}]
  %s3 = inlined_call_operand.vmem [shape: f32[16,1], index: 3, kind: input, shape index: {}]
  %s4 = inlined_call_operand.vmem [shape: bf16[16,16], index: 4, kind: input, shape index: {}]
  %s5 = inlined_call_operand.vmem [shape: f32[16,1], index: 5, kind: input, shape index: {}]
  %s6 = inlined_call_operand.vmem [shape: bf16[2,8,16], index: 6, kind: input, shape index: {}]
  %s7 = inlined_call_operand.vmem [shape: bf16[2,16,8], index: 7, kind: input, shape index: {}]
  %s8 = inlined_call_operand.vmem [shape: bf16[16,16], index: 8, kind: input, shape index: {}]
  %s9 = inlined_call_operand.vmem [shape: f32[16,1], index: 9, kind: input, shape index: {}]
  %s10 = inlined_call_operand.vmem [shape: bf16[2,16,256], index: 10, kind: output, shape index: {}]
  %s11 = sld [smem:[#allocation0]]
  $region73: #{down_block_forward.6} parent=0
    _
  %s13 = ssub.s32 1, %s11
  %s14 = scalar_select 0, %s13, %s11
  loop: start=0, step=1, limit=4
  $region2: #{down_block_forward.6} parent=0 // loop_pre_header
    _
  $region3: #{down_block_forward.6} parent=0 // loop_header
    %s16 = sphi 0, %s20
    %p17 = scmp.ge.s32.totalorder %s16, 4
    %s26 = sphi 0, %s28
    %s29 = sphi 0, %s26
    %s30 = sphi 0, %s29
    %s46 = sphi 0, %s30
    %s50 = sphi 0, %s50
    %s52 = sphi 0, %s50
    %s53 = sphi 0, %s52
    %s67 = sphi 0, %s53
    %s71 = sphi 0, %s71
    %s73 = sphi 0, %s71
    %s74 = sphi 0, %s73
    %s88 = sphi 0, %s74
    %s92 = sphi 0, %s92
    %s94 = sphi 0, %s92
    %s95 = sphi 0, %s94
    %s109 = sphi 0, %s95
    %s113 = sphi 0, %s113
    %s115 = sphi 0, %s113
    %s116 = sphi 0, %s115
    %s130 = sphi 0, %s116
    %s134 = sphi 0, %s134
    %s136 = sphi 0, %s134
    %s137 = sphi 0, %s136
    %s151 = sphi 0, %s137
    %s157 = sphi 0, %s159
    %s160 = sphi 0, %s157
    %s161 = sphi 0, %s160
    %s177 = sphi 0, %s161
    %s183 = sphi 0, %s185
    %s186 = sphi 0, %s183
    %s187 = sphi 0, %s186
    %s203 = sphi 0, %s187
    %s207 = sphi 0, %s207
    %s209 = sphi 0, %s207
    %s210 = sphi 0, %s209
    %s224 = sphi 0, %s210
    %s228 = sphi 0, %s228
    %s230 = sphi 0, %s228
    %s231 = sphi 0, %s230
    %s245 = sphi 0, %s231
    %s251 = sphi 0, %s253
    %s254 = sphi 0, %s251
    %s255 = sphi 0, %s254
    %s271 = sphi 0, %s255
  $region4: #{down_block_forward.6} parent=0 // loop_header_branch
    %19 = sbr.rel (%p17) target = $region8
  $region5: #{down_block_forward.6} parent=0 // loop_body
    %s21 = ssub.s32 %s16, 1
    %s22 = ssub.s32 %s16, 2
    %s23 = sadd.s32 %s16, 1
    %s24 = ssub.s32 %s16, %s23
    %p25 = scmp.eq.s32.totalorder %s24, 0
    %s27 = sadd.s32 %s26, 1
    %s28 = scalar_select %p25, %s26, %s27
    %p31 = pneg %p25
    %p32 = scmp.eq.s32.totalorder %s16, 1
    %p33 = por %p31, %p32
    %p34 = scmp.ne.s32.totalorder %s26, %s29
    %p35 = scmp.eq.s32.totalorder %s16, 0
    %p36 = por %p34, %p35
    %p37 = scmp.ne.s32.totalorder %s26, %s29
    %p38 = scmp.eq.s32.totalorder %s21, 1
    %p39 = por %p37, %p38
    %p40 = scmp.ne.s32.totalorder %s29, %s30
    %p41 = scmp.eq.s32.totalorder %s21, 0
    %p42 = por %p40, %p41
    %p43 = scmp.ne.s32.totalorder %s29, %s30
    %p44 = scmp.eq.s32.totalorder %s22, 1
    %p45 = por %p43, %p44
    %p47 = scmp.ne.s32.totalorder %s30, %s46
    %p48 = scmp.eq.s32.totalorder %s22, 0
    %p49 = por %p47, %p48
    %s51 = sadd.s32 %s50, 1
    %p54 = scmp.eq.s32.totalorder %s16, 1
    %p55 = scmp.ne.s32.totalorder %s50, %s52
    %p56 = scmp.eq.s32.totalorder %s16, 0
    %p57 = por %p55, %p56
    %p58 = scmp.ne.s32.totalorder %s50, %s52
    %p59 = scmp.eq.s32.totalorder %s21, 1
    %p60 = por %p58, %p59
    %p61 = scmp.ne.s32.totalorder %s52, %s53
    %p62 = scmp.eq.s32.totalorder %s21, 0
    %p63 = por %p61, %p62
    %p64 = scmp.ne.s32.totalorder %s52, %s53
    %p65 = scmp.eq.s32.totalorder %s22, 1
    %p66 = por %p64, %p65
    %p68 = scmp.ne.s32.totalorder %s53, %s67
    %p69 = scmp.eq.s32.totalorder %s22, 0
    %p70 = por %p68, %p69
    %s72 = sadd.s32 %s71, 1
    %p75 = scmp.eq.s32.totalorder %s16, 1
    %p76 = scmp.ne.s32.totalorder %s71, %s73
    %p77 = scmp.eq.s32.totalorder %s16, 0
    %p78 = por %p76, %p77
    %p79 = scmp.ne.s32.totalorder %s71, %s73
    %p80 = scmp.eq.s32.totalorder %s21, 1
    %p81 = por %p79, %p80
    %p82 = scmp.ne.s32.totalorder %s73, %s74
    %p83 = scmp.eq.s32.totalorder %s21, 0
    %p84 = por %p82, %p83
    %p85 = scmp.ne.s32.totalorder %s73, %s74
    %p86 = scmp.eq.s32.totalorder %s22, 1
    %p87 = por %p85, %p86
    %p89 = scmp.ne.s32.totalorder %s74, %s88
    %p90 = scmp.eq.s32.totalorder %s22, 0
    %p91 = por %p89, %p90
    %s93 = sadd.s32 %s92, 1
    %p96 = scmp.eq.s32.totalorder %s16, 1
    %p97 = scmp.ne.s32.totalorder %s92, %s94
    %p98 = scmp.eq.s32.totalorder %s16, 0
    %p99 = por %p97, %p98
    %p100 = scmp.ne.s32.totalorder %s92, %s94
    %p101 = scmp.eq.s32.totalorder %s21, 1
    %p102 = por %p100, %p101
    %p103 = scmp.ne.s32.totalorder %s94, %s95
    %p104 = scmp.eq.s32.totalorder %s21, 0
    %p105 = por %p103, %p104
    %p106 = scmp.ne.s32.totalorder %s94, %s95
    %p107 = scmp.eq.s32.totalorder %s22, 1
    %p108 = por %p106, %p107
    %p110 = scmp.ne.s32.totalorder %s95, %s109
    %p111 = scmp.eq.s32.totalorder %s22, 0
    %p112 = por %p110, %p111
    %s114 = sadd.s32 %s113, 1
    %p117 = scmp.eq.s32.totalorder %s16, 1
    %p118 = scmp.ne.s32.totalorder %s113, %s115
    %p119 = scmp.eq.s32.totalorder %s16, 0
    %p120 = por %p118, %p119
    %p121 = scmp.ne.s32.totalorder %s113, %s115
    %p122 = scmp.eq.s32.totalorder %s21, 1
    %p123 = por %p121, %p122
    %p124 = scmp.ne.s32.totalorder %s115, %s116
    %p125 = scmp.eq.s32.totalorder %s21, 0
    %p126 = por %p124, %p125
    %p127 = scmp.ne.s32.totalorder %s115, %s116
    %p128 = scmp.eq.s32.totalorder %s22, 1
    %p129 = por %p127, %p128
    %p131 = scmp.ne.s32.totalorder %s116, %s130
    %p132 = scmp.eq.s32.totalorder %s22, 0
    %p133 = por %p131, %p132
    %s135 = sadd.s32 %s134, 1
    %p138 = scmp.eq.s32.totalorder %s16, 1
    %p139 = scmp.ne.s32.totalorder %s134, %s136
    %p140 = scmp.eq.s32.totalorder %s16, 0
    %p141 = por %p139, %p140
    %p142 = scmp.ne.s32.totalorder %s134, %s136
    %p143 = scmp.eq.s32.totalorder %s21, 1
    %p144 = por %p142, %p143
    %p145 = scmp.ne.s32.totalorder %s136, %s137
    %p146 = scmp.eq.s32.totalorder %s21, 0
    %p147 = por %p145, %p146
    %p148 = scmp.ne.s32.totalorder %s136, %s137
    %p149 = scmp.eq.s32.totalorder %s22, 1
    %p150 = por %p148, %p149
    %p152 = scmp.ne.s32.totalorder %s137, %s151
    %p153 = scmp.eq.s32.totalorder %s22, 0
    %p154 = por %p152, %p153
    %s155 = ssub.s32 %s16, %s23
    %p156 = scmp.eq.s32.totalorder %s155, 0
    %s158 = sadd.s32 %s157, 1
    %s159 = scalar_select %p156, %s157, %s158
    %p162 = pneg %p156
    %p163 = scmp.eq.s32.totalorder %s16, 1
    %p164 = por %p162, %p163
    %p165 = scmp.ne.s32.totalorder %s157, %s160
    %p166 = scmp.eq.s32.totalorder %s16, 0
    %p167 = por %p165, %p166
    %p168 = scmp.ne.s32.totalorder %s157, %s160
    %p169 = scmp.eq.s32.totalorder %s21, 1
    %p170 = por %p168, %p169
    %p171 = scmp.ne.s32.totalorder %s160, %s161
    %p172 = scmp.eq.s32.totalorder %s21, 0
    %p173 = por %p171, %p172
    %p174 = scmp.ne.s32.totalorder %s160, %s161
    %p175 = scmp.eq.s32.totalorder %s22, 1
    %p176 = por %p174, %p175
    %p178 = scmp.ne.s32.totalorder %s161, %s177
    %p179 = scmp.eq.s32.totalorder %s22, 0
    %p180 = por %p178, %p179
    %s181 = ssub.s32 %s16, %s23
    %p182 = scmp.eq.s32.totalorder %s181, 0
    %s184 = sadd.s32 %s183, 1
    %s185 = scalar_select %p182, %s183, %s184
    %p188 = pneg %p182
    %p189 = scmp.eq.s32.totalorder %s16, 1
    %p190 = por %p188, %p189
    %p191 = scmp.ne.s32.totalorder %s183, %s186
    %p192 = scmp.eq.s32.totalorder %s16, 0
    %p193 = por %p191, %p192
    %p194 = scmp.ne.s32.totalorder %s183, %s186
    %p195 = scmp.eq.s32.totalorder %s21, 1
    %p196 = por %p194, %p195
    %p197 = scmp.ne.s32.totalorder %s186, %s187
    %p198 = scmp.eq.s32.totalorder %s21, 0
    %p199 = por %p197, %p198
    %p200 = scmp.ne.s32.totalorder %s186, %s187
    %p201 = scmp.eq.s32.totalorder %s22, 1
    %p202 = por %p200, %p201
    %p204 = scmp.ne.s32.totalorder %s187, %s203
    %p205 = scmp.eq.s32.totalorder %s22, 0
    %p206 = por %p204, %p205
    %s208 = sadd.s32 %s207, 1
    %p211 = scmp.eq.s32.totalorder %s16, 1
    %p212 = scmp.ne.s32.totalorder %s207, %s209
    %p213 = scmp.eq.s32.totalorder %s16, 0
    %p214 = por %p212, %p213
    %p215 = scmp.ne.s32.totalorder %s207, %s209
    %p216 = scmp.eq.s32.totalorder %s21, 1
    %p217 = por %p215, %p216
    %p218 = scmp.ne.s32.totalorder %s209, %s210
    %p219 = scmp.eq.s32.totalorder %s21, 0
    %p220 = por %p218, %p219
    %p221 = scmp.ne.s32.totalorder %s209, %s210
    %p222 = scmp.eq.s32.totalorder %s22, 1
    %p223 = por %p221, %p222
    %p225 = scmp.ne.s32.totalorder %s210, %s224
    %p226 = scmp.eq.s32.totalorder %s22, 0
    %p227 = por %p225, %p226
    %s229 = sadd.s32 %s228, 1
    %p232 = scmp.eq.s32.totalorder %s16, 1
    %p233 = scmp.ne.s32.totalorder %s228, %s230
    %p234 = scmp.eq.s32.totalorder %s16, 0
    %p235 = por %p233, %p234
    %p236 = scmp.ne.s32.totalorder %s228, %s230
    %p237 = scmp.eq.s32.totalorder %s21, 1
    %p238 = por %p236, %p237
    %p239 = scmp.ne.s32.totalorder %s230, %s231
    %p240 = scmp.eq.s32.totalorder %s21, 0
    %p241 = por %p239, %p240
    %p242 = scmp.ne.s32.totalorder %s230, %s231
    %p243 = scmp.eq.s32.totalorder %s22, 1
    %p244 = por %p242, %p243
    %p246 = scmp.ne.s32.totalorder %s231, %s245
    %p247 = scmp.eq.s32.totalorder %s22, 0
    %p248 = por %p246, %p247
    %s249 = ssub.s32 %s16, %s23
    %p250 = scmp.eq.s32.totalorder %s249, 0
    %s252 = sadd.s32 %s251, 1
    %s253 = scalar_select %p250, %s251, %s252
    %p256 = pneg %p250
    %p257 = scmp.eq.s32.totalorder %s16, 1
    %p258 = por %p256, %p257
    %p259 = scmp.ne.s32.totalorder %s251, %s254
    %p260 = scmp.eq.s32.totalorder %s16, 0
    %p261 = por %p259, %p260
    %p262 = scmp.ne.s32.totalorder %s251, %s254
    %p263 = scmp.eq.s32.totalorder %s21, 1
    %p264 = por %p262, %p263
    %p265 = scmp.ne.s32.totalorder %s254, %s255
    %p266 = scmp.eq.s32.totalorder %s21, 0
    %p267 = por %p265, %p266
    %p268 = scmp.ne.s32.totalorder %s254, %s255
    %p269 = scmp.eq.s32.totalorder %s22, 1
    %p270 = por %p268, %p269
    %p272 = scmp.ne.s32.totalorder %s255, %s271
    %p273 = scmp.eq.s32.totalorder %s22, 0
    %p274 = por %p272, %p273
    %p275 = scmp.le.s32.totalorder 1, %s16
    %p276 = scmp.lt.s32.totalorder %s16, 3
    %p277 = pnand %p275, %p276
    %p278 = pneg %p277
    // Predicated region
    $region9: #{down_block_forward.6} parent=5 // pred_check
      _
    $region10: #{down_block_forward.6} parent=5 // pred_check_branch
      %280 = sbr.rel (%p277) target = $region12
    $region11: #{down_block_forward.6} parent=5 // pred_region
      %s281 = ssub.s32 %s16, 1
      // Predicated region
      $region13: #{down_block_forward.6} parent=11 // pred_check
        %p282 = pneg %p63
      $region14: #{down_block_forward.6} parent=11 // pred_check_branch
        %284 = sbr.rel (%p282) target = $region16
      $region15: #{down_block_forward.6} parent=11 // pred_region
        _
      $region16: #{down_block_forward.6} parent=11 // pred_fallthru
        _
      // Predicated region
      $region17: #{down_block_forward.6} parent=11 // pred_check
        %p285 = pneg %p84
      $region18: #{down_block_forward.6} parent=11 // pred_check_branch
        %287 = sbr.rel (%p285) target = $region20
      $region19: #{down_block_forward.6} parent=11 // pred_region
        _
      $region20: #{down_block_forward.6} parent=11 // pred_fallthru
        _
      // Predicated region
      $region21: #{down_block_forward.6} parent=11 // pred_check
        %p288 = pneg %p105
      $region22: #{down_block_forward.6} parent=11 // pred_check_branch
        %290 = sbr.rel (%p288) target = $region24
      $region23: #{down_block_forward.6} parent=11 // pred_region
        _
      $region24: #{down_block_forward.6} parent=11 // pred_fallthru
        _
      // Predicated region
      $region25: #{down_block_forward.6} parent=11 // pred_check
        %p291 = pneg %p126
      $region26: #{down_block_forward.6} parent=11 // pred_check_branch
        %293 = sbr.rel (%p291) target = $region28
      $region27: #{down_block_forward.6} parent=11 // pred_region
        _
      $region28: #{down_block_forward.6} parent=11 // pred_fallthru
        _
      // Predicated region
      $region29: #{down_block_forward.6} parent=11 // pred_check
        %p294 = pneg %p147
      $region30: #{down_block_forward.6} parent=11 // pred_check_branch
        %296 = sbr.rel (%p294) target = $region32
      $region31: #{down_block_forward.6} parent=11 // pred_region
        _
      $region32: #{down_block_forward.6} parent=11 // pred_fallthru
        _
      // Predicated region
      $region33: #{down_block_forward.6} parent=11 // pred_check
        %p297 = pneg %p220
      $region34: #{down_block_forward.6} parent=11 // pred_check_branch
        %299 = sbr.rel (%p297) target = $region36
      $region35: #{down_block_forward.6} parent=11 // pred_region
        _
      $region36: #{down_block_forward.6} parent=11 // pred_fallthru
        _
      // Predicated region
      $region37: #{down_block_forward.6} parent=11 // pred_check
        %p300 = pneg %p241
      $region38: #{down_block_forward.6} parent=11 // pred_check_branch
        %302 = sbr.rel (%p300) target = $region40
      $region39: #{down_block_forward.6} parent=11 // pred_region
        _
      $region40: #{down_block_forward.6} parent=11 // pred_fallthru
        _
    $region12: #{down_block_forward.6} parent=5 // pred_fallthru
      _
    %p303 = scmp.lt.s32.totalorder %s16, 2
    // Predicated region
    $region41: #{down_block_forward.6} parent=5 // pred_check
      %p304 = pneg %p303
    $region42: #{down_block_forward.6} parent=5 // pred_check_branch
      %306 = sbr.rel (%p304) target = $region44
    $region43: #{down_block_forward.6} parent=5 // pred_region
      // Predicated region
      $region45: #{down_block_forward.6} parent=43 // pred_check
        %p307 = pneg %p36
      $region46: #{down_block_forward.6} parent=43 // pred_check_branch
        %309 = sbr.rel (%p307) target = $region48
      $region47: #{down_block_forward.6} parent=43 // pred_region
        %p310 = scmp.lt.s32.totalorder %s16, 1
        %s311 = scalar_select %p310, %s16, 1
        %s312 = smul.addr %s311, 4
        %s313 = smul.addr %s312, 4
        %s314 = scalar_lea.vmem %s0, %s313
      $region48: #{down_block_forward.6} parent=43 // pred_fallthru
        _
      // Predicated region
      $region49: #{down_block_forward.6} parent=43 // pred_check
        %p315 = pneg %p167
      $region50: #{down_block_forward.6} parent=43 // pred_check_branch
        %317 = sbr.rel (%p315) target = $region52
      $region51: #{down_block_forward.6} parent=43 // pred_region
        %p318 = scmp.lt.s32.totalorder %s16, 1
        %s319 = scalar_select %p318, %s16, 1
        %s320 = smul.addr %s319, 4
        %s321 = scalar_lea.vmem %s6, %s320
      $region52: #{down_block_forward.6} parent=43 // pred_fallthru
        _
      // Predicated region
      $region53: #{down_block_forward.6} parent=43 // pred_check
        %p322 = pneg %p193
      $region54: #{down_block_forward.6} parent=43 // pred_check_branch
        %324 = sbr.rel (%p322) target = $region56
      $region55: #{down_block_forward.6} parent=43 // pred_region
        %p325 = scmp.lt.s32.totalorder %s16, 1
        %s326 = scalar_select %p325, %s16, 1
        %s327 = smul.addr %s326, 2
        %s328 = smul.addr %s327, 4
        %s329 = scalar_lea.vmem %s7, %s328
      $region56: #{down_block_forward.6} parent=43 // pred_fallthru
        _
    $region44: #{down_block_forward.6} parent=5 // pred_fallthru
      _
    %p330 = scmp.le.s32.totalorder 1, %s16
    %p331 = scmp.lt.s32.totalorder %s16, 3
    %p332 = pnand %p330, %p331
    %p333 = pneg %p332
    // Predicated region
    $region57: #{down_block_forward.6} parent=5 // pred_check
      _
    $region58: #{down_block_forward.6} parent=5 // pred_check_branch
      %335 = sbr.rel (%p332) target = $region60
    $region59: #{down_block_forward.6} parent=5 // pred_region
      %s336 = ssub.s32 %s16, 1
      %p337 = scmp.lt.s32.totalorder %s21, 1
      %s338 = scalar_select %p337, %s21, 1
      %s339 = smul.addr %s338, 4
      %s340 = smul.addr %s339, 4
      %s341 = scalar_lea.vmem %s0, %s340
      %p342 = pneg %p42
      %p343 = pneg %p39
      %p344 = pneg %p63
      %p345 = pneg %p60
      %p346 = pneg %p84
      %p347 = pneg %p81
      %p348 = pneg %p105
      %p349 = pneg %p102
      %p350 = pneg %p126
      %p351 = pneg %p123
      %p352 = pneg %p147
      %p353 = pneg %p144
      %p354 = scmp.lt.s32.totalorder %s21, 1
      %s355 = scalar_select %p354, %s21, 1
      %s356 = smul.addr %s355, 4
      %s357 = scalar_lea.vmem %s6, %s356
      %p358 = pneg %p173
      %p359 = pneg %p170
      %p360 = scmp.lt.s32.totalorder %s21, 1
      %s361 = scalar_select %p360, %s21, 1
      %s362 = smul.addr %s361, 2
      %s363 = smul.addr %s362, 4
      %s364 = scalar_lea.vmem %s7, %s363
      %p365 = pneg %p199
      %p366 = pneg %p196
      %p367 = pneg %p220
      %p368 = pneg %p217
      %p369 = pneg %p241
      %p370 = pneg %p238
      %p371 = pneg %p267
      %p372 = pneg %p264
      %p373 = scmp.lt.s32.totalorder %s21, 1
      %s374 = scalar_select %p373, %s21, 1
      %s375 = smul.addr %s374, 4
      %s376 = smul.addr %s375, 4
      %s377 = scalar_lea.vmem %s10, %s376
      %p378 = scmp.lt.s32.totalorder %s21, 1
      %s379 = scalar_select %p378, %s21, 1
      %s380 = smul.addr %s379, 4
      %s381 = smul.addr %s380, 4
      %s382 = scalar_lea.vmem %s0, %s381
      %p383 = scmp.lt.s32.totalorder %s21, 1
      %s384 = scalar_select %p383, %s21, 1
      %s385 = smul.addr %s384, 4
      %s386 = scalar_lea.vmem %s6, %s385
      %p387 = scmp.lt.s32.totalorder %s21, 1
      %s388 = scalar_select %p387, %s21, 1
      %s389 = smul.addr %s388, 2
      %s390 = smul.addr %s389, 4
      %s391 = scalar_lea.vmem %s7, %s390
      %p392 = scmp.lt.s32.totalorder %s21, 1
      %s393 = scalar_select %p392, %s21, 1
      %s394 = smul.addr %s393, 4
      %s395 = smul.addr %s394, 4
      %s396 = scalar_lea.vmem %s10, %s395
      %v398 = vld [vmem:[%s382] sm:$0xff]
      %v399 = vld [vmem:[%s382 + $0x8] sm:$0xff]
      %v400 = vunpack.c.l.bf16 %v398
      %v401 = vunpack.c.h.bf16 %v398
      %v402 = vunpack.c.l.bf16 %v399
      %v403 = vunpack.c.h.bf16 %v399
      %v404 = vadd.f32 %v400, %v401
      %405 = vadd.xlane.f32.xlu0 %v404
      %v406 = vpop.xlane.xlu0 %405
      %v407 = vadd.f32 %v402, %v403
      %408 = vadd.xlane.f32.xlu0 %v407
      %v409 = vpop.xlane.xlu0 %408
      %v410 = vld [vmem:[%s1] sm:$0xff]
      %v411 = vld [vmem:[%s1 + $0x8] sm:$0xff]
      %vm412 = vcmask 130048
      %v414 = vsel %vm412, %v410, 0
      %v417 = vsel %vm412, %v411, 0
      %419 = vmatprep.subr.mxu0 0.0
      %420 = vmatpush1.msra.mxu0 0.0
      %421 = vmatprep.subr.mxu0 0.0
      %422 = vmatpush1.msra.mxu0 0.0
      %423 = vmatprep.subr.mxu0 0.0
      %424 = vmatpush1.msra.mxu0 0.0
      %425 = vmatprep.subr.mxu0 0.0
      %426 = vmatpush1.msra.mxu0 0.0
      %427 = vmatprep.subr.mxu0 0.0
      %428 = vmatpush1.msra.mxu0 0.0
      %429 = vmatprep.subr.mxu0 0.0
      %430 = vmatpush1.msra.mxu0 0.0
      %431 = vmatprep.subr.mxu0 0.0
      %432 = vmatpush1.msra.mxu0 0.0
      %433 = vmatprep.subr.mxu0 0.0
      %434 = vmatpush1.msra.mxu0 0.0
      %435 = vmatprep.subr.mxu0 0.0
      %436 = vmatpush1.msra.mxu0 0.0
      %437 = vmatprep.subr.mxu0 0.0
      %438 = vmatpush1.msra.mxu0 0.0
      %439 = vmatprep.subr.mxu0 0.0
      %440 = vmatpush1.msra.mxu0 0.0
      %441 = vmatprep.subr.mxu0 0.0
      %442 = vmatpush1.msra.mxu0 0.0
      %443 = vmatprep.subr.mxu0 0.0
      %444 = vmatpush1.msra.mxu0 0.0
      %445 = vmatprep.subr.mxu0 0.0
      %446 = vmatpush1.msra.mxu0 0.0
      %447 = vmatprep.subr.mxu0 0.0
      %448 = vmatpush1.msra.mxu0 %v409
      %449 = vmatprep.subr.mxu0 0.0
      %450 = vmatpush1.msra.mxu0 %v406
      %451 = vmatprep.subr.mxu0 0.0
      %452 = vmatpush2.msra.mxu0 0.0
      %453 = vmatprep.subr.mxu0 0.0
      %454 = vmatpush2.msra.mxu0 0.0
      %455 = vmatprep.subr.mxu0 0.0
      %456 = vmatpush2.msra.mxu0 0.0
      %457 = vmatprep.subr.mxu0 0.0
      %458 = vmatpush2.msra.mxu0 0.0
      %459 = vmatprep.subr.mxu0 0.0
      %460 = vmatpush2.msra.mxu0 0.0
      %461 = vmatprep.subr.mxu0 0.0
      %462 = vmatpush2.msra.mxu0 0.0
      %463 = vmatprep.subr.mxu0 0.0
      %464 = vmatpush2.msra.mxu0 0.0
      %465 = vmatprep.subr.mxu0 0.0
      %466 = vmatpush2.msra.mxu0 0.0
      %467 = vmatprep.subr.mxu0 0.0
      %468 = vmatpush2.msra.mxu0 0.0
      %469 = vmatprep.subr.mxu0 0.0
      %470 = vmatpush2.msra.mxu0 0.0
      %471 = vmatprep.subr.mxu0 0.0
      %472 = vmatpush2.msra.mxu0 0.0
      %473 = vmatprep.subr.mxu0 0.0
      %474 = vmatpush2.msra.mxu0 0.0
      %475 = vmatprep.subr.mxu0 0.0
      %476 = vmatpush2.msra.mxu0 0.0
      %477 = vmatprep.subr.mxu0 0.0
      %478 = vmatpush2.msra.mxu0 0.0
      %479 = vmatprep.subr.mxu0 0.0
      %480 = vmatpush2.msra.mxu0 0.0
      %481 = vmatprep.subr.mxu0 0.0
      %482 = vmatpush2.msra.mxu0 0.0
      %483 = vmatprep.mubr.f32.mxu0 0.0
      %484 = vmatmul.mubr.f32.gmra.mxu0 %v414
      %v485 = vpop.f32.mrf.mxu0
      %v486 = vadd.f32 0.0, %v485
      %v487 = vpop.f32.mrf.mxu0
      %488 = vmatprep.mubr.f32.mxu0 0.0
      %489 = vmatmul.mubr.f32.gmra.mxu0 %v417
      %v490 = vpop.f32.mrf.mxu0
      %v491 = vadd.f32 0.0, %v490
      %v492 = vpop.f32.mrf.mxu0
      %493 = vdwg.mxu0
      %v494 = vmul.f32 %v486, 0.001953125
      %v495 = vmul.f32 %v491, 0.001953125
      %497 = vset.pattern.permute.xlu0 0
      %498 = vperm.xlu0 %497, %v494
      %v499 = vpop.permute.xlu0 %498
      %502 = vset.pattern.permute.xlu0 0
      %503 = vperm.xlu0 %502, %v495
      %v504 = vpop.permute.xlu0 %503
      %v506 = vsub.f32 %v400, %v499
      %v507 = vsub.f32 %v401, %v499
      %v508 = vsub.f32 %v402, %v504
      %v509 = vsub.f32 %v403, %v504
      %v510 = vmul.f32 %v506, %v506
      %v511 = vmul.f32 %v507, %v507
      %v512 = vmul.f32 %v508, %v508
      %v513 = vmul.f32 %v509, %v509
      %v514 = vadd.f32 %v510, %v511
      %515 = vadd.xlane.f32.xlu0 %v514
      %v516 = vpop.xlane.xlu0 %515
      %v517 = vadd.f32 %v512, %v513
      %518 = vadd.xlane.f32.xlu0 %v517
      %v519 = vpop.xlane.xlu0 %518
      %520 = vmatprep.subr.mxu0 0.0
      %521 = vmatpush1.msra.mxu0 0.0
      %522 = vmatprep.subr.mxu0 0.0
      %523 = vmatpush1.msra.mxu0 0.0
      %524 = vmatprep.subr.mxu0 0.0
      %525 = vmatpush1.msra.mxu0 0.0
      %526 = vmatprep.subr.mxu0 0.0
      %527 = vmatpush1.msra.mxu0 0.0
      %528 = vmatprep.subr.mxu0 0.0
      %529 = vmatpush1.msra.mxu0 0.0
      %530 = vmatprep.subr.mxu0 0.0
      %531 = vmatpush1.msra.mxu0 0.0
      %532 = vmatprep.subr.mxu0 0.0
      %533 = vmatpush1.msra.mxu0 0.0
      %534 = vmatprep.subr.mxu0 0.0
      %535 = vmatpush1.msra.mxu0 0.0
      %536 = vmatprep.subr.mxu0 0.0
      %537 = vmatpush1.msra.mxu0 0.0
      %538 = vmatprep.subr.mxu0 0.0
      %539 = vmatpush1.msra.mxu0 0.0
      %540 = vmatprep.subr.mxu0 0.0
      %541 = vmatpush1.msra.mxu0 0.0
      %542 = vmatprep.subr.mxu0 0.0
      %543 = vmatpush1.msra.mxu0 0.0
      %544 = vmatprep.subr.mxu0 0.0
      %545 = vmatpush1.msra.mxu0 0.0
      %546 = vmatprep.subr.mxu0 0.0
      %547 = vmatpush1.msra.mxu0 0.0
      %548 = vmatprep.subr.mxu0 0.0
      %549 = vmatpush1.msra.mxu0 %v519
      %550 = vmatprep.subr.mxu0 0.0
      %551 = vmatpush1.msra.mxu0 %v516
      %552 = vmatprep.subr.mxu0 0.0
      %553 = vmatpush2.msra.mxu0 0.0
      %554 = vmatprep.subr.mxu0 0.0
      %555 = vmatpush2.msra.mxu0 0.0
      %556 = vmatprep.subr.mxu0 0.0
      %557 = vmatpush2.msra.mxu0 0.0
      %558 = vmatprep.subr.mxu0 0.0
      %559 = vmatpush2.msra.mxu0 0.0
      %560 = vmatprep.subr.mxu0 0.0
      %561 = vmatpush2.msra.mxu0 0.0
      %562 = vmatprep.subr.mxu0 0.0
      %563 = vmatpush2.msra.mxu0 0.0
      %564 = vmatprep.subr.mxu0 0.0
      %565 = vmatpush2.msra.mxu0 0.0
      %566 = vmatprep.subr.mxu0 0.0
      %567 = vmatpush2.msra.mxu0 0.0
      %568 = vmatprep.subr.mxu0 0.0
      %569 = vmatpush2.msra.mxu0 0.0
      %570 = vmatprep.subr.mxu0 0.0
      %571 = vmatpush2.msra.mxu0 0.0
      %572 = vmatprep.subr.mxu0 0.0
      %573 = vmatpush2.msra.mxu0 0.0
      %574 = vmatprep.subr.mxu0 0.0
      %575 = vmatpush2.msra.mxu0 0.0
      %576 = vmatprep.subr.mxu0 0.0
      %577 = vmatpush2.msra.mxu0 0.0
      %578 = vmatprep.subr.mxu0 0.0
      %579 = vmatpush2.msra.mxu0 0.0
      %580 = vmatprep.subr.mxu0 0.0
      %581 = vmatpush2.msra.mxu0 0.0
      %582 = vmatprep.subr.mxu0 0.0
      %583 = vmatpush2.msra.mxu0 0.0
      %584 = vmatprep.mubr.f32.mxu0 0.0
      %585 = vmatmul.mubr.f32.gmra.mxu0 %v414
      %v586 = vpop.f32.mrf.mxu0
      %v587 = vadd.f32 0.0, %v586
      %v588 = vpop.f32.mrf.mxu0
      %589 = vmatprep.mubr.f32.mxu0 0.0
      %590 = vmatmul.mubr.f32.gmra.mxu0 %v417
      %v591 = vpop.f32.mrf.mxu0
      %v592 = vadd.f32 0.0, %v591
      %v593 = vpop.f32.mrf.mxu0
      %594 = vdwg.mxu0
      %v595 = vmul.f32 %v587, 0.001953125
      %v596 = vmul.f32 %v592, 0.001953125
      %v597 = vadd.f32 %v595, 1e-05
      %v598 = vadd.f32 %v596, 1e-05
      %v599 = vrsqrt.pop %v597
      %v600 = vrsqrt.pop %v598
      %602 = vset.pattern.permute.xlu0 0
      %603 = vperm.xlu0 %602, %v599
      %v604 = vpop.permute.xlu0 %603
      %607 = vset.pattern.permute.xlu0 0
      %608 = vperm.xlu0 %607, %v600
      %v609 = vpop.permute.xlu0 %608
      %v611 = vmul.f32 %v506, %v604
      %v612 = vmul.f32 %v507, %v604
      %v613 = vmul.f32 %v508, %v609
      %v614 = vmul.f32 %v509, %v609
      %v615 = vld [vmem:[%s2] sm:$0xff]
      %v616 = vld [vmem:[%s2 + $0x8] sm:$0xff]
      %618 = vset.pattern.permute.xlu0 0
      %619 = vperm.xlu0 %618, %v615
      %v620 = vpop.permute.xlu0 %619
      %623 = vset.pattern.permute.xlu0 0
      %624 = vperm.xlu0 %623, %v616
      %v625 = vpop.permute.xlu0 %624
      %v627 = vmul.f32 %v611, %v620
      %v628 = vmul.f32 %v612, %v620
      %v629 = vmul.f32 %v613, %v625
      %v630 = vmul.f32 %v614, %v625
      %v631 = vld [vmem:[%s3] sm:$0xff]
      %v632 = vld [vmem:[%s3 + $0x8] sm:$0xff]
      %634 = vset.pattern.permute.xlu0 0
      %635 = vperm.xlu0 %634, %v631
      %v636 = vpop.permute.xlu0 %635
      %639 = vset.pattern.permute.xlu0 0
      %640 = vperm.xlu0 %639, %v632
      %v641 = vpop.permute.xlu0 %640
      %v643 = vadd.f32 %v627, %v636
      %v644 = vadd.f32 %v628, %v636
      %v645 = vadd.f32 %v629, %v641
      %v646 = vadd.f32 %v630, %v641
      %v647 = vld [vmem:[%s4] sm:$0xf]
      %v648 = vld [vmem:[%s4 + $0x4] sm:$0xf]
      %v649 = vpack.c.bf16 %v645, %v643
      %v650 = vpack.c.bf16 %v646, %v644
      %v651 = vld [vmem:[%s5] sm:$0xff]
      %v652 = vld [vmem:[%s5 + $0x8] sm:$0xff]
      %654 = vset.pattern.permute.xlu0 0
      %655 = vperm.xlu0 %654, %v651
      %v656 = vpop.permute.xlu0 %655
      %659 = vset.pattern.permute.xlu0 0
      %660 = vperm.xlu0 %659, %v652
      %v661 = vpop.permute.xlu0 %660
      %v665 = vunpack.c.l.b16 %v647
      %v666 = vunpack.c.l.b16 %v648
      %v667 = vpack.c.b16 %v666, %v665
      %v669 = vsel %vm412, %v667, 0
      %671 = vmatprep.subr.bf16.mxu0 0
      %672 = vmatpush1.bf16.msra.mxu0 0
      %673 = vmatprep.subr.bf16.mxu0 0
      %674 = vmatpush1.bf16.msra.mxu0 0
      %675 = vmatprep.subr.bf16.mxu0 0
      %676 = vmatpush1.bf16.msra.mxu0 0
      %677 = vmatprep.subr.bf16.mxu0 0
      %678 = vmatpush1.bf16.msra.mxu0 0
      %679 = vmatprep.subr.bf16.mxu0 0
      %680 = vmatpush1.bf16.msra.mxu0 0
      %681 = vmatprep.subr.bf16.mxu0 0
      %682 = vmatpush1.bf16.msra.mxu0 0
      %683 = vmatprep.subr.bf16.mxu0 0
      %684 = vmatpush1.bf16.msra.mxu0 0
      %685 = vmatprep.subr.bf16.mxu0 %v650
      %686 = vmatpush1.bf16.msra.mxu0 %v649
      %687 = vmatprep.subr.bf16.mxu0 0
      %688 = vmatpush2.bf16.msra.mxu0 0
      %689 = vmatprep.subr.bf16.mxu0 0
      %690 = vmatpush2.bf16.msra.mxu0 0
      %691 = vmatprep.subr.bf16.mxu0 0
      %692 = vmatpush2.bf16.msra.mxu0 0
      %693 = vmatprep.subr.bf16.mxu0 0
      %694 = vmatpush2.bf16.msra.mxu0 0
      %695 = vmatprep.subr.bf16.mxu0 0
      %696 = vmatpush2.bf16.msra.mxu0 0
      %697 = vmatprep.subr.bf16.mxu0 0
      %698 = vmatpush2.bf16.msra.mxu0 0
      %699 = vmatprep.subr.bf16.mxu0 0
      %700 = vmatpush2.bf16.msra.mxu0 0
      %701 = vmatprep.subr.bf16.mxu0 0
      %702 = vmatpush2.bf16.msra.mxu0 0
      %703 = vmatprep.mubr.bf16.mxu0 0
      %704 = vmatmul.mubr.bf16.gmra.mxu0 %v669
      %v705 = vpop.f32.mrf.mxu0
      %v706 = vadd.f32 %v656, %v705
      %v707 = vpop.f32.mrf.mxu0
      %v708 = vadd.f32 %v656, %v707
      %v709 = vpop.f32.mrf.mxu0
      %v710 = vadd.f32 %v661, %v709
      %v711 = vpop.f32.mrf.mxu0
      %v712 = vadd.f32 %v661, %v711
      %713 = vdwg.mxu0
      %v714 = vld [vmem:[%s386] sm:$0xf]
      %v715 = vpack.c.bf16 %v710, %v706
      %v716 = vpack.c.bf16 %v712, %v708
      %v718 = vsel %vm412, %v714, 0
      %720 = vmatprep.subr.bf16.mxu0 0
      %721 = vmatpush1.bf16.msra.mxu0 0
      %722 = vmatprep.subr.bf16.mxu0 0
      %723 = vmatpush1.bf16.msra.mxu0 0
      %724 = vmatprep.subr.bf16.mxu0 0
      %725 = vmatpush1.bf16.msra.mxu0 0
      %726 = vmatprep.subr.bf16.mxu0 0
      %727 = vmatpush1.bf16.msra.mxu0 0
      %728 = vmatprep.subr.bf16.mxu0 0
      %729 = vmatpush1.bf16.msra.mxu0 0
      %730 = vmatprep.subr.bf16.mxu0 0
      %731 = vmatpush1.bf16.msra.mxu0 0
      %732 = vmatprep.subr.bf16.mxu0 0
      %733 = vmatpush1.bf16.msra.mxu0 0
      %734 = vmatprep.subr.bf16.mxu0 %v716
      %735 = vmatpush1.bf16.msra.mxu0 %v715
      %736 = vmatprep.subr.bf16.mxu0 0
      %737 = vmatpush2.bf16.msra.mxu0 0
      %738 = vmatprep.subr.bf16.mxu0 0
      %739 = vmatpush2.bf16.msra.mxu0 0
      %740 = vmatprep.subr.bf16.mxu0 0
      %741 = vmatpush2.bf16.msra.mxu0 0
      %742 = vmatprep.subr.bf16.mxu0 0
      %743 = vmatpush2.bf16.msra.mxu0 0
      %744 = vmatprep.subr.bf16.mxu0 0
      %745 = vmatpush2.bf16.msra.mxu0 0
      %746 = vmatprep.subr.bf16.mxu0 0
      %747 = vmatpush2.bf16.msra.mxu0 0
      %748 = vmatprep.subr.bf16.mxu0 0
      %749 = vmatpush2.bf16.msra.mxu0 0
      %750 = vmatprep.subr.bf16.mxu0 0
      %751 = vmatpush2.bf16.msra.mxu0 0
      %752 = vmatprep.mubr.bf16.mxu0 0
      %753 = vmatmul.mubr.bf16.gmra.mxu0 %v718
      %v754 = vpop.f32.mrf.mxu0
      %v755 = vadd.f32 0.0, %v754
      %v756 = vpop.f32.mrf.mxu0
      %v757 = vadd.f32 0.0, %v756
      %v758 = vpop.f32.mrf.mxu0
      %v759 = vpop.f32.mrf.mxu0
      %760 = vdwg.mxu0
      %v761 = vrot.slane %v755, 4
      %v762 = vmax.f32 %v755, %v761
      %v763 = vrot.slane %v762, 2
      %v764 = vmax.f32 %v762, %v763
      %v765 = vrot.slane %v764, 1
      %v766 = vmax.f32 %v764, %v765
      %v767 = vrot.slane %v757, 4
      %v768 = vmax.f32 %v757, %v767
      %v769 = vrot.slane %v768, 2
      %v770 = vmax.f32 %v768, %v769
      %v771 = vrot.slane %v770, 1
      %v772 = vmax.f32 %v770, %v771
      %v773 = vsub.f32 %v755, %v766
      %v774 = vsub.f32 %v757, %v772
      %v775 = vmul.f32 %v773, 1.442695
      %v776 = vpow.pop %v775
      %v777 = vmul.f32 %v774, 1.442695
      %v778 = vpow.pop %v777
      %v779 = vrot.slane %v776, 4
      %v780 = vadd.f32 %v776, %v779
      %v781 = vrot.slane %v780, 2
      %v782 = vadd.f32 %v780, %v781
      %v783 = vrot.slane %v782, 1
      %v784 = vadd.f32 %v782, %v783
      %v785 = vrot.slane %v778, 4
      %v786 = vadd.f32 %v778, %v785
      %v787 = vrot.slane %v786, 2
      %v788 = vadd.f32 %v786, %v787
      %v789 = vrot.slane %v788, 1
      %v790 = vadd.f32 %v788, %v789
      %v791 = vrcp.pop %v784
      %v792 = vrcp.pop %v790
      %v793 = vmul.f32 %v776, %v791
      %v794 = vmul.f32 %v778, %v792
      %v795 = vld [vmem:[%s391] sm:$0xf]
      %v796 = vld [vmem:[%s391 + $0x4] sm:$0xf]
      %v797 = vpack.c.bf16 %v793, %v793
      %v798 = vpack.c.bf16 %v794, %v794
      %v801 = vunpack.c.l.b16 %v795
      %v802 = vunpack.c.l.b16 %v796
      %v803 = vpack.c.b16 %v802, %v801
      %vm804 = vcmask 64512
      %v806 = vsel %vm804, %v803, 0
      %vm808 = vcmask 1043456
      %v810 = vsel %vm808, %v797, 0
      %v813 = vsel %vm808, %v798, 0
      %815 = vmatprep.subr.bf16.mxu0 0
      %816 = vmatpush1.bf16.msra.mxu0 0
      %817 = vmatprep.subr.bf16.mxu0 0
      %818 = vmatpush1.bf16.msra.mxu0 0
      %819 = vmatprep.subr.bf16.mxu0 0
      %820 = vmatpush1.bf16.msra.mxu0 0
      %821 = vmatprep.subr.bf16.mxu0 0
      %822 = vmatpush1.bf16.msra.mxu0 0
      %823 = vmatprep.subr.bf16.mxu0 0
      %824 = vmatpush1.bf16.msra.mxu0 0
      %825 = vmatprep.subr.bf16.mxu0 0
      %826 = vmatpush1.bf16.msra.mxu0 0
      %827 = vmatprep.subr.bf16.mxu0 0
      %828 = vmatpush1.bf16.msra.mxu0 0
      %829 = vmatprep.subr.bf16.mxu0 %v813
      %830 = vmatpush1.bf16.msra.mxu0 %v810
      %831 = vmatprep.subr.bf16.mxu0 0
      %832 = vmatpush2.bf16.msra.mxu0 0
      %833 = vmatprep.subr.bf16.mxu0 0
      %834 = vmatpush2.bf16.msra.mxu0 0
      %835 = vmatprep.subr.bf16.mxu0 0
      %836 = vmatpush2.bf16.msra.mxu0 0
      %837 = vmatprep.subr.bf16.mxu0 0
      %838 = vmatpush2.bf16.msra.mxu0 0
      %839 = vmatprep.subr.bf16.mxu0 0
      %840 = vmatpush2.bf16.msra.mxu0 0
      %841 = vmatprep.subr.bf16.mxu0 0
      %842 = vmatpush2.bf16.msra.mxu0 0
      %843 = vmatprep.subr.bf16.mxu0 0
      %844 = vmatpush2.bf16.msra.mxu0 0
      %845 = vmatprep.subr.bf16.mxu0 0
      %846 = vmatpush2.bf16.msra.mxu0 0
      %847 = vmatprep.mubr.bf16.mxu0 0
      %848 = vmatmul.mubr.bf16.gmra.mxu0 %v806
      %v849 = vpop.f32.mrf.mxu0
      %v850 = vadd.f32 0.0, %v849
      %v851 = vpop.f32.mrf.mxu0
      %v852 = vadd.f32 0.0, %v851
      %v853 = vpop.f32.mrf.mxu0
      %v854 = vadd.f32 0.0, %v853
      %v855 = vpop.f32.mrf.mxu0
      %v856 = vadd.f32 0.0, %v855
      %857 = vdwg.mxu0
      %v858 = vld [vmem:[%s8] sm:$0xf]
      %v859 = vld [vmem:[%s8 + $0x4] sm:$0xf]
      %v860 = vpack.c.bf16 %v854, %v850
      %v861 = vpack.c.bf16 %v856, %v852
      %v862 = vld [vmem:[%s9] sm:$0xff]
      %v863 = vld [vmem:[%s9 + $0x8] sm:$0xff]
      %865 = vset.pattern.permute.xlu0 0
      %866 = vperm.xlu0 %865, %v862
      %v867 = vpop.permute.xlu0 %866
      %870 = vset.pattern.permute.xlu0 0
      %871 = vperm.xlu0 %870, %v863
      %v872 = vpop.permute.xlu0 %871
      %v876 = vunpack.c.l.b16 %v858
      %v877 = vunpack.c.l.b16 %v859
      %v878 = vpack.c.b16 %v877, %v876
      %v880 = vsel %vm412, %v878, 0
      %882 = vmatprep.subr.bf16.mxu0 0
      %883 = vmatpush1.bf16.msra.mxu0 0
      %884 = vmatprep.subr.bf16.mxu0 0
      %885 = vmatpush1.bf16.msra.mxu0 0
      %886 = vmatprep.subr.bf16.mxu0 0
      %887 = vmatpush1.bf16.msra.mxu0 0
      %888 = vmatprep.subr.bf16.mxu0 0
      %889 = vmatpush1.bf16.msra.mxu0 0
      %890 = vmatprep.subr.bf16.mxu0 0
      %891 = vmatpush1.bf16.msra.mxu0 0
      %892 = vmatprep.subr.bf16.mxu0 0
      %893 = vmatpush1.bf16.msra.mxu0 0
      %894 = vmatprep.subr.bf16.mxu0 0
      %895 = vmatpush1.bf16.msra.mxu0 0
      %896 = vmatprep.subr.bf16.mxu0 %v861
      %897 = vmatpush1.bf16.msra.mxu0 %v860
      %898 = vmatprep.subr.bf16.mxu0 0
      %899 = vmatpush2.bf16.msra.mxu0 0
      %900 = vmatprep.subr.bf16.mxu0 0
      %901 = vmatpush2.bf16.msra.mxu0 0
      %902 = vmatprep.subr.bf16.mxu0 0
      %903 = vmatpush2.bf16.msra.mxu0 0
      %904 = vmatprep.subr.bf16.mxu0 0
      %905 = vmatpush2.bf16.msra.mxu0 0
      %906 = vmatprep.subr.bf16.mxu0 0
      %907 = vmatpush2.bf16.msra.mxu0 0
      %908 = vmatprep.subr.bf16.mxu0 0
      %909 = vmatpush2.bf16.msra.mxu0 0
      %910 = vmatprep.subr.bf16.mxu0 0
      %911 = vmatpush2.bf16.msra.mxu0 0
      %912 = vmatprep.subr.bf16.mxu0 0
      %913 = vmatpush2.bf16.msra.mxu0 0
      %914 = vmatprep.mubr.bf16.mxu0 0
      %915 = vmatmul.mubr.bf16.gmra.mxu0 %v880
      %v916 = vpop.f32.mrf.mxu0
      %v917 = vadd.f32 %v867, %v916
      %v918 = vpop.f32.mrf.mxu0
      %v919 = vadd.f32 %v867, %v918
      %v920 = vpop.f32.mrf.mxu0
      %v921 = vadd.f32 %v872, %v920
      %v922 = vpop.f32.mrf.mxu0
      %v923 = vadd.f32 %v872, %v922
      %924 = vdwg.mxu0
      %v925 = vadd.f32 %v917, %v400
      %v926 = vadd.f32 %v919, %v401
      %v927 = vadd.f32 %v921, %v402
      %v928 = vadd.f32 %v923, %v403
      %v929 = vpack.c.bf16 %v927, %v925
      %v930 = vpack.c.bf16 %v928, %v926
      %v933 = vunpack.c.l.b16 %v929
      %v934 = vunpack.c.l.b16 %v930
      %v935 = vunpack.c.h.b16 %v929
      %v936 = vunpack.c.h.b16 %v930
      %v937 = vpack.c.b16 %v934, %v933
      %v938 = vpack.c.b16 %v936, %v935
      %941 = vst [vmem:[%s396] sm:$0xff] %v937
      %942 = vst [vmem:[%s396 + $0x8] sm:$0xff] %v938
      %p943 = scmp.lt.s32.totalorder %s21, 1
      %s944 = scalar_select %p943, %s21, 1
      %s945 = smul.addr %s944, 4
      %s946 = smul.addr %s945, 4
      %s947 = scalar_lea.vmem %s10, %s946
      // Predicated region
      $region61: #{down_block_forward.6} parent=59 // pred_check
        %p948 = pneg %p264
      $region62: #{down_block_forward.6} parent=59 // pred_check_branch
        %950 = sbr.rel (%p948) target = $region64
      $region63: #{down_block_forward.6} parent=59 // pred_region
        _
      $region64: #{down_block_forward.6} parent=59 // pred_fallthru
        _
    $region60: #{down_block_forward.6} parent=5 // pred_fallthru
      _
    %p951 = scmp.le.s32.totalorder 2, %s16
    // Predicated region
    $region65: #{down_block_forward.6} parent=5 // pred_check
      %p952 = pneg %p951
    $region66: #{down_block_forward.6} parent=5 // pred_check_branch
      %954 = sbr.rel (%p952) target = $region68
    $region67: #{down_block_forward.6} parent=5 // pred_region
      %s955 = ssub.s32 %s16, 2
      // Predicated region
      $region69: #{down_block_forward.6} parent=67 // pred_check
        %p956 = pneg %p270
      $region70: #{down_block_forward.6} parent=67 // pred_check_branch
        %958 = sbr.rel (%p956) target = $region72
      $region71: #{down_block_forward.6} parent=67 // pred_region
        %p959 = scmp.lt.s32.totalorder %s22, 1
        %s960 = scalar_select %p959, %s22, 1
        %s961 = smul.addr %s960, 4
        %s962 = smul.addr %s961, 4
        %s963 = scalar_lea.vmem %s10, %s962
      $region72: #{down_block_forward.6} parent=67 // pred_fallthru
        _
    $region68: #{down_block_forward.6} parent=5 // pred_fallthru
      _
  $region6: #{down_block_forward.6} parent=0 // loop_footer
    %s20 = sadd.s32 1, %s16
  $region7: #{down_block_forward.6} parent=0 // loop_footer_branch
    %15 = sbr.rel target = $region3
  $region8: #{down_block_forward.6} parent=0 // loop_exit
    _

// kernel: down_block_forward.4
$region0: #{down_block_forward.4}
  #allocation0 [shape = 'u32[]', space=smem, size = 0x4, offset = 0x4, fixed_abs, tag = 'smem constant byte address 0x4 - core index']
  #allocation1 [shape = 'u32[144,128]{1,0:T(1,128)}', space=vmem, size = 0x12000, scoped, tag = 'internal scratch']
  %s0 = inlined_call_operand.vmem [shape: f32[2,8,256], index: 0, kind: input, shape index: {}]
  %s1 = inlined_call_operand.vmem [shape: f32[8,8], index: 1, kind: input, shape index: {}]
  %s2 = inlined_call_operand.vmem [shape: f32[8,1], index: 2, kind: input, shape index: {}]
  %s3 = inlined_call_operand.vmem [shape: f32[8,1], index: 3, kind: input, shape index: {}]
  %s4 = inlined_call_operand.vmem [shape: bf16[9,16,8], index: 4, kind: input, shape index: {}]
  %s5 = inlined_call_operand.vmem [shape: f32[16,1], index: 5, kind: input, shape index: {}]
  %s6 = inlined_call_operand.vmem [shape: bf16[9,1,256], index: 6, kind: input, shape index: {}]
  %s7 = inlined_call_operand.vmem [shape: f32[2,16,1], index: 7, kind: input, shape index: {}]
  %s8 = inlined_call_operand.vmem [shape: bf16[2,16,256], index: 8, kind: output, shape index: {}]
  %s9 = sld [smem:[#allocation0]]
  $region65: #{down_block_forward.4} parent=0
    _
  %s11 = ssub.s32 1, %s9
  %s12 = scalar_select 0, %s11, %s9
  loop: start=0, step=1, limit=4
  $region2: #{down_block_forward.4} parent=0 // loop_pre_header
    _
  $region3: #{down_block_forward.4} parent=0 // loop_header
    %s14 = sphi 0, %s18
    %p15 = scmp.ge.s32.totalorder %s14, 4
    %s24 = sphi 0, %s26
    %s27 = sphi 0, %s24
    %s28 = sphi 0, %s27
    %s44 = sphi 0, %s28
    %s48 = sphi 0, %s48
    %s50 = sphi 0, %s48
    %s51 = sphi 0, %s50
    %s65 = sphi 0, %s51
    %s69 = sphi 0, %s69
    %s71 = sphi 0, %s69
    %s72 = sphi 0, %s71
    %s86 = sphi 0, %s72
    %s90 = sphi 0, %s90
    %s92 = sphi 0, %s90
    %s93 = sphi 0, %s92
    %s107 = sphi 0, %s93
    %s111 = sphi 0, %s111
    %s113 = sphi 0, %s111
    %s114 = sphi 0, %s113
    %s128 = sphi 0, %s114
    %s132 = sphi 0, %s132
    %s134 = sphi 0, %s132
    %s135 = sphi 0, %s134
    %s149 = sphi 0, %s135
    %s153 = sphi 0, %s153
    %s155 = sphi 0, %s153
    %s156 = sphi 0, %s155
    %s170 = sphi 0, %s156
    %s176 = sphi 0, %s178
    %s179 = sphi 0, %s176
    %s180 = sphi 0, %s179
    %s196 = sphi 0, %s180
    %s202 = sphi 0, %s204
    %s205 = sphi 0, %s202
    %s206 = sphi 0, %s205
    %s222 = sphi 0, %s206
  $region4: #{down_block_forward.4} parent=0 // loop_header_branch
    %17 = sbr.rel (%p15) target = $region8
  $region5: #{down_block_forward.4} parent=0 // loop_body
    %s19 = ssub.s32 %s14, 1
    %s20 = ssub.s32 %s14, 2
    %s21 = sadd.s32 %s14, 1
    %s22 = ssub.s32 %s14, %s21
    %p23 = scmp.eq.s32.totalorder %s22, 0
    %s25 = sadd.s32 %s24, 1
    %s26 = scalar_select %p23, %s24, %s25
    %p29 = pneg %p23
    %p30 = scmp.eq.s32.totalorder %s14, 1
    %p31 = por %p29, %p30
    %p32 = scmp.ne.s32.totalorder %s24, %s27
    %p33 = scmp.eq.s32.totalorder %s14, 0
    %p34 = por %p32, %p33
    %p35 = scmp.ne.s32.totalorder %s24, %s27
    %p36 = scmp.eq.s32.totalorder %s19, 1
    %p37 = por %p35, %p36
    %p38 = scmp.ne.s32.totalorder %s27, %s28
    %p39 = scmp.eq.s32.totalorder %s19, 0
    %p40 = por %p38, %p39
    %p41 = scmp.ne.s32.totalorder %s27, %s28
    %p42 = scmp.eq.s32.totalorder %s20, 1
    %p43 = por %p41, %p42
    %p45 = scmp.ne.s32.totalorder %s28, %s44
    %p46 = scmp.eq.s32.totalorder %s20, 0
    %p47 = por %p45, %p46
    %s49 = sadd.s32 %s48, 1
    %p52 = scmp.eq.s32.totalorder %s14, 1
    %p53 = scmp.ne.s32.totalorder %s48, %s50
    %p54 = scmp.eq.s32.totalorder %s14, 0
    %p55 = por %p53, %p54
    %p56 = scmp.ne.s32.totalorder %s48, %s50
    %p57 = scmp.eq.s32.totalorder %s19, 1
    %p58 = por %p56, %p57
    %p59 = scmp.ne.s32.totalorder %s50, %s51
    %p60 = scmp.eq.s32.totalorder %s19, 0
    %p61 = por %p59, %p60
    %p62 = scmp.ne.s32.totalorder %s50, %s51
    %p63 = scmp.eq.s32.totalorder %s20, 1
    %p64 = por %p62, %p63
    %p66 = scmp.ne.s32.totalorder %s51, %s65
    %p67 = scmp.eq.s32.totalorder %s20, 0
    %p68 = por %p66, %p67
    %s70 = sadd.s32 %s69, 1
    %p73 = scmp.eq.s32.totalorder %s14, 1
    %p74 = scmp.ne.s32.totalorder %s69, %s71
    %p75 = scmp.eq.s32.totalorder %s14, 0
    %p76 = por %p74, %p75
    %p77 = scmp.ne.s32.totalorder %s69, %s71
    %p78 = scmp.eq.s32.totalorder %s19, 1
    %p79 = por %p77, %p78
    %p80 = scmp.ne.s32.totalorder %s71, %s72
    %p81 = scmp.eq.s32.totalorder %s19, 0
    %p82 = por %p80, %p81
    %p83 = scmp.ne.s32.totalorder %s71, %s72
    %p84 = scmp.eq.s32.totalorder %s20, 1
    %p85 = por %p83, %p84
    %p87 = scmp.ne.s32.totalorder %s72, %s86
    %p88 = scmp.eq.s32.totalorder %s20, 0
    %p89 = por %p87, %p88
    %s91 = sadd.s32 %s90, 1
    %p94 = scmp.eq.s32.totalorder %s14, 1
    %p95 = scmp.ne.s32.totalorder %s90, %s92
    %p96 = scmp.eq.s32.totalorder %s14, 0
    %p97 = por %p95, %p96
    %p98 = scmp.ne.s32.totalorder %s90, %s92
    %p99 = scmp.eq.s32.totalorder %s19, 1
    %p100 = por %p98, %p99
    %p101 = scmp.ne.s32.totalorder %s92, %s93
    %p102 = scmp.eq.s32.totalorder %s19, 0
    %p103 = por %p101, %p102
    %p104 = scmp.ne.s32.totalorder %s92, %s93
    %p105 = scmp.eq.s32.totalorder %s20, 1
    %p106 = por %p104, %p105
    %p108 = scmp.ne.s32.totalorder %s93, %s107
    %p109 = scmp.eq.s32.totalorder %s20, 0
    %p110 = por %p108, %p109
    %s112 = sadd.s32 %s111, 1
    %p115 = scmp.eq.s32.totalorder %s14, 1
    %p116 = scmp.ne.s32.totalorder %s111, %s113
    %p117 = scmp.eq.s32.totalorder %s14, 0
    %p118 = por %p116, %p117
    %p119 = scmp.ne.s32.totalorder %s111, %s113
    %p120 = scmp.eq.s32.totalorder %s19, 1
    %p121 = por %p119, %p120
    %p122 = scmp.ne.s32.totalorder %s113, %s114
    %p123 = scmp.eq.s32.totalorder %s19, 0
    %p124 = por %p122, %p123
    %p125 = scmp.ne.s32.totalorder %s113, %s114
    %p126 = scmp.eq.s32.totalorder %s20, 1
    %p127 = por %p125, %p126
    %p129 = scmp.ne.s32.totalorder %s114, %s128
    %p130 = scmp.eq.s32.totalorder %s20, 0
    %p131 = por %p129, %p130
    %s133 = sadd.s32 %s132, 1
    %p136 = scmp.eq.s32.totalorder %s14, 1
    %p137 = scmp.ne.s32.totalorder %s132, %s134
    %p138 = scmp.eq.s32.totalorder %s14, 0
    %p139 = por %p137, %p138
    %p140 = scmp.ne.s32.totalorder %s132, %s134
    %p141 = scmp.eq.s32.totalorder %s19, 1
    %p142 = por %p140, %p141
    %p143 = scmp.ne.s32.totalorder %s134, %s135
    %p144 = scmp.eq.s32.totalorder %s19, 0
    %p145 = por %p143, %p144
    %p146 = scmp.ne.s32.totalorder %s134, %s135
    %p147 = scmp.eq.s32.totalorder %s20, 1
    %p148 = por %p146, %p147
    %p150 = scmp.ne.s32.totalorder %s135, %s149
    %p151 = scmp.eq.s32.totalorder %s20, 0
    %p152 = por %p150, %p151
    %s154 = sadd.s32 %s153, 1
    %p157 = scmp.eq.s32.totalorder %s14, 1
    %p158 = scmp.ne.s32.totalorder %s153, %s155
    %p159 = scmp.eq.s32.totalorder %s14, 0
    %p160 = por %p158, %p159
    %p161 = scmp.ne.s32.totalorder %s153, %s155
    %p162 = scmp.eq.s32.totalorder %s19, 1
    %p163 = por %p161, %p162
    %p164 = scmp.ne.s32.totalorder %s155, %s156
    %p165 = scmp.eq.s32.totalorder %s19, 0
    %p166 = por %p164, %p165
    %p167 = scmp.ne.s32.totalorder %s155, %s156
    %p168 = scmp.eq.s32.totalorder %s20, 1
    %p169 = por %p167, %p168
    %p171 = scmp.ne.s32.totalorder %s156, %s170
    %p172 = scmp.eq.s32.totalorder %s20, 0
    %p173 = por %p171, %p172
    %s174 = ssub.s32 %s14, %s21
    %p175 = scmp.eq.s32.totalorder %s174, 0
    %s177 = sadd.s32 %s176, 1
    %s178 = scalar_select %p175, %s176, %s177
    %p181 = pneg %p175
    %p182 = scmp.eq.s32.totalorder %s14, 1
    %p183 = por %p181, %p182
    %p184 = scmp.ne.s32.totalorder %s176, %s179
    %p185 = scmp.eq.s32.totalorder %s14, 0
    %p186 = por %p184, %p185
    %p187 = scmp.ne.s32.totalorder %s176, %s179
    %p188 = scmp.eq.s32.totalorder %s19, 1
    %p189 = por %p187, %p188
    %p190 = scmp.ne.s32.totalorder %s179, %s180
    %p191 = scmp.eq.s32.totalorder %s19, 0
    %p192 = por %p190, %p191
    %p193 = scmp.ne.s32.totalorder %s179, %s180
    %p194 = scmp.eq.s32.totalorder %s20, 1
    %p195 = por %p193, %p194
    %p197 = scmp.ne.s32.totalorder %s180, %s196
    %p198 = scmp.eq.s32.totalorder %s20, 0
    %p199 = por %p197, %p198
    %s200 = ssub.s32 %s14, %s21
    %p201 = scmp.eq.s32.totalorder %s200, 0
    %s203 = sadd.s32 %s202, 1
    %s204 = scalar_select %p201, %s202, %s203
    %p207 = pneg %p201
    %p208 = scmp.eq.s32.totalorder %s14, 1
    %p209 = por %p207, %p208
    %p210 = scmp.ne.s32.totalorder %s202, %s205
    %p211 = scmp.eq.s32.totalorder %s14, 0
    %p212 = por %p210, %p211
    %p213 = scmp.ne.s32.totalorder %s202, %s205
    %p214 = scmp.eq.s32.totalorder %s19, 1
    %p215 = por %p213, %p214
    %p216 = scmp.ne.s32.totalorder %s205, %s206
    %p217 = scmp.eq.s32.totalorder %s19, 0
    %p218 = por %p216, %p217
    %p219 = scmp.ne.s32.totalorder %s205, %s206
    %p220 = scmp.eq.s32.totalorder %s20, 1
    %p221 = por %p219, %p220
    %p223 = scmp.ne.s32.totalorder %s206, %s222
    %p224 = scmp.eq.s32.totalorder %s20, 0
    %p225 = por %p223, %p224
    %p226 = scmp.le.s32.totalorder 1, %s14
    %p227 = scmp.lt.s32.totalorder %s14, 3
    %p228 = pnand %p226, %p227
    %p229 = pneg %p228
    // Predicated region
    $region9: #{down_block_forward.4} parent=5 // pred_check
      _
    $region10: #{down_block_forward.4} parent=5 // pred_check_branch
      %231 = sbr.rel (%p228) target = $region12
    $region11: #{down_block_forward.4} parent=5 // pred_region
      %s232 = ssub.s32 %s14, 1
      // Predicated region
      $region13: #{down_block_forward.4} parent=11 // pred_check
        %p233 = pneg %p61
      $region14: #{down_block_forward.4} parent=11 // pred_check_branch
        %235 = sbr.rel (%p233) target = $region16
      $region15: #{down_block_forward.4} parent=11 // pred_region
        _
      $region16: #{down_block_forward.4} parent=11 // pred_fallthru
        _
      // Predicated region
      $region17: #{down_block_forward.4} parent=11 // pred_check
        %p236 = pneg %p82
      $region18: #{down_block_forward.4} parent=11 // pred_check_branch
        %238 = sbr.rel (%p236) target = $region20
      $region19: #{down_block_forward.4} parent=11 // pred_region
        _
      $region20: #{down_block_forward.4} parent=11 // pred_fallthru
        _
      // Predicated region
      $region21: #{down_block_forward.4} parent=11 // pred_check
        %p239 = pneg %p103
      $region22: #{down_block_forward.4} parent=11 // pred_check_branch
        %241 = sbr.rel (%p239) target = $region24
      $region23: #{down_block_forward.4} parent=11 // pred_region
        _
      $region24: #{down_block_forward.4} parent=11 // pred_fallthru
        _
      // Predicated region
      $region25: #{down_block_forward.4} parent=11 // pred_check
        %p242 = pneg %p124
      $region26: #{down_block_forward.4} parent=11 // pred_check_branch
        %244 = sbr.rel (%p242) target = $region28
      $region27: #{down_block_forward.4} parent=11 // pred_region
        _
      $region28: #{down_block_forward.4} parent=11 // pred_fallthru
        _
      // Predicated region
      $region29: #{down_block_forward.4} parent=11 // pred_check
        %p245 = pneg %p145
      $region30: #{down_block_forward.4} parent=11 // pred_check_branch
        %247 = sbr.rel (%p245) target = $region32
      $region31: #{down_block_forward.4} parent=11 // pred_region
        _
      $region32: #{down_block_forward.4} parent=11 // pred_fallthru
        _
      // Predicated region
      $region33: #{down_block_forward.4} parent=11 // pred_check
        %p248 = pneg %p166
      $region34: #{down_block_forward.4} parent=11 // pred_check_branch
        %250 = sbr.rel (%p248) target = $region36
      $region35: #{down_block_forward.4} parent=11 // pred_region
        _
      $region36: #{down_block_forward.4} parent=11 // pred_fallthru
        _
    $region12: #{down_block_forward.4} parent=5 // pred_fallthru
      _
    %p251 = scmp.lt.s32.totalorder %s14, 2
    // Predicated region
    $region37: #{down_block_forward.4} parent=5 // pred_check
      %p252 = pneg %p251
    $region38: #{down_block_forward.4} parent=5 // pred_check_branch
      %254 = sbr.rel (%p252) target = $region40
    $region39: #{down_block_forward.4} parent=5 // pred_region
      // Predicated region
      $region41: #{down_block_forward.4} parent=39 // pred_check
        %p255 = pneg %p34
      $region42: #{down_block_forward.4} parent=39 // pred_check_branch
        %257 = sbr.rel (%p255) target = $region44
      $region43: #{down_block_forward.4} parent=39 // pred_region
        %p258 = scmp.lt.s32.totalorder %s14, 1
        %s259 = scalar_select %p258, %s14, 1
        %s260 = smul.addr %s259, 2
        %s261 = smul.addr %s260, 8
        %s262 = scalar_lea.vmem %s0, %s261
      $region44: #{down_block_forward.4} parent=39 // pred_fallthru
        _
      // Predicated region
      $region45: #{down_block_forward.4} parent=39 // pred_check
        %p263 = pneg %p186
      $region46: #{down_block_forward.4} parent=39 // pred_check_branch
        %265 = sbr.rel (%p263) target = $region48
      $region47: #{down_block_forward.4} parent=39 // pred_region
        %p266 = scmp.lt.s32.totalorder %s14, 1
        %s267 = scalar_select %p266, %s14, 1
        %s268 = smul.addr %s267, 2
        %s269 = smul.addr %s268, 8
        %s270 = scalar_lea.vmem %s7, %s269
      $region48: #{down_block_forward.4} parent=39 // pred_fallthru
        _
    $region40: #{down_block_forward.4} parent=5 // pred_fallthru
      _
    %p271 = scmp.le.s32.totalorder 1, %s14
    %p272 = scmp.lt.s32.totalorder %s14, 3
    %p273 = pnand %p271, %p272
    %p274 = pneg %p273
    // Predicated region
    $region49: #{down_block_forward.4} parent=5 // pred_check
      _
    $region50: #{down_block_forward.4} parent=5 // pred_check_branch
      %276 = sbr.rel (%p273) target = $region52
    $region51: #{down_block_forward.4} parent=5 // pred_region
      %s277 = ssub.s32 %s14, 1
      %p278 = scmp.lt.s32.totalorder %s19, 1
      %s279 = scalar_select %p278, %s19, 1
      %s280 = smul.addr %s279, 2
      %s281 = smul.addr %s280, 8
      %s282 = scalar_lea.vmem %s0, %s281
      %p283 = pneg %p40
      %p284 = pneg %p37
      %p285 = pneg %p61
      %p286 = pneg %p58
      %p287 = pneg %p82
      %p288 = pneg %p79
      %p289 = pneg %p103
      %p290 = pneg %p100
      %p291 = pneg %p124
      %p292 = pneg %p121
      %p293 = pneg %p145
      %p294 = pneg %p142
      %p295 = pneg %p166
      %p296 = pneg %p163
      %p297 = scmp.lt.s32.totalorder %s19, 1
      %s298 = scalar_select %p297, %s19, 1
      %s299 = smul.addr %s298, 2
      %s300 = smul.addr %s299, 8
      %s301 = scalar_lea.vmem %s7, %s300
      %p302 = pneg %p192
      %p303 = pneg %p189
      %p304 = pneg %p218
      %p305 = pneg %p215
      %p306 = scmp.lt.s32.totalorder %s19, 1
      %s307 = scalar_select %p306, %s19, 1
      %s308 = smul.addr %s307, 4
      %s309 = smul.addr %s308, 4
      %s310 = scalar_lea.vmem %s8, %s309
      %p311 = scmp.lt.s32.totalorder %s19, 1
      %s312 = scalar_select %p311, %s19, 1
      %s313 = smul.addr %s312, 2
      %s314 = smul.addr %s313, 8
      %s315 = scalar_lea.vmem %s0, %s314
      %p316 = scmp.lt.s32.totalorder %s19, 1
      %s317 = scalar_select %p316, %s19, 1
      %s318 = smul.addr %s317, 2
      %s319 = smul.addr %s318, 8
      %s320 = scalar_lea.vmem %s7, %s319
      %p321 = scmp.lt.s32.totalorder %s19, 1
      %s322 = scalar_select %p321, %s19, 1
      %s323 = smul.addr %s322, 4
      %s324 = smul.addr %s323, 4
      %s325 = scalar_lea.vmem %s8, %s324
      %v327 = vld [vmem:[%s315] sm:$0xff]
      %v328 = vld [vmem:[%s315 + $0x8] sm:$0xff]
      %v329 = vadd.f32 %v327, %v328
      %330 = vadd.xlane.f32.xlu0 %v329
      %v331 = vpop.xlane.xlu0 %330
      %v332 = vld [vmem:[%s1] sm:$0xff]
      %vm333 = vcmask 64512
      %v335 = vsel %vm333, %v332, 0
      %337 = vmatprep.subr.mxu0 0.0
      %338 = vmatpush1.msra.mxu0 0.0
      %339 = vmatprep.subr.mxu0 0.0
      %340 = vmatpush1.msra.mxu0 0.0
      %341 = vmatprep.subr.mxu0 0.0
      %342 = vmatpush1.msra.mxu0 0.0
      %343 = vmatprep.subr.mxu0 0.0
      %344 = vmatpush1.msra.mxu0 0.0
      %345 = vmatprep.subr.mxu0 0.0
      %346 = vmatpush1.msra.mxu0 0.0
      %347 = vmatprep.subr.mxu0 0.0
      %348 = vmatpush1.msra.mxu0 0.0
      %349 = vmatprep.subr.mxu0 0.0
      %350 = vmatpush1.msra.mxu0 0.0
      %351 = vmatprep.subr.mxu0 0.0
      %352 = vmatpush1.msra.mxu0 0.0
      %353 = vmatprep.subr.mxu0 0.0
      %354 = vmatpush1.msra.mxu0 0.0
      %355 = vmatprep.subr.mxu0 0.0
      %356 = vmatpush1.msra.mxu0 0.0
      %357 = vmatprep.subr.mxu0 0.0
      %358 = vmatpush1.msra.mxu0 0.0
      %359 = vmatprep.subr.mxu0 0.0
      %360 = vmatpush1.msra.mxu0 0.0
      %361 = vmatprep.subr.mxu0 0.0
      %362 = vmatpush1.msra.mxu0 0.0
      %363 = vmatprep.subr.mxu0 0.0
      %364 = vmatpush1.msra.mxu0 0.0
      %365 = vmatprep.subr.mxu0 0.0
      %366 = vmatpush1.msra.mxu0 0.0
      %367 = vmatprep.subr.mxu0 0.0
      %368 = vmatpush1.msra.mxu0 %v331
      %369 = vmatprep.subr.mxu0 0.0
      %370 = vmatpush2.msra.mxu0 0.0
      %371 = vmatprep.subr.mxu0 0.0
      %372 = vmatpush2.msra.mxu0 0.0
      %373 = vmatprep.subr.mxu0 0.0
      %374 = vmatpush2.msra.mxu0 0.0
      %375 = vmatprep.subr.mxu0 0.0
      %376 = vmatpush2.msra.mxu0 0.0
      %377 = vmatprep.subr.mxu0 0.0
      %378 = vmatpush2.msra.mxu0 0.0
      %379 = vmatprep.subr.mxu0 0.0
      %380 = vmatpush2.msra.mxu0 0.0
      %381 = vmatprep.subr.mxu0 0.0
      %382 = vmatpush2.msra.mxu0 0.0
      %383 = vmatprep.subr.mxu0 0.0
      %384 = vmatpush2.msra.mxu0 0.0
      %385 = vmatprep.subr.mxu0 0.0
      %386 = vmatpush2.msra.mxu0 0.0
      %387 = vmatprep.subr.mxu0 0.0
      %388 = vmatpush2.msra.mxu0 0.0
      %389 = vmatprep.subr.mxu0 0.0
      %390 = vmatpush2.msra.mxu0 0.0
      %391 = vmatprep.subr.mxu0 0.0
      %392 = vmatpush2.msra.mxu0 0.0
      %393 = vmatprep.subr.mxu0 0.0
      %394 = vmatpush2.msra.mxu0 0.0
      %395 = vmatprep.subr.mxu0 0.0
      %396 = vmatpush2.msra.mxu0 0.0
      %397 = vmatprep.subr.mxu0 0.0
      %398 = vmatpush2.msra.mxu0 0.0
      %399 = vmatprep.subr.mxu0 0.0
      %400 = vmatpush2.msra.mxu0 0.0
      %401 = vmatprep.mubr.f32.mxu0 0.0
      %402 = vmatmul.mubr.f32.gmra.mxu0 %v335
      %v403 = vpop.f32.mrf.mxu0
      %v404 = vadd.f32 0.0, %v403
      %v405 = vpop.f32.mrf.mxu0
      %406 = vdwg.mxu0
      %v407 = vmul.f32 %v404, 0.00390625
      %409 = vset.pattern.permute.xlu0 0
      %410 = vperm.xlu0 %409, %v407
      %v411 = vpop.permute.xlu0 %410
      %v413 = vsub.f32 %v327, %v411
      %v414 = vsub.f32 %v328, %v411
      %v415 = vmul.f32 %v413, %v413
      %v416 = vmul.f32 %v414, %v414
      %v417 = vadd.f32 %v415, %v416
      %418 = vadd.xlane.f32.xlu0 %v417
      %v419 = vpop.xlane.xlu0 %418
      %420 = vmatprep.subr.mxu0 0.0
      %421 = vmatpush1.msra.mxu0 0.0
      %422 = vmatprep.subr.mxu0 0.0
      %423 = vmatpush1.msra.mxu0 0.0
      %424 = vmatprep.subr.mxu0 0.0
      %425 = vmatpush1.msra.mxu0 0.0
      %426 = vmatprep.subr.mxu0 0.0
      %427 = vmatpush1.msra.mxu0 0.0
      %428 = vmatprep.subr.mxu0 0.0
      %429 = vmatpush1.msra.mxu0 0.0
      %430 = vmatprep.subr.mxu0 0.0
      %431 = vmatpush1.msra.mxu0 0.0
      %432 = vmatprep.subr.mxu0 0.0
      %433 = vmatpush1.msra.mxu0 0.0
      %434 = vmatprep.subr.mxu0 0.0
      %435 = vmatpush1.msra.mxu0 0.0
      %436 = vmatprep.subr.mxu0 0.0
      %437 = vmatpush1.msra.mxu0 0.0
      %438 = vmatprep.subr.mxu0 0.0
      %439 = vmatpush1.msra.mxu0 0.0
      %440 = vmatprep.subr.mxu0 0.0
      %441 = vmatpush1.msra.mxu0 0.0
      %442 = vmatprep.subr.mxu0 0.0
      %443 = vmatpush1.msra.mxu0 0.0
      %444 = vmatprep.subr.mxu0 0.0
      %445 = vmatpush1.msra.mxu0 0.0
      %446 = vmatprep.subr.mxu0 0.0
      %447 = vmatpush1.msra.mxu0 0.0
      %448 = vmatprep.subr.mxu0 0.0
      %449 = vmatpush1.msra.mxu0 0.0
      %450 = vmatprep.subr.mxu0 0.0
      %451 = vmatpush1.msra.mxu0 %v419
      %452 = vmatprep.subr.mxu0 0.0
      %453 = vmatpush2.msra.mxu0 0.0
      %454 = vmatprep.subr.mxu0 0.0
      %455 = vmatpush2.msra.mxu0 0.0
      %456 = vmatprep.subr.mxu0 0.0
      %457 = vmatpush2.msra.mxu0 0.0
      %458 = vmatprep.subr.mxu0 0.0
      %459 = vmatpush2.msra.mxu0 0.0
      %460 = vmatprep.subr.mxu0 0.0
      %461 = vmatpush2.msra.mxu0 0.0
      %462 = vmatprep.subr.mxu0 0.0
      %463 = vmatpush2.msra.mxu0 0.0
      %464 = vmatprep.subr.mxu0 0.0
      %465 = vmatpush2.msra.mxu0 0.0
      %466 = vmatprep.subr.mxu0 0.0
      %467 = vmatpush2.msra.mxu0 0.0
      %468 = vmatprep.subr.mxu0 0.0
      %469 = vmatpush2.msra.mxu0 0.0
      %470 = vmatprep.subr.mxu0 0.0
      %471 = vmatpush2.msra.mxu0 0.0
      %472 = vmatprep.subr.mxu0 0.0
      %473 = vmatpush2.msra.mxu0 0.0
      %474 = vmatprep.subr.mxu0 0.0
      %475 = vmatpush2.msra.mxu0 0.0
      %476 = vmatprep.subr.mxu0 0.0
      %477 = vmatpush2.msra.mxu0 0.0
      %478 = vmatprep.subr.mxu0 0.0
      %479 = vmatpush2.msra.mxu0 0.0
      %480 = vmatprep.subr.mxu0 0.0
      %481 = vmatpush2.msra.mxu0 0.0
      %482 = vmatprep.subr.mxu0 0.0
      %483 = vmatpush2.msra.mxu0 0.0
      %484 = vmatprep.mubr.f32.mxu0 0.0
      %485 = vmatmul.mubr.f32.gmra.mxu0 %v335
      %v486 = vpop.f32.mrf.mxu0
      %v487 = vadd.f32 0.0, %v486
      %v488 = vpop.f32.mrf.mxu0
      %489 = vdwg.mxu0
      %v490 = vmul.f32 %v487, 0.00390625
      %v491 = vadd.f32 %v490, 1e-05
      %v492 = vrsqrt.pop %v491
      %494 = vset.pattern.permute.xlu0 0
      %495 = vperm.xlu0 %494, %v492
      %v496 = vpop.permute.xlu0 %495
      %v498 = vmul.f32 %v413, %v496
      %v499 = vmul.f32 %v414, %v496
      %v500 = vld [vmem:[%s2] sm:$0xff]
      %502 = vset.pattern.permute.xlu0 0
      %503 = vperm.xlu0 %502, %v500
      %v504 = vpop.permute.xlu0 %503
      %v506 = vmul.f32 %v498, %v504
      %v507 = vmul.f32 %v499, %v504
      %v508 = vld [vmem:[%s3] sm:$0xff]
      %510 = vset.pattern.permute.xlu0 0
      %511 = vperm.xlu0 %510, %v508
      %v512 = vpop.permute.xlu0 %511
      %v514 = vadd.f32 %v506, %v512
      %v515 = vadd.f32 %v507, %v512
      %v516 = vxor.u32 %v514, 2147483648
      %v517 = vxor.u32 %v515, 2147483648
      %v518 = vmul.f32 %v516, 1.442695
      %v519 = vpow.pop %v518
      %v520 = vmul.f32 %v517, 1.442695
      %v521 = vpow.pop %v520
      %v522 = vadd.f32 %v519, 1.0
      %v523 = vadd.f32 %v521, 1.0
      %v524 = vrcp.pop %v522
      %v525 = vmul.f32 1.0, %v524
      %v526 = vrcp.pop %v523
      %v527 = vmul.f32 1.0, %v526
      %v528 = vmul.f32 %v514, %v525
      %v529 = vmul.f32 %v515, %v527
      %v530 = vpack.c.bf16 %v528, %v528
      %v531 = vpack.c.bf16 %v529, %v529
      %533 = vrot.lane.b32.xlu0 %v531, 17
      %v534 = vpop.permute.xlu0 %533
      %536 = vrot.lane.b32.xlu0 %v530, 17
      %v537 = vpop.permute.xlu0 %536
      %vm538 = vcmask 138240
      %v539 = vsel %vm538, %v537, %v534
      %vm541 = vcmask 138240
      %v544 = vsel %vm541, %v534, %v537
      %v546 = vld [vmem:[%s6] sm:$0x3]
      %v549 = vunpack.c.l.s4 1966171168
      %v550 = vunpack.c.0.s8 %v549
      %v551 = vlaneseq
      %v552 = vshrl.u32 %v551, 7
      %v553 = vsub.s32 %v550, %v552
      %v554 = vrot.slane %v546, %v553
      %v555 = vcombine.high %v554, %v554
      %v557 = vunpack.c.l.s4 1966171168
      %v558 = vunpack.c.0.s8 %v557
      %v559 = vlaneseq
      %v560 = vshrl.u32 %v559, 7
      %v561 = vsub.s32 %v558, %v560
      %v562 = vrot.slane %v554, %v561
      %v564 = vunpack.c.l.s4 1966171168
      %v565 = vunpack.c.0.s8 %v564
      %v566 = vlaneseq
      %v567 = vshrl.u32 %v566, 7
      %v568 = vsub.s32 %v565, %v567
      %v569 = vrot.slane %v555, %v568
      %v571 = vpack.i.b16 %v562, %v562
      %v573 = vlaneseq
      %v574 = vshrl.u32 %v573, 7
      %v575 = vsub.s32 0, %v574
      %v576 = vrot.slane %v571, %v575
      %v578 = vpack.i.b16 %v569, %v569
      %v580 = vlaneseq
      %v581 = vshrl.u32 %v580, 7
      %v582 = vsub.s32 0, %v581
      %v583 = vrot.slane %v578, %v582
      %v584 = vmul.bf16 %v544, %v576
      %v585 = vmul.bf16 %v539, %v583
      %v586 = vld [vmem:[%s4] sm:$0xf]
      %v587 = vld [vmem:[%s4 + $0x4] sm:$0xf]
      %588 = vrot.lane.b32.xlu0 %v531, 16
      %v589 = vpop.permute.xlu0 %588
      %590 = vrot.lane.b32.xlu0 %v530, 16
      %v591 = vpop.permute.xlu0 %590
      %vm592 = vcmask 130048
      %v593 = vsel %vm592, %v591, %v589
      %vm595 = vcmask 130048
      %v598 = vsel %vm595, %v589, %v591
      %s600 = scalar_lea.vmem %s6, 2
      %v601 = vld [vmem:[%s600] sm:$0x3]
      %v604 = vunpack.c.l.s4 1966171168
      %v605 = vunpack.c.0.s8 %v604
      %v606 = vlaneseq
      %v607 = vshrl.u32 %v606, 7
      %v608 = vsub.s32 %v605, %v607
      %v609 = vrot.slane %v601, %v608
      %v610 = vcombine.high %v609, %v609
      %v612 = vunpack.c.l.s4 1966171168
      %v613 = vunpack.c.0.s8 %v612
      %v614 = vlaneseq
      %v615 = vshrl.u32 %v614, 7
      %v616 = vsub.s32 %v613, %v615
      %v617 = vrot.slane %v609, %v616
      %v619 = vunpack.c.l.s4 1966171168
      %v620 = vunpack.c.0.s8 %v619
      %v621 = vlaneseq
      %v622 = vshrl.u32 %v621, 7
      %v623 = vsub.s32 %v620, %v622
      %v624 = vrot.slane %v610, %v623
      %v626 = vpack.i.b16 %v617, %v617
      %v628 = vlaneseq
      %v629 = vshrl.u32 %v628, 7
      %v630 = vsub.s32 0, %v629
      %v631 = vrot.slane %v626, %v630
      %v633 = vpack.i.b16 %v624, %v624
      %v635 = vlaneseq
      %v636 = vshrl.u32 %v635, 7
      %v637 = vsub.s32 0, %v636
      %v638 = vrot.slane %v633, %v637
      %v639 = vmul.bf16 %v598, %v631
      %v640 = vmul.bf16 %v593, %v638
      %s641 = scalar_lea.vmem %s4, 8
      %v642 = vld [vmem:[%s641] sm:$0xf]
      %v643 = vld [vmem:[%s641 + $0x4] sm:$0xf]
      %v646 = vunpack.c.l.b16 %v642
      %v647 = vunpack.c.l.b16 %v643
      %v648 = vpack.c.b16 %v647, %v646
      %v650 = vsel %vm333, %v648, 0
      %vm652 = vcmask 1043456
      %v654 = vsel %vm652, %v639, 0
      %v657 = vsel %vm652, %v640, 0
      %659 = vmatprep.subr.bf16.mxu0 0
      %660 = vmatpush1.bf16.msra.mxu0 0
      %661 = vmatprep.subr.bf16.mxu0 0
      %662 = vmatpush1.bf16.msra.mxu0 0
      %663 = vmatprep.subr.bf16.mxu0 0
      %664 = vmatpush1.bf16.msra.mxu0 0
      %665 = vmatprep.subr.bf16.mxu0 0
      %666 = vmatpush1.bf16.msra.mxu0 0
      %667 = vmatprep.subr.bf16.mxu0 0
      %668 = vmatpush1.bf16.msra.mxu0 0
      %669 = vmatprep.subr.bf16.mxu0 0
      %670 = vmatpush1.bf16.msra.mxu0 0
      %671 = vmatprep.subr.bf16.mxu0 0
      %672 = vmatpush1.bf16.msra.mxu0 0
      %673 = vmatprep.subr.bf16.mxu0 %v657
      %674 = vmatpush1.bf16.msra.mxu0 %v654
      %675 = vmatprep.subr.bf16.mxu0 0
      %676 = vmatpush2.bf16.msra.mxu0 0
      %677 = vmatprep.subr.bf16.mxu0 0
      %678 = vmatpush2.bf16.msra.mxu0 0
      %679 = vmatprep.subr.bf16.mxu0 0
      %680 = vmatpush2.bf16.msra.mxu0 0
      %681 = vmatprep.subr.bf16.mxu0 0
      %682 = vmatpush2.bf16.msra.mxu0 0
      %683 = vmatprep.subr.bf16.mxu0 0
      %684 = vmatpush2.bf16.msra.mxu0 0
      %685 = vmatprep.subr.bf16.mxu0 0
      %686 = vmatpush2.bf16.msra.mxu0 0
      %687 = vmatprep.subr.bf16.mxu0 0
      %688 = vmatpush2.bf16.msra.mxu0 0
      %689 = vmatprep.subr.bf16.mxu0 0
      %690 = vmatpush2.bf16.msra.mxu0 0
      %691 = vmatprep.mubr.bf16.mxu0 0
      %692 = vmatmul.mubr.bf16.gmra.mxu0 %v650
      %v693 = vpop.f32.mrf.mxu0
      %v694 = vadd.f32 0.0, %v693
      %v695 = vpop.f32.mrf.mxu0
      %v696 = vadd.f32 0.0, %v695
      %v697 = vpop.f32.mrf.mxu0
      %v698 = vadd.f32 0.0, %v697
      %v699 = vpop.f32.mrf.mxu0
      %v700 = vadd.f32 0.0, %v699
      %701 = vdwg.mxu0
      %v704 = vunpack.c.l.b16 %v586
      %v705 = vunpack.c.l.b16 %v587
      %v706 = vpack.c.b16 %v705, %v704
      %v708 = vsel %vm333, %v706, 0
      %v711 = vsel %vm652, %v584, 0
      %v714 = vsel %vm652, %v585, 0
      %716 = vmatprep.subr.bf16.mxu0 0
      %717 = vmatpush1.bf16.msra.mxu0 0
      %718 = vmatprep.subr.bf16.mxu0 0
      %719 = vmatpush1.bf16.msra.mxu0 0
      %720 = vmatprep.subr.bf16.mxu0 0
      %721 = vmatpush1.bf16.msra.mxu0 0
      %722 = vmatprep.subr.bf16.mxu0 0
      %723 = vmatpush1.bf16.msra.mxu0 0
      %724 = vmatprep.subr.bf16.mxu0 0
      %725 = vmatpush1.bf16.msra.mxu0 0
      %726 = vmatprep.subr.bf16.mxu0 0
      %727 = vmatpush1.bf16.msra.mxu0 0
      %728 = vmatprep.subr.bf16.mxu0 0
      %729 = vmatpush1.bf16.msra.mxu0 0
      %730 = vmatprep.subr.bf16.mxu0 %v714
      %731 = vmatpush1.bf16.msra.mxu0 %v711
      %732 = vmatprep.subr.bf16.mxu0 0
      %733 = vmatpush2.bf16.msra.mxu0 0
      %734 = vmatprep.subr.bf16.mxu0 0
      %735 = vmatpush2.bf16.msra.mxu0 0
      %736 = vmatprep.subr.bf16.mxu0 0
      %737 = vmatpush2.bf16.msra.mxu0 0
      %738 = vmatprep.subr.bf16.mxu0 0
      %739 = vmatpush2.bf16.msra.mxu0 0
      %740 = vmatprep.subr.bf16.mxu0 0
      %741 = vmatpush2.bf16.msra.mxu0 0
      %742 = vmatprep.subr.bf16.mxu0 0
      %743 = vmatpush2.bf16.msra.mxu0 0
      %744 = vmatprep.subr.bf16.mxu0 0
      %745 = vmatpush2.bf16.msra.mxu0 0
      %746 = vmatprep.subr.bf16.mxu0 0
      %747 = vmatpush2.bf16.msra.mxu0 0
      %748 = vmatprep.mubr.bf16.mxu0 0
      %749 = vmatmul.mubr.bf16.gmra.mxu0 %v708
      %v750 = vpop.f32.mrf.mxu0
      %v751 = vadd.f32 %v694, %v750
      %v752 = vpop.f32.mrf.mxu0
      %v753 = vadd.f32 %v696, %v752
      %v754 = vpop.f32.mrf.mxu0
      %v755 = vadd.f32 %v698, %v754
      %v756 = vpop.f32.mrf.mxu0
      %v757 = vadd.f32 %v700, %v756
      %758 = vdwg.mxu0
      %759 = vrot.lane.b32.xlu0 %v531, 15
      %v760 = vpop.permute.xlu0 %759
      %761 = vrot.lane.b32.xlu0 %v530, 15
      %v762 = vpop.permute.xlu0 %761
      %vm763 = vcmask 121856
      %v764 = vsel %vm763, %v762, %v760
      %vm766 = vcmask 121856
      %v769 = vsel %vm766, %v760, %v762
      %s771 = scalar_lea.vmem %s6, 4
      %v772 = vld [vmem:[%s771] sm:$0x3]
      %v775 = vunpack.c.l.s4 1966171168
      %v776 = vunpack.c.0.s8 %v775
      %v777 = vlaneseq
      %v778 = vshrl.u32 %v777, 7
      %v779 = vsub.s32 %v776, %v778
      %v780 = vrot.slane %v772, %v779
      %v781 = vcombine.high %v780, %v780
      %v783 = vunpack.c.l.s4 1966171168
      %v784 = vunpack.c.0.s8 %v783
      %v785 = vlaneseq
      %v786 = vshrl.u32 %v785, 7
      %v787 = vsub.s32 %v784, %v786
      %v788 = vrot.slane %v780, %v787
      %v790 = vunpack.c.l.s4 1966171168
      %v791 = vunpack.c.0.s8 %v790
      %v792 = vlaneseq
      %v793 = vshrl.u32 %v792, 7
      %v794 = vsub.s32 %v791, %v793
      %v795 = vrot.slane %v781, %v794
      %v797 = vpack.i.b16 %v788, %v788
      %v799 = vlaneseq
      %v800 = vshrl.u32 %v799, 7
      %v801 = vsub.s32 0, %v800
      %v802 = vrot.slane %v797, %v801
      %v804 = vpack.i.b16 %v795, %v795
      %v806 = vlaneseq
      %v807 = vshrl.u32 %v806, 7
      %v808 = vsub.s32 0, %v807
      %v809 = vrot.slane %v804, %v808
      %v810 = vmul.bf16 %v769, %v802
      %v811 = vmul.bf16 %v764, %v809
      %s812 = scalar_lea.vmem %s4, 16
      %v813 = vld [vmem:[%s812] sm:$0xf]
      %v814 = vld [vmem:[%s812 + $0x4] sm:$0xf]
      %v817 = vunpack.c.l.b16 %v813
      %v818 = vunpack.c.l.b16 %v814
      %v819 = vpack.c.b16 %v818, %v817
      %v821 = vsel %vm333, %v819, 0
      %v824 = vsel %vm652, %v810, 0
      %v827 = vsel %vm652, %v811, 0
      %829 = vmatprep.subr.bf16.mxu0 0
      %830 = vmatpush1.bf16.msra.mxu0 0
      %831 = vmatprep.subr.bf16.mxu0 0
      %832 = vmatpush1.bf16.msra.mxu0 0
      %833 = vmatprep.subr.bf16.mxu0 0
      %834 = vmatpush1.bf16.msra.mxu0 0
      %835 = vmatprep.subr.bf16.mxu0 0
      %836 = vmatpush1.bf16.msra.mxu0 0
      %837 = vmatprep.subr.bf16.mxu0 0
      %838 = vmatpush1.bf16.msra.mxu0 0
      %839 = vmatprep.subr.bf16.mxu0 0
      %840 = vmatpush1.bf16.msra.mxu0 0
      %841 = vmatprep.subr.bf16.mxu0 0
      %842 = vmatpush1.bf16.msra.mxu0 0
      %843 = vmatprep.subr.bf16.mxu0 %v827
      %844 = vmatpush1.bf16.msra.mxu0 %v824
      %845 = vmatprep.subr.bf16.mxu0 0
      %846 = vmatpush2.bf16.msra.mxu0 0
      %847 = vmatprep.subr.bf16.mxu0 0
      %848 = vmatpush2.bf16.msra.mxu0 0
      %849 = vmatprep.subr.bf16.mxu0 0
      %850 = vmatpush2.bf16.msra.mxu0 0
      %851 = vmatprep.subr.bf16.mxu0 0
      %852 = vmatpush2.bf16.msra.mxu0 0
      %853 = vmatprep.subr.bf16.mxu0 0
      %854 = vmatpush2.bf16.msra.mxu0 0
      %855 = vmatprep.subr.bf16.mxu0 0
      %856 = vmatpush2.bf16.msra.mxu0 0
      %857 = vmatprep.subr.bf16.mxu0 0
      %858 = vmatpush2.bf16.msra.mxu0 0
      %859 = vmatprep.subr.bf16.mxu0 0
      %860 = vmatpush2.bf16.msra.mxu0 0
      %861 = vmatprep.mubr.bf16.mxu0 0
      %862 = vmatmul.mubr.bf16.gmra.mxu0 %v821
      %v863 = vpop.f32.mrf.mxu0
      %v864 = vadd.f32 0.0, %v863
      %v865 = vpop.f32.mrf.mxu0
      %v866 = vadd.f32 0.0, %v865
      %v867 = vpop.f32.mrf.mxu0
      %v868 = vadd.f32 0.0, %v867
      %v869 = vpop.f32.mrf.mxu0
      %v870 = vadd.f32 0.0, %v869
      %871 = vdwg.mxu0
      %v872 = vadd.f32 %v751, %v864
      %v873 = vadd.f32 %v753, %v866
      %v874 = vadd.f32 %v755, %v868
      %v875 = vadd.f32 %v757, %v870
      %876 = vrot.lane.b32.xlu0 %v531, 1
      %v877 = vpop.permute.xlu0 %876
      %878 = vrot.lane.b32.xlu0 %v530, 1
      %v879 = vpop.permute.xlu0 %878
      %vm880 = vcmask 7168
      %v881 = vsel %vm880, %v879, %v877
      %vm883 = vcmask 7168
      %v886 = vsel %vm883, %v877, %v879
      %s888 = scalar_lea.vmem %s6, 6
      %v889 = vld [vmem:[%s888] sm:$0x3]
      %v892 = vunpack.c.l.s4 1966171168
      %v893 = vunpack.c.0.s8 %v892
      %v894 = vlaneseq
      %v895 = vshrl.u32 %v894, 7
      %v896 = vsub.s32 %v893, %v895
      %v897 = vrot.slane %v889, %v896
      %v898 = vcombine.high %v897, %v897
      %v900 = vunpack.c.l.s4 1966171168
      %v901 = vunpack.c.0.s8 %v900
      %v902 = vlaneseq
      %v903 = vshrl.u32 %v902, 7
      %v904 = vsub.s32 %v901, %v903
      %v905 = vrot.slane %v897, %v904
      %v907 = vunpack.c.l.s4 1966171168
      %v908 = vunpack.c.0.s8 %v907
      %v909 = vlaneseq
      %v910 = vshrl.u32 %v909, 7
      %v911 = vsub.s32 %v908, %v910
      %v912 = vrot.slane %v898, %v911
      %v914 = vpack.i.b16 %v905, %v905
      %v916 = vlaneseq
      %v917 = vshrl.u32 %v916, 7
      %v918 = vsub.s32 0, %v917
      %v919 = vrot.slane %v914, %v918
      %v921 = vpack.i.b16 %v912, %v912
      %v923 = vlaneseq
      %v924 = vshrl.u32 %v923, 7
      %v925 = vsub.s32 0, %v924
      %v926 = vrot.slane %v921, %v925
      %v927 = vmul.bf16 %v886, %v919
      %v928 = vmul.bf16 %v881, %v926
      %s929 = scalar_lea.vmem %s4, 24
      %v930 = vld [vmem:[%s929] sm:$0xf]
      %v931 = vld [vmem:[%s929 + $0x4] sm:$0xf]
      %v934 = vunpack.c.l.b16 %v930
      %v935 = vunpack.c.l.b16 %v931
      %v936 = vpack.c.b16 %v935, %v934
      %v938 = vsel %vm333, %v936, 0
      %v941 = vsel %vm652, %v927, 0
      %v944 = vsel %vm652, %v928, 0
      %946 = vmatprep.subr.bf16.mxu0 0
      %947 = vmatpush1.bf16.msra.mxu0 0
      %948 = vmatprep.subr.bf16.mxu0 0
      %949 = vmatpush1.bf16.msra.mxu0 0
      %950 = vmatprep.subr.bf16.mxu0 0
      %951 = vmatpush1.bf16.msra.mxu0 0
      %952 = vmatprep.subr.bf16.mxu0 0
      %953 = vmatpush1.bf16.msra.mxu0 0
      %954 = vmatprep.subr.bf16.mxu0 0
      %955 = vmatpush1.bf16.msra.mxu0 0
      %956 = vmatprep.subr.bf16.mxu0 0
      %957 = vmatpush1.bf16.msra.mxu0 0
      %958 = vmatprep.subr.bf16.mxu0 0
      %959 = vmatpush1.bf16.msra.mxu0 0
      %960 = vmatprep.subr.bf16.mxu0 %v944
      %961 = vmatpush1.bf16.msra.mxu0 %v941
      %962 = vmatprep.subr.bf16.mxu0 0
      %963 = vmatpush2.bf16.msra.mxu0 0
      %964 = vmatprep.subr.bf16.mxu0 0
      %965 = vmatpush2.bf16.msra.mxu0 0
      %966 = vmatprep.subr.bf16.mxu0 0
      %967 = vmatpush2.bf16.msra.mxu0 0
      %968 = vmatprep.subr.bf16.mxu0 0
      %969 = vmatpush2.bf16.msra.mxu0 0
      %970 = vmatprep.subr.bf16.mxu0 0
      %971 = vmatpush2.bf16.msra.mxu0 0
      %972 = vmatprep.subr.bf16.mxu0 0
      %973 = vmatpush2.bf16.msra.mxu0 0
      %974 = vmatprep.subr.bf16.mxu0 0
      %975 = vmatpush2.bf16.msra.mxu0 0
      %976 = vmatprep.subr.bf16.mxu0 0
      %977 = vmatpush2.bf16.msra.mxu0 0
      %978 = vmatprep.mubr.bf16.mxu0 0
      %979 = vmatmul.mubr.bf16.gmra.mxu0 %v938
      %v980 = vpop.f32.mrf.mxu0
      %v981 = vadd.f32 0.0, %v980
      %v982 = vpop.f32.mrf.mxu0
      %v983 = vadd.f32 0.0, %v982
      %v984 = vpop.f32.mrf.mxu0
      %v985 = vadd.f32 0.0, %v984
      %v986 = vpop.f32.mrf.mxu0
      %v987 = vadd.f32 0.0, %v986
      %988 = vdwg.mxu0
      %v989 = vadd.f32 %v872, %v981
      %v990 = vadd.f32 %v873, %v983
      %v991 = vadd.f32 %v874, %v985
      %v992 = vadd.f32 %v875, %v987
      %s993 = scalar_lea.vmem %s4, 32
      %v994 = vld [vmem:[%s993] sm:$0xf]
      %v995 = vld [vmem:[%s993 + $0x4] sm:$0xf]
      %v998 = vunpack.c.l.b16 %v994
      %v999 = vunpack.c.l.b16 %v995
      %v1000 = vpack.c.b16 %v999, %v998
      %v1002 = vsel %vm333, %v1000, 0
      %v1005 = vsel %vm652, %v530, 0
      %v1008 = vsel %vm652, %v531, 0
      %1010 = vmatprep.subr.bf16.mxu0 0
      %1011 = vmatpush1.bf16.msra.mxu0 0
      %1012 = vmatprep.subr.bf16.mxu0 0
      %1013 = vmatpush1.bf16.msra.mxu0 0
      %1014 = vmatprep.subr.bf16.mxu0 0
      %1015 = vmatpush1.bf16.msra.mxu0 0
      %1016 = vmatprep.subr.bf16.mxu0 0
      %1017 = vmatpush1.bf16.msra.mxu0 0
      %1018 = vmatprep.subr.bf16.mxu0 0
      %1019 = vmatpush1.bf16.msra.mxu0 0
      %1020 = vmatprep.subr.bf16.mxu0 0
      %1021 = vmatpush1.bf16.msra.mxu0 0
      %1022 = vmatprep.subr.bf16.mxu0 0
      %1023 = vmatpush1.bf16.msra.mxu0 0
      %1024 = vmatprep.subr.bf16.mxu0 %v1008
      %1025 = vmatpush1.bf16.msra.mxu0 %v1005
      %1026 = vmatprep.subr.bf16.mxu0 0
      %1027 = vmatpush2.bf16.msra.mxu0 0
      %1028 = vmatprep.subr.bf16.mxu0 0
      %1029 = vmatpush2.bf16.msra.mxu0 0
      %1030 = vmatprep.subr.bf16.mxu0 0
      %1031 = vmatpush2.bf16.msra.mxu0 0
      %1032 = vmatprep.subr.bf16.mxu0 0
      %1033 = vmatpush2.bf16.msra.mxu0 0
      %1034 = vmatprep.subr.bf16.mxu0 0
      %1035 = vmatpush2.bf16.msra.mxu0 0
      %1036 = vmatprep.subr.bf16.mxu0 0
      %1037 = vmatpush2.bf16.msra.mxu0 0
      %1038 = vmatprep.subr.bf16.mxu0 0
      %1039 = vmatpush2.bf16.msra.mxu0 0
      %1040 = vmatprep.subr.bf16.mxu0 0
      %1041 = vmatpush2.bf16.msra.mxu0 0
      %1042 = vmatprep.mubr.bf16.mxu0 0
      %1043 = vmatmul.mubr.bf16.gmra.mxu0 %v1002
      %v1044 = vpop.f32.mrf.mxu0
      %v1045 = vadd.f32 0.0, %v1044
      %v1046 = vpop.f32.mrf.mxu0
      %v1047 = vadd.f32 0.0, %v1046
      %v1048 = vpop.f32.mrf.mxu0
      %v1049 = vadd.f32 0.0, %v1048
      %v1050 = vpop.f32.mrf.mxu0
      %v1051 = vadd.f32 0.0, %v1050
      %1052 = vdwg.mxu0
      %v1053 = vadd.f32 %v989, %v1045
      %v1054 = vadd.f32 %v990, %v1047
      %v1055 = vadd.f32 %v991, %v1049
      %v1056 = vadd.f32 %v992, %v1051
      %1057 = vrot.lane.b32.xlu0 %v530, 127
      %v1058 = vpop.permute.xlu0 %1057
      %1059 = vrot.lane.b32.xlu0 %v531, 127
      %v1060 = vpop.permute.xlu0 %1059
      %vm1061 = vcmask 1039360
      %v1062 = vsel %vm1061, %v1058, %v1060
      %vm1064 = vcmask 1039360
      %v1067 = vsel %vm1064, %v1060, %v1058
      %s1069 = scalar_lea.vmem %s6, 10
      %v1070 = vld [vmem:[%s1069] sm:$0x3]
      %v1073 = vunpack.c.l.s4 1966171168
      %v1074 = vunpack.c.0.s8 %v1073
      %v1075 = vlaneseq
      %v1076 = vshrl.u32 %v1075, 7
      %v1077 = vsub.s32 %v1074, %v1076
      %v1078 = vrot.slane %v1070, %v1077
      %v1079 = vcombine.high %v1078, %v1078
      %v1081 = vunpack.c.l.s4 1966171168
      %v1082 = vunpack.c.0.s8 %v1081
      %v1083 = vlaneseq
      %v1084 = vshrl.u32 %v1083, 7
      %v1085 = vsub.s32 %v1082, %v1084
      %v1086 = vrot.slane %v1078, %v1085
      %v1088 = vunpack.c.l.s4 1966171168
      %v1089 = vunpack.c.0.s8 %v1088
      %v1090 = vlaneseq
      %v1091 = vshrl.u32 %v1090, 7
      %v1092 = vsub.s32 %v1089, %v1091
      %v1093 = vrot.slane %v1079, %v1092
      %v1095 = vpack.i.b16 %v1086, %v1086
      %v1097 = vlaneseq
      %v1098 = vshrl.u32 %v1097, 7
      %v1099 = vsub.s32 0, %v1098
      %v1100 = vrot.slane %v1095, %v1099
      %v1102 = vpack.i.b16 %v1093, %v1093
      %v1104 = vlaneseq
      %v1105 = vshrl.u32 %v1104, 7
      %v1106 = vsub.s32 0, %v1105
      %v1107 = vrot.slane %v1102, %v1106
      %v1108 = vmul.bf16 %v1062, %v1100
      %v1109 = vmul.bf16 %v1067, %v1107
      %s1110 = scalar_lea.vmem %s4, 40
      %v1111 = vld [vmem:[%s1110] sm:$0xf]
      %v1112 = vld [vmem:[%s1110 + $0x4] sm:$0xf]
      %v1115 = vunpack.c.l.b16 %v1111
      %v1116 = vunpack.c.l.b16 %v1112
      %v1117 = vpack.c.b16 %v1116, %v1115
      %v1119 = vsel %vm333, %v1117, 0
      %v1122 = vsel %vm652, %v1108, 0
      %v1125 = vsel %vm652, %v1109, 0
      %1127 = vmatprep.subr.bf16.mxu0 0
      %1128 = vmatpush1.bf16.msra.mxu0 0
      %1129 = vmatprep.subr.bf16.mxu0 0
      %1130 = vmatpush1.bf16.msra.mxu0 0
      %1131 = vmatprep.subr.bf16.mxu0 0
      %1132 = vmatpush1.bf16.msra.mxu0 0
      %1133 = vmatprep.subr.bf16.mxu0 0
      %1134 = vmatpush1.bf16.msra.mxu0 0
      %1135 = vmatprep.subr.bf16.mxu0 0
      %1136 = vmatpush1.bf16.msra.mxu0 0
      %1137 = vmatprep.subr.bf16.mxu0 0
      %1138 = vmatpush1.bf16.msra.mxu0 0
      %1139 = vmatprep.subr.bf16.mxu0 0
      %1140 = vmatpush1.bf16.msra.mxu0 0
      %1141 = vmatprep.subr.bf16.mxu0 %v1125
      %1142 = vmatpush1.bf16.msra.mxu0 %v1122
      %1143 = vmatprep.subr.bf16.mxu0 0
      %1144 = vmatpush2.bf16.msra.mxu0 0
      %1145 = vmatprep.subr.bf16.mxu0 0
      %1146 = vmatpush2.bf16.msra.mxu0 0
      %1147 = vmatprep.subr.bf16.mxu0 0
      %1148 = vmatpush2.bf16.msra.mxu0 0
      %1149 = vmatprep.subr.bf16.mxu0 0
      %1150 = vmatpush2.bf16.msra.mxu0 0
      %1151 = vmatprep.subr.bf16.mxu0 0
      %1152 = vmatpush2.bf16.msra.mxu0 0
      %1153 = vmatprep.subr.bf16.mxu0 0
      %1154 = vmatpush2.bf16.msra.mxu0 0
      %1155 = vmatprep.subr.bf16.mxu0 0
      %1156 = vmatpush2.bf16.msra.mxu0 0
      %1157 = vmatprep.subr.bf16.mxu0 0
      %1158 = vmatpush2.bf16.msra.mxu0 0
      %1159 = vmatprep.mubr.bf16.mxu0 0
      %1160 = vmatmul.mubr.bf16.gmra.mxu0 %v1119
      %v1161 = vpop.f32.mrf.mxu0
      %v1162 = vadd.f32 0.0, %v1161
      %v1163 = vpop.f32.mrf.mxu0
      %v1164 = vadd.f32 0.0, %v1163
      %v1165 = vpop.f32.mrf.mxu0
      %v1166 = vadd.f32 0.0, %v1165
      %v1167 = vpop.f32.mrf.mxu0
      %v1168 = vadd.f32 0.0, %v1167
      %1169 = vdwg.mxu0
      %v1170 = vadd.f32 %v1053, %v1162
      %v1171 = vadd.f32 %v1054, %v1164
      %v1172 = vadd.f32 %v1055, %v1166
      %v1173 = vadd.f32 %v1056, %v1168
      %1174 = vrot.lane.b32.xlu0 %v530, 113
      %v1175 = vpop.permute.xlu0 %1174
      %1176 = vrot.lane.b32.xlu0 %v531, 113
      %v1177 = vpop.permute.xlu0 %1176
      %vm1178 = vcmask 924672
      %v1179 = vsel %vm1178, %v1175, %v1177
      %vm1181 = vcmask 924672
      %v1184 = vsel %vm1181, %v1177, %v1175
      %s1186 = scalar_lea.vmem %s6, 12
      %v1187 = vld [vmem:[%s1186] sm:$0x3]
      %v1190 = vunpack.c.l.s4 1966171168
      %v1191 = vunpack.c.0.s8 %v1190
      %v1192 = vlaneseq
      %v1193 = vshrl.u32 %v1192, 7
      %v1194 = vsub.s32 %v1191, %v1193
      %v1195 = vrot.slane %v1187, %v1194
      %v1196 = vcombine.high %v1195, %v1195
      %v1198 = vunpack.c.l.s4 1966171168
      %v1199 = vunpack.c.0.s8 %v1198
      %v1200 = vlaneseq
      %v1201 = vshrl.u32 %v1200, 7
      %v1202 = vsub.s32 %v1199, %v1201
      %v1203 = vrot.slane %v1195, %v1202
      %v1205 = vunpack.c.l.s4 1966171168
      %v1206 = vunpack.c.0.s8 %v1205
      %v1207 = vlaneseq
      %v1208 = vshrl.u32 %v1207, 7
      %v1209 = vsub.s32 %v1206, %v1208
      %v1210 = vrot.slane %v1196, %v1209
      %v1212 = vpack.i.b16 %v1203, %v1203
      %v1214 = vlaneseq
      %v1215 = vshrl.u32 %v1214, 7
      %v1216 = vsub.s32 0, %v1215
      %v1217 = vrot.slane %v1212, %v1216
      %v1219 = vpack.i.b16 %v1210, %v1210
      %v1221 = vlaneseq
      %v1222 = vshrl.u32 %v1221, 7
      %v1223 = vsub.s32 0, %v1222
      %v1224 = vrot.slane %v1219, %v1223
      %v1225 = vmul.bf16 %v1179, %v1217
      %v1226 = vmul.bf16 %v1184, %v1224
      %s1227 = scalar_lea.vmem %s4, 48
      %v1228 = vld [vmem:[%s1227] sm:$0xf]
      %v1229 = vld [vmem:[%s1227 + $0x4] sm:$0xf]
      %v1232 = vunpack.c.l.b16 %v1228
      %v1233 = vunpack.c.l.b16 %v1229
      %v1234 = vpack.c.b16 %v1233, %v1232
      %v1236 = vsel %vm333, %v1234, 0
      %v1239 = vsel %vm652, %v1225, 0
      %v1242 = vsel %vm652, %v1226, 0
      %1244 = vmatprep.subr.bf16.mxu0 0
      %1245 = vmatpush1.bf16.msra.mxu0 0
      %1246 = vmatprep.subr.bf16.mxu0 0
      %1247 = vmatpush1.bf16.msra.mxu0 0
      %1248 = vmatprep.subr.bf16.mxu0 0
      %1249 = vmatpush1.bf16.msra.mxu0 0
      %1250 = vmatprep.subr.bf16.mxu0 0
      %1251 = vmatpush1.bf16.msra.mxu0 0
      %1252 = vmatprep.subr.bf16.mxu0 0
      %1253 = vmatpush1.bf16.msra.mxu0 0
      %1254 = vmatprep.subr.bf16.mxu0 0
      %1255 = vmatpush1.bf16.msra.mxu0 0
      %1256 = vmatprep.subr.bf16.mxu0 0
      %1257 = vmatpush1.bf16.msra.mxu0 0
      %1258 = vmatprep.subr.bf16.mxu0 %v1242
      %1259 = vmatpush1.bf16.msra.mxu0 %v1239
      %1260 = vmatprep.subr.bf16.mxu0 0
      %1261 = vmatpush2.bf16.msra.mxu0 0
      %1262 = vmatprep.subr.bf16.mxu0 0
      %1263 = vmatpush2.bf16.msra.mxu0 0
      %1264 = vmatprep.subr.bf16.mxu0 0
      %1265 = vmatpush2.bf16.msra.mxu0 0
      %1266 = vmatprep.subr.bf16.mxu0 0
      %1267 = vmatpush2.bf16.msra.mxu0 0
      %1268 = vmatprep.subr.bf16.mxu0 0
      %1269 = vmatpush2.bf16.msra.mxu0 0
      %1270 = vmatprep.subr.bf16.mxu0 0
      %1271 = vmatpush2.bf16.msra.mxu0 0
      %1272 = vmatprep.subr.bf16.mxu0 0
      %1273 = vmatpush2.bf16.msra.mxu0 0
      %1274 = vmatprep.subr.bf16.mxu0 0
      %1275 = vmatpush2.bf16.msra.mxu0 0
      %1276 = vmatprep.mubr.bf16.mxu0 0
      %1277 = vmatmul.mubr.bf16.gmra.mxu0 %v1236
      %v1278 = vpop.f32.mrf.mxu0
      %v1279 = vadd.f32 0.0, %v1278
      %v1280 = vpop.f32.mrf.mxu0
      %v1281 = vadd.f32 0.0, %v1280
      %v1282 = vpop.f32.mrf.mxu0
      %v1283 = vadd.f32 0.0, %v1282
      %v1284 = vpop.f32.mrf.mxu0
      %v1285 = vadd.f32 0.0, %v1284
      %1286 = vdwg.mxu0
      %v1287 = vadd.f32 %v1170, %v1279
      %v1288 = vadd.f32 %v1171, %v1281
      %v1289 = vadd.f32 %v1172, %v1283
      %v1290 = vadd.f32 %v1173, %v1285
      %1291 = vrot.lane.b32.xlu0 %v530, 112
      %v1292 = vpop.permute.xlu0 %1291
      %1293 = vrot.lane.b32.xlu0 %v531, 112
      %v1294 = vpop.permute.xlu0 %1293
      %vm1295 = vcmask 916480
      %v1296 = vsel %vm1295, %v1292, %v1294
      %vm1298 = vcmask 916480
      %v1301 = vsel %vm1298, %v1294, %v1292
      %s1303 = scalar_lea.vmem %s6, 14
      %v1304 = vld [vmem:[%s1303] sm:$0x3]
      %v1307 = vunpack.c.l.s4 1966171168
      %v1308 = vunpack.c.0.s8 %v1307
      %v1309 = vlaneseq
      %v1310 = vshrl.u32 %v1309, 7
      %v1311 = vsub.s32 %v1308, %v1310
      %v1312 = vrot.slane %v1304, %v1311
      %v1313 = vcombine.high %v1312, %v1312
      %v1315 = vunpack.c.l.s4 1966171168
      %v1316 = vunpack.c.0.s8 %v1315
      %v1317 = vlaneseq
      %v1318 = vshrl.u32 %v1317, 7
      %v1319 = vsub.s32 %v1316, %v1318
      %v1320 = vrot.slane %v1312, %v1319
      %v1322 = vunpack.c.l.s4 1966171168
      %v1323 = vunpack.c.0.s8 %v1322
      %v1324 = vlaneseq
      %v1325 = vshrl.u32 %v1324, 7
      %v1326 = vsub.s32 %v1323, %v1325
      %v1327 = vrot.slane %v1313, %v1326
      %v1329 = vpack.i.b16 %v1320, %v1320
      %v1331 = vlaneseq
      %v1332 = vshrl.u32 %v1331, 7
      %v1333 = vsub.s32 0, %v1332
      %v1334 = vrot.slane %v1329, %v1333
      %v1336 = vpack.i.b16 %v1327, %v1327
      %v1338 = vlaneseq
      %v1339 = vshrl.u32 %v1338, 7
      %v1340 = vsub.s32 0, %v1339
      %v1341 = vrot.slane %v1336, %v1340
      %v1342 = vmul.bf16 %v1296, %v1334
      %v1343 = vmul.bf16 %v1301, %v1341
      %s1344 = scalar_lea.vmem %s4, 56
      %v1345 = vld [vmem:[%s1344] sm:$0xf]
      %v1346 = vld [vmem:[%s1344 + $0x4] sm:$0xf]
      %v1349 = vunpack.c.l.b16 %v1345
      %v1350 = vunpack.c.l.b16 %v1346
      %v1351 = vpack.c.b16 %v1350, %v1349
      %v1353 = vsel %vm333, %v1351, 0
      %v1356 = vsel %vm652, %v1342, 0
      %v1359 = vsel %vm652, %v1343, 0
      %1361 = vmatprep.subr.bf16.mxu0 0
      %1362 = vmatpush1.bf16.msra.mxu0 0
      %1363 = vmatprep.subr.bf16.mxu0 0
      %1364 = vmatpush1.bf16.msra.mxu0 0
      %1365 = vmatprep.subr.bf16.mxu0 0
      %1366 = vmatpush1.bf16.msra.mxu0 0
      %1367 = vmatprep.subr.bf16.mxu0 0
      %1368 = vmatpush1.bf16.msra.mxu0 0
      %1369 = vmatprep.subr.bf16.mxu0 0
      %1370 = vmatpush1.bf16.msra.mxu0 0
      %1371 = vmatprep.subr.bf16.mxu0 0
      %1372 = vmatpush1.bf16.msra.mxu0 0
      %1373 = vmatprep.subr.bf16.mxu0 0
      %1374 = vmatpush1.bf16.msra.mxu0 0
      %1375 = vmatprep.subr.bf16.mxu0 %v1359
      %1376 = vmatpush1.bf16.msra.mxu0 %v1356
      %1377 = vmatprep.subr.bf16.mxu0 0
      %1378 = vmatpush2.bf16.msra.mxu0 0
      %1379 = vmatprep.subr.bf16.mxu0 0
      %1380 = vmatpush2.bf16.msra.mxu0 0
      %1381 = vmatprep.subr.bf16.mxu0 0
      %1382 = vmatpush2.bf16.msra.mxu0 0
      %1383 = vmatprep.subr.bf16.mxu0 0
      %1384 = vmatpush2.bf16.msra.mxu0 0
      %1385 = vmatprep.subr.bf16.mxu0 0
      %1386 = vmatpush2.bf16.msra.mxu0 0
      %1387 = vmatprep.subr.bf16.mxu0 0
      %1388 = vmatpush2.bf16.msra.mxu0 0
      %1389 = vmatprep.subr.bf16.mxu0 0
      %1390 = vmatpush2.bf16.msra.mxu0 0
      %1391 = vmatprep.subr.bf16.mxu0 0
      %1392 = vmatpush2.bf16.msra.mxu0 0
      %1393 = vmatprep.mubr.bf16.mxu0 0
      %1394 = vmatmul.mubr.bf16.gmra.mxu0 %v1353
      %v1395 = vpop.f32.mrf.mxu0
      %v1396 = vadd.f32 0.0, %v1395
      %v1397 = vpop.f32.mrf.mxu0
      %v1398 = vadd.f32 0.0, %v1397
      %v1399 = vpop.f32.mrf.mxu0
      %v1400 = vadd.f32 0.0, %v1399
      %v1401 = vpop.f32.mrf.mxu0
      %v1402 = vadd.f32 0.0, %v1401
      %1403 = vdwg.mxu0
      %v1404 = vadd.f32 %v1287, %v1396
      %v1405 = vadd.f32 %v1288, %v1398
      %v1406 = vadd.f32 %v1289, %v1400
      %v1407 = vadd.f32 %v1290, %v1402
      %1408 = vrot.lane.b32.xlu0 %v530, 111
      %v1409 = vpop.permute.xlu0 %1408
      %1410 = vrot.lane.b32.xlu0 %v531, 111
      %v1411 = vpop.permute.xlu0 %1410
      %vm1412 = vcmask 908288
      %v1413 = vsel %vm1412, %v1409, %v1411
      %vm1415 = vcmask 908288
      %v1418 = vsel %vm1415, %v1411, %v1409
      %s1420 = scalar_lea.vmem %s6, 16
      %v1421 = vld [vmem:[%s1420] sm:$0x3]
      %v1424 = vunpack.c.l.s4 1966171168
      %v1425 = vunpack.c.0.s8 %v1424
      %v1426 = vlaneseq
      %v1427 = vshrl.u32 %v1426, 7
      %v1428 = vsub.s32 %v1425, %v1427
      %v1429 = vrot.slane %v1421, %v1428
      %v1430 = vcombine.high %v1429, %v1429
      %v1432 = vunpack.c.l.s4 1966171168
      %v1433 = vunpack.c.0.s8 %v1432
      %v1434 = vlaneseq
      %v1435 = vshrl.u32 %v1434, 7
      %v1436 = vsub.s32 %v1433, %v1435
      %v1437 = vrot.slane %v1429, %v1436
      %v1439 = vunpack.c.l.s4 1966171168
      %v1440 = vunpack.c.0.s8 %v1439
      %v1441 = vlaneseq
      %v1442 = vshrl.u32 %v1441, 7
      %v1443 = vsub.s32 %v1440, %v1442
      %v1444 = vrot.slane %v1430, %v1443
      %v1446 = vpack.i.b16 %v1437, %v1437
      %v1448 = vlaneseq
      %v1449 = vshrl.u32 %v1448, 7
      %v1450 = vsub.s32 0, %v1449
      %v1451 = vrot.slane %v1446, %v1450
      %v1453 = vpack.i.b16 %v1444, %v1444
      %v1455 = vlaneseq
      %v1456 = vshrl.u32 %v1455, 7
      %v1457 = vsub.s32 0, %v1456
      %v1458 = vrot.slane %v1453, %v1457
      %v1459 = vmul.bf16 %v1413, %v1451
      %v1460 = vmul.bf16 %v1418, %v1458
      %s1461 = scalar_lea.vmem %s4, 64
      %v1462 = vld [vmem:[%s1461] sm:$0xf]
      %v1463 = vld [vmem:[%s1461 + $0x4] sm:$0xf]
      %v1466 = vunpack.c.l.b16 %v1462
      %v1467 = vunpack.c.l.b16 %v1463
      %v1468 = vpack.c.b16 %v1467, %v1466
      %v1470 = vsel %vm333, %v1468, 0
      %v1473 = vsel %vm652, %v1459, 0
      %v1476 = vsel %vm652, %v1460, 0
      %1478 = vmatprep.subr.bf16.mxu0 0
      %1479 = vmatpush1.bf16.msra.mxu0 0
      %1480 = vmatprep.subr.bf16.mxu0 0
      %1481 = vmatpush1.bf16.msra.mxu0 0
      %1482 = vmatprep.subr.bf16.mxu0 0
      %1483 = vmatpush1.bf16.msra.mxu0 0
      %1484 = vmatprep.subr.bf16.mxu0 0
      %1485 = vmatpush1.bf16.msra.mxu0 0
      %1486 = vmatprep.subr.bf16.mxu0 0
      %1487 = vmatpush1.bf16.msra.mxu0 0
      %1488 = vmatprep.subr.bf16.mxu0 0
      %1489 = vmatpush1.bf16.msra.mxu0 0
      %1490 = vmatprep.subr.bf16.mxu0 0
      %1491 = vmatpush1.bf16.msra.mxu0 0
      %1492 = vmatprep.subr.bf16.mxu0 %v1476
      %1493 = vmatpush1.bf16.msra.mxu0 %v1473
      %1494 = vmatprep.subr.bf16.mxu0 0
      %1495 = vmatpush2.bf16.msra.mxu0 0
      %1496 = vmatprep.subr.bf16.mxu0 0
      %1497 = vmatpush2.bf16.msra.mxu0 0
      %1498 = vmatprep.subr.bf16.mxu0 0
      %1499 = vmatpush2.bf16.msra.mxu0 0
      %1500 = vmatprep.subr.bf16.mxu0 0
      %1501 = vmatpush2.bf16.msra.mxu0 0
      %1502 = vmatprep.subr.bf16.mxu0 0
      %1503 = vmatpush2.bf16.msra.mxu0 0
      %1504 = vmatprep.subr.bf16.mxu0 0
      %1505 = vmatpush2.bf16.msra.mxu0 0
      %1506 = vmatprep.subr.bf16.mxu0 0
      %1507 = vmatpush2.bf16.msra.mxu0 0
      %1508 = vmatprep.subr.bf16.mxu0 0
      %1509 = vmatpush2.bf16.msra.mxu0 0
      %1510 = vmatprep.mubr.bf16.mxu0 0
      %1511 = vmatmul.mubr.bf16.gmra.mxu0 %v1470
      %v1512 = vpop.f32.mrf.mxu0
      %v1513 = vadd.f32 0.0, %v1512
      %v1514 = vpop.f32.mrf.mxu0
      %v1515 = vadd.f32 0.0, %v1514
      %v1516 = vpop.f32.mrf.mxu0
      %v1517 = vadd.f32 0.0, %v1516
      %v1518 = vpop.f32.mrf.mxu0
      %v1519 = vadd.f32 0.0, %v1518
      %1520 = vdwg.mxu0
      %v1521 = vadd.f32 %v1404, %v1513
      %v1522 = vadd.f32 %v1405, %v1515
      %v1523 = vadd.f32 %v1406, %v1517
      %v1524 = vadd.f32 %v1407, %v1519
      %v1525 = vld [vmem:[%s5] sm:$0xff]
      %v1526 = vld [vmem:[%s5 + $0x8] sm:$0xff]
      %1528 = vset.pattern.permute.xlu0 0
      %1529 = vperm.xlu0 %1528, %v1525
      %v1530 = vpop.permute.xlu0 %1529
      %1533 = vset.pattern.permute.xlu0 0
      %1534 = vperm.xlu0 %1533, %v1526
      %v1535 = vpop.permute.xlu0 %1534
      %v1537 = vadd.f32 %v1521, %v1530
      %v1538 = vadd.f32 %v1522, %v1530
      %v1539 = vadd.f32 %v1523, %v1535
      %v1540 = vadd.f32 %v1524, %v1535
      %v1541 = vld [vmem:[%s320] sm:$0xff]
      %v1542 = vld [vmem:[%s320 + $0x8] sm:$0xff]
      %1544 = vset.pattern.permute.xlu0 0
      %1545 = vperm.xlu0 %1544, %v1541
      %v1546 = vpop.permute.xlu0 %1545
      %1549 = vset.pattern.permute.xlu0 0
      %1550 = vperm.xlu0 %1549, %v1542
      %v1551 = vpop.permute.xlu0 %1550
      %v1553 = vadd.f32 %v1537, %v1546
      %v1554 = vadd.f32 %v1538, %v1546
      %v1555 = vadd.f32 %v1539, %v1551
      %v1556 = vadd.f32 %v1540, %v1551
      %v1557 = vpack.c.bf16 %v1555, %v1553
      %v1558 = vpack.c.bf16 %v1556, %v1554
      %v1561 = vunpack.c.l.b16 %v1557
      %v1562 = vunpack.c.l.b16 %v1558
      %v1563 = vunpack.c.h.b16 %v1557
      %v1564 = vunpack.c.h.b16 %v1558
      %v1565 = vpack.c.b16 %v1562, %v1561
      %v1566 = vpack.c.b16 %v1564, %v1563
      %1569 = vst [vmem:[%s325] sm:$0xff] %v1565
      %1570 = vst [vmem:[%s325 + $0x8] sm:$0xff] %v1566
      %p1571 = scmp.lt.s32.totalorder %s19, 1
      %s1572 = scalar_select %p1571, %s19, 1
      %s1573 = smul.addr %s1572, 4
      %s1574 = smul.addr %s1573, 4
      %s1575 = scalar_lea.vmem %s8, %s1574
      // Predicated region
      $region53: #{down_block_forward.4} parent=51 // pred_check
        %p1576 = pneg %p215
      $region54: #{down_block_forward.4} parent=51 // pred_check_branch
        %1578 = sbr.rel (%p1576) target = $region56
      $region55: #{down_block_forward.4} parent=51 // pred_region
        _
      $region56: #{down_block_forward.4} parent=51 // pred_fallthru
        _
    $region52: #{down_block_forward.4} parent=5 // pred_fallthru
      _
    %p1579 = scmp.le.s32.totalorder 2, %s14
    // Predicated region
    $region57: #{down_block_forward.4} parent=5 // pred_check
      %p1580 = pneg %p1579
    $region58: #{down_block_forward.4} parent=5 // pred_check_branch
      %1582 = sbr.rel (%p1580) target = $region60
    $region59: #{down_block_forward.4} parent=5 // pred_region
      %s1583 = ssub.s32 %s14, 2
      // Predicated region
      $region61: #{down_block_forward.4} parent=59 // pred_check
        %p1584 = pneg %p221
      $region62: #{down_block_forward.4} parent=59 // pred_check_branch
        %1586 = sbr.rel (%p1584) target = $region64
      $region63: #{down_block_forward.4} parent=59 // pred_region
        %p1587 = scmp.lt.s32.totalorder %s20, 1
        %s1588 = scalar_select %p1587, %s20, 1
        %s1589 = smul.addr %s1588, 4
        %s1590 = smul.addr %s1589, 4
        %s1591 = scalar_lea.vmem %s8, %s1590
      $region64: #{down_block_forward.4} parent=59 // pred_fallthru
        _
    $region60: #{down_block_forward.4} parent=5 // pred_fallthru
      _
  $region6: #{down_block_forward.4} parent=0 // loop_footer
    %s18 = sadd.s32 1, %s14
  $region7: #{down_block_forward.4} parent=0 // loop_footer_branch
    %13 = sbr.rel target = $region3
  $region8: #{down_block_forward.4} parent=0 // loop_exit
    _

// kernel: down_block_forward.5
$region0: #{down_block_forward.5}
  #allocation0 [shape = 'u32[]', space=smem, size = 0x4, offset = 0x4, fixed_abs, tag = 'smem constant byte address 0x4 - core index']
  #allocation1 [shape = 'u32[144,128]{1,0:T(1,128)}', space=vmem, size = 0x12000, scoped, tag = 'internal scratch']
  %s0 = inlined_call_operand.vmem [shape: bf16[2,16,256], index: 0, kind: input, shape index: {}]
  %s1 = inlined_call_operand.vmem [shape: f32[16,16], index: 1, kind: input, shape index: {}]
  %s2 = inlined_call_operand.vmem [shape: f32[16,1], index: 2, kind: input, shape index: {}]
  %s3 = inlined_call_operand.vmem [shape: f32[16,1], index: 3, kind: input, shape index: {}]
  %s4 = inlined_call_operand.vmem [shape: bf16[9,16,16], index: 4, kind: input, shape index: {}]
  %s5 = inlined_call_operand.vmem [shape: f32[16,1], index: 5, kind: input, shape index: {}]
  %s6 = inlined_call_operand.vmem [shape: bf16[9,1,256], index: 6, kind: input, shape index: {}]
  %s7 = inlined_call_operand.vmem [shape: f32[2,8,256], index: 7, kind: input, shape index: {}]
  %s8 = inlined_call_operand.vmem [shape: bf16[16,8], index: 8, kind: input, shape index: {}]
  %s9 = inlined_call_operand.vmem [shape: bf16[2,16,256], index: 9, kind: output, shape index: {}]
  %s10 = sld [smem:[#allocation0]]
  $region69: #{down_block_forward.5} parent=0
    _
  %s12 = ssub.s32 1, %s10
  %s13 = scalar_select 0, %s12, %s10
  loop: start=0, step=1, limit=4
  $region2: #{down_block_forward.5} parent=0 // loop_pre_header
    _
  $region3: #{down_block_forward.5} parent=0 // loop_header
    %s15 = sphi 0, %s19
    %p16 = scmp.ge.s32.totalorder %s15, 4
    %s25 = sphi 0, %s27
    %s28 = sphi 0, %s25
    %s29 = sphi 0, %s28
    %s45 = sphi 0, %s29
    %s49 = sphi 0, %s49
    %s51 = sphi 0, %s49
    %s52 = sphi 0, %s51
    %s66 = sphi 0, %s52
    %s70 = sphi 0, %s70
    %s72 = sphi 0, %s70
    %s73 = sphi 0, %s72
    %s87 = sphi 0, %s73
    %s91 = sphi 0, %s91
    %s93 = sphi 0, %s91
    %s94 = sphi 0, %s93
    %s108 = sphi 0, %s94
    %s112 = sphi 0, %s112
    %s114 = sphi 0, %s112
    %s115 = sphi 0, %s114
    %s129 = sphi 0, %s115
    %s133 = sphi 0, %s133
    %s135 = sphi 0, %s133
    %s136 = sphi 0, %s135
    %s150 = sphi 0, %s136
    %s154 = sphi 0, %s154
    %s156 = sphi 0, %s154
    %s157 = sphi 0, %s156
    %s171 = sphi 0, %s157
    %s177 = sphi 0, %s179
    %s180 = sphi 0, %s177
    %s181 = sphi 0, %s180
    %s197 = sphi 0, %s181
    %s201 = sphi 0, %s201
    %s203 = sphi 0, %s201
    %s204 = sphi 0, %s203
    %s218 = sphi 0, %s204
    %s224 = sphi 0, %s226
    %s227 = sphi 0, %s224
    %s228 = sphi 0, %s227
    %s244 = sphi 0, %s228
  $region4: #{down_block_forward.5} parent=0 // loop_header_branch
    %18 = sbr.rel (%p16) target = $region8
  $region5: #{down_block_forward.5} parent=0 // loop_body
    %s20 = ssub.s32 %s15, 1
    %s21 = ssub.s32 %s15, 2
    %s22 = sadd.s32 %s15, 1
    %s23 = ssub.s32 %s15, %s22
    %p24 = scmp.eq.s32.totalorder %s23, 0
    %s26 = sadd.s32 %s25, 1
    %s27 = scalar_select %p24, %s25, %s26
    %p30 = pneg %p24
    %p31 = scmp.eq.s32.totalorder %s15, 1
    %p32 = por %p30, %p31
    %p33 = scmp.ne.s32.totalorder %s25, %s28
    %p34 = scmp.eq.s32.totalorder %s15, 0
    %p35 = por %p33, %p34
    %p36 = scmp.ne.s32.totalorder %s25, %s28
    %p37 = scmp.eq.s32.totalorder %s20, 1
    %p38 = por %p36, %p37
    %p39 = scmp.ne.s32.totalorder %s28, %s29
    %p40 = scmp.eq.s32.totalorder %s20, 0
    %p41 = por %p39, %p40
    %p42 = scmp.ne.s32.totalorder %s28, %s29
    %p43 = scmp.eq.s32.totalorder %s21, 1
    %p44 = por %p42, %p43
    %p46 = scmp.ne.s32.totalorder %s29, %s45
    %p47 = scmp.eq.s32.totalorder %s21, 0
    %p48 = por %p46, %p47
    %s50 = sadd.s32 %s49, 1
    %p53 = scmp.eq.s32.totalorder %s15, 1
    %p54 = scmp.ne.s32.totalorder %s49, %s51
    %p55 = scmp.eq.s32.totalorder %s15, 0
    %p56 = por %p54, %p55
    %p57 = scmp.ne.s32.totalorder %s49, %s51
    %p58 = scmp.eq.s32.totalorder %s20, 1
    %p59 = por %p57, %p58
    %p60 = scmp.ne.s32.totalorder %s51, %s52
    %p61 = scmp.eq.s32.totalorder %s20, 0
    %p62 = por %p60, %p61
    %p63 = scmp.ne.s32.totalorder %s51, %s52
    %p64 = scmp.eq.s32.totalorder %s21, 1
    %p65 = por %p63, %p64
    %p67 = scmp.ne.s32.totalorder %s52, %s66
    %p68 = scmp.eq.s32.totalorder %s21, 0
    %p69 = por %p67, %p68
    %s71 = sadd.s32 %s70, 1
    %p74 = scmp.eq.s32.totalorder %s15, 1
    %p75 = scmp.ne.s32.totalorder %s70, %s72
    %p76 = scmp.eq.s32.totalorder %s15, 0
    %p77 = por %p75, %p76
    %p78 = scmp.ne.s32.totalorder %s70, %s72
    %p79 = scmp.eq.s32.totalorder %s20, 1
    %p80 = por %p78, %p79
    %p81 = scmp.ne.s32.totalorder %s72, %s73
    %p82 = scmp.eq.s32.totalorder %s20, 0
    %p83 = por %p81, %p82
    %p84 = scmp.ne.s32.totalorder %s72, %s73
    %p85 = scmp.eq.s32.totalorder %s21, 1
    %p86 = por %p84, %p85
    %p88 = scmp.ne.s32.totalorder %s73, %s87
    %p89 = scmp.eq.s32.totalorder %s21, 0
    %p90 = por %p88, %p89
    %s92 = sadd.s32 %s91, 1
    %p95 = scmp.eq.s32.totalorder %s15, 1
    %p96 = scmp.ne.s32.totalorder %s91, %s93
    %p97 = scmp.eq.s32.totalorder %s15, 0
    %p98 = por %p96, %p97
    %p99 = scmp.ne.s32.totalorder %s91, %s93
    %p100 = scmp.eq.s32.totalorder %s20, 1
    %p101 = por %p99, %p100
    %p102 = scmp.ne.s32.totalorder %s93, %s94
    %p103 = scmp.eq.s32.totalorder %s20, 0
    %p104 = por %p102, %p103
    %p105 = scmp.ne.s32.totalorder %s93, %s94
    %p106 = scmp.eq.s32.totalorder %s21, 1
    %p107 = por %p105, %p106
    %p109 = scmp.ne.s32.totalorder %s94, %s108
    %p110 = scmp.eq.s32.totalorder %s21, 0
    %p111 = por %p109, %p110
    %s113 = sadd.s32 %s112, 1
    %p116 = scmp.eq.s32.totalorder %s15, 1
    %p117 = scmp.ne.s32.totalorder %s112, %s114
    %p118 = scmp.eq.s32.totalorder %s15, 0
    %p119 = por %p117, %p118
    %p120 = scmp.ne.s32.totalorder %s112, %s114
    %p121 = scmp.eq.s32.totalorder %s20, 1
    %p122 = por %p120, %p121
    %p123 = scmp.ne.s32.totalorder %s114, %s115
    %p124 = scmp.eq.s32.totalorder %s20, 0
    %p125 = por %p123, %p124
    %p126 = scmp.ne.s32.totalorder %s114, %s115
    %p127 = scmp.eq.s32.totalorder %s21, 1
    %p128 = por %p126, %p127
    %p130 = scmp.ne.s32.totalorder %s115, %s129
    %p131 = scmp.eq.s32.totalorder %s21, 0
    %p132 = por %p130, %p131
    %s134 = sadd.s32 %s133, 1
    %p137 = scmp.eq.s32.totalorder %s15, 1
    %p138 = scmp.ne.s32.totalorder %s133, %s135
    %p139 = scmp.eq.s32.totalorder %s15, 0
    %p140 = por %p138, %p139
    %p141 = scmp.ne.s32.totalorder %s133, %s135
    %p142 = scmp.eq.s32.totalorder %s20, 1
    %p143 = por %p141, %p142
    %p144 = scmp.ne.s32.totalorder %s135, %s136
    %p145 = scmp.eq.s32.totalorder %s20, 0
    %p146 = por %p144, %p145
    %p147 = scmp.ne.s32.totalorder %s135, %s136
    %p148 = scmp.eq.s32.totalorder %s21, 1
    %p149 = por %p147, %p148
    %p151 = scmp.ne.s32.totalorder %s136, %s150
    %p152 = scmp.eq.s32.totalorder %s21, 0
    %p153 = por %p151, %p152
    %s155 = sadd.s32 %s154, 1
    %p158 = scmp.eq.s32.totalorder %s15, 1
    %p159 = scmp.ne.s32.totalorder %s154, %s156
    %p160 = scmp.eq.s32.totalorder %s15, 0
    %p161 = por %p159, %p160
    %p162 = scmp.ne.s32.totalorder %s154, %s156
    %p163 = scmp.eq.s32.totalorder %s20, 1
    %p164 = por %p162, %p163
    %p165 = scmp.ne.s32.totalorder %s156, %s157
    %p166 = scmp.eq.s32.totalorder %s20, 0
    %p167 = por %p165, %p166
    %p168 = scmp.ne.s32.totalorder %s156, %s157
    %p169 = scmp.eq.s32.totalorder %s21, 1
    %p170 = por %p168, %p169
    %p172 = scmp.ne.s32.totalorder %s157, %s171
    %p173 = scmp.eq.s32.totalorder %s21, 0
    %p174 = por %p172, %p173
    %s175 = ssub.s32 %s15, %s22
    %p176 = scmp.eq.s32.totalorder %s175, 0
    %s178 = sadd.s32 %s177, 1
    %s179 = scalar_select %p176, %s177, %s178
    %p182 = pneg %p176
    %p183 = scmp.eq.s32.totalorder %s15, 1
    %p184 = por %p182, %p183
    %p185 = scmp.ne.s32.totalorder %s177, %s180
    %p186 = scmp.eq.s32.totalorder %s15, 0
    %p187 = por %p185, %p186
    %p188 = scmp.ne.s32.totalorder %s177, %s180
    %p189 = scmp.eq.s32.totalorder %s20, 1
    %p190 = por %p188, %p189
    %p191 = scmp.ne.s32.totalorder %s180, %s181
    %p192 = scmp.eq.s32.totalorder %s20, 0
    %p193 = por %p191, %p192
    %p194 = scmp.ne.s32.totalorder %s180, %s181
    %p195 = scmp.eq.s32.totalorder %s21, 1
    %p196 = por %p194, %p195
    %p198 = scmp.ne.s32.totalorder %s181, %s197
    %p199 = scmp.eq.s32.totalorder %s21, 0
    %p200 = por %p198, %p199
    %s202 = sadd.s32 %s201, 1
    %p205 = scmp.eq.s32.totalorder %s15, 1
    %p206 = scmp.ne.s32.totalorder %s201, %s203
    %p207 = scmp.eq.s32.totalorder %s15, 0
    %p208 = por %p206, %p207
    %p209 = scmp.ne.s32.totalorder %s201, %s203
    %p210 = scmp.eq.s32.totalorder %s20, 1
    %p211 = por %p209, %p210
    %p212 = scmp.ne.s32.totalorder %s203, %s204
    %p213 = scmp.eq.s32.totalorder %s20, 0
    %p214 = por %p212, %p213
    %p215 = scmp.ne.s32.totalorder %s203, %s204
    %p216 = scmp.eq.s32.totalorder %s21, 1
    %p217 = por %p215, %p216
    %p219 = scmp.ne.s32.totalorder %s204, %s218
    %p220 = scmp.eq.s32.totalorder %s21, 0
    %p221 = por %p219, %p220
    %s222 = ssub.s32 %s15, %s22
    %p223 = scmp.eq.s32.totalorder %s222, 0
    %s225 = sadd.s32 %s224, 1
    %s226 = scalar_select %p223, %s224, %s225
    %p229 = pneg %p223
    %p230 = scmp.eq.s32.totalorder %s15, 1
    %p231 = por %p229, %p230
    %p232 = scmp.ne.s32.totalorder %s224, %s227
    %p233 = scmp.eq.s32.totalorder %s15, 0
    %p234 = por %p232, %p233
    %p235 = scmp.ne.s32.totalorder %s224, %s227
    %p236 = scmp.eq.s32.totalorder %s20, 1
    %p237 = por %p235, %p236
    %p238 = scmp.ne.s32.totalorder %s227, %s228
    %p239 = scmp.eq.s32.totalorder %s20, 0
    %p240 = por %p238, %p239
    %p241 = scmp.ne.s32.totalorder %s227, %s228
    %p242 = scmp.eq.s32.totalorder %s21, 1
    %p243 = por %p241, %p242
    %p245 = scmp.ne.s32.totalorder %s228, %s244
    %p246 = scmp.eq.s32.totalorder %s21, 0
    %p247 = por %p245, %p246
    %p248 = scmp.le.s32.totalorder 1, %s15
    %p249 = scmp.lt.s32.totalorder %s15, 3
    %p250 = pnand %p248, %p249
    %p251 = pneg %p250
    // Predicated region
    $region9: #{down_block_forward.5} parent=5 // pred_check
      _
    $region10: #{down_block_forward.5} parent=5 // pred_check_branch
      %253 = sbr.rel (%p250) target = $region12
    $region11: #{down_block_forward.5} parent=5 // pred_region
      %s254 = ssub.s32 %s15, 1
      // Predicated region
      $region13: #{down_block_forward.5} parent=11 // pred_check
        %p255 = pneg %p62
      $region14: #{down_block_forward.5} parent=11 // pred_check_branch
        %257 = sbr.rel (%p255) target = $region16
      $region15: #{down_block_forward.5} parent=11 // pred_region
        _
      $region16: #{down_block_forward.5} parent=11 // pred_fallthru
        _
      // Predicated region
      $region17: #{down_block_forward.5} parent=11 // pred_check
        %p258 = pneg %p83
      $region18: #{down_block_forward.5} parent=11 // pred_check_branch
        %260 = sbr.rel (%p258) target = $region20
      $region19: #{down_block_forward.5} parent=11 // pred_region
        _
      $region20: #{down_block_forward.5} parent=11 // pred_fallthru
        _
      // Predicated region
      $region21: #{down_block_forward.5} parent=11 // pred_check
        %p261 = pneg %p104
      $region22: #{down_block_forward.5} parent=11 // pred_check_branch
        %263 = sbr.rel (%p261) target = $region24
      $region23: #{down_block_forward.5} parent=11 // pred_region
        _
      $region24: #{down_block_forward.5} parent=11 // pred_fallthru
        _
      // Predicated region
      $region25: #{down_block_forward.5} parent=11 // pred_check
        %p264 = pneg %p125
      $region26: #{down_block_forward.5} parent=11 // pred_check_branch
        %266 = sbr.rel (%p264) target = $region28
      $region27: #{down_block_forward.5} parent=11 // pred_region
        _
      $region28: #{down_block_forward.5} parent=11 // pred_fallthru
        _
      // Predicated region
      $region29: #{down_block_forward.5} parent=11 // pred_check
        %p267 = pneg %p146
      $region30: #{down_block_forward.5} parent=11 // pred_check_branch
        %269 = sbr.rel (%p267) target = $region32
      $region31: #{down_block_forward.5} parent=11 // pred_region
        _
      $region32: #{down_block_forward.5} parent=11 // pred_fallthru
        _
      // Predicated region
      $region33: #{down_block_forward.5} parent=11 // pred_check
        %p270 = pneg %p167
      $region34: #{down_block_forward.5} parent=11 // pred_check_branch
        %272 = sbr.rel (%p270) target = $region36
      $region35: #{down_block_forward.5} parent=11 // pred_region
        _
      $region36: #{down_block_forward.5} parent=11 // pred_fallthru
        _
      // Predicated region
      $region37: #{down_block_forward.5} parent=11 // pred_check
        %p273 = pneg %p214
      $region38: #{down_block_forward.5} parent=11 // pred_check_branch
        %275 = sbr.rel (%p273) target = $region40
      $region39: #{down_block_forward.5} parent=11 // pred_region
        _
      $region40: #{down_block_forward.5} parent=11 // pred_fallthru
        _
    $region12: #{down_block_forward.5} parent=5 // pred_fallthru
      _
    %p276 = scmp.lt.s32.totalorder %s15, 2
    // Predicated region
    $region41: #{down_block_forward.5} parent=5 // pred_check
      %p277 = pneg %p276
    $region42: #{down_block_forward.5} parent=5 // pred_check_branch
      %279 = sbr.rel (%p277) target = $region44
    $region43: #{down_block_forward.5} parent=5 // pred_region
      // Predicated region
      $region45: #{down_block_forward.5} parent=43 // pred_check
        %p280 = pneg %p35
      $region46: #{down_block_forward.5} parent=43 // pred_check_branch
        %282 = sbr.rel (%p280) target = $region48
      $region47: #{down_block_forward.5} parent=43 // pred_region
        %p283 = scmp.lt.s32.totalorder %s15, 1
        %s284 = scalar_select %p283, %s15, 1
        %s285 = smul.addr %s284, 4
        %s286 = smul.addr %s285, 4
        %s287 = scalar_lea.vmem %s0, %s286
      $region48: #{down_block_forward.5} parent=43 // pred_fallthru
        _
      // Predicated region
      $region49: #{down_block_forward.5} parent=43 // pred_check
        %p288 = pneg %p187
      $region50: #{down_block_forward.5} parent=43 // pred_check_branch
        %290 = sbr.rel (%p288) target = $region52
      $region51: #{down_block_forward.5} parent=43 // pred_region
        %p291 = scmp.lt.s32.totalorder %s15, 1
        %s292 = scalar_select %p291, %s15, 1
        %s293 = smul.addr %s292, 2
        %s294 = smul.addr %s293, 8
        %s295 = scalar_lea.vmem %s7, %s294
      $region52: #{down_block_forward.5} parent=43 // pred_fallthru
        _
    $region44: #{down_block_forward.5} parent=5 // pred_fallthru
      _
    %p296 = scmp.le.s32.totalorder 1, %s15
    %p297 = scmp.lt.s32.totalorder %s15, 3
    %p298 = pnand %p296, %p297
    %p299 = pneg %p298
    // Predicated region
    $region53: #{down_block_forward.5} parent=5 // pred_check
      _
    $region54: #{down_block_forward.5} parent=5 // pred_check_branch
      %301 = sbr.rel (%p298) target = $region56
    $region55: #{down_block_forward.5} parent=5 // pred_region
      %s302 = ssub.s32 %s15, 1
      %p303 = scmp.lt.s32.totalorder %s20, 1
      %s304 = scalar_select %p303, %s20, 1
      %s305 = smul.addr %s304, 4
      %s306 = smul.addr %s305, 4
      %s307 = scalar_lea.vmem %s0, %s306
      %p308 = pneg %p41
      %p309 = pneg %p38
      %p310 = pneg %p62
      %p311 = pneg %p59
      %p312 = pneg %p83
      %p313 = pneg %p80
      %p314 = pneg %p104
      %p315 = pneg %p101
      %p316 = pneg %p125
      %p317 = pneg %p122
      %p318 = pneg %p146
      %p319 = pneg %p143
      %p320 = pneg %p167
      %p321 = pneg %p164
      %p322 = scmp.lt.s32.totalorder %s20, 1
      %s323 = scalar_select %p322, %s20, 1
      %s324 = smul.addr %s323, 2
      %s325 = smul.addr %s324, 8
      %s326 = scalar_lea.vmem %s7, %s325
      %p327 = pneg %p193
      %p328 = pneg %p190
      %p329 = pneg %p214
      %p330 = pneg %p211
      %p331 = pneg %p240
      %p332 = pneg %p237
      %p333 = scmp.lt.s32.totalorder %s20, 1
      %s334 = scalar_select %p333, %s20, 1
      %s335 = smul.addr %s334, 4
      %s336 = smul.addr %s335, 4
      %s337 = scalar_lea.vmem %s9, %s336
      %p338 = scmp.lt.s32.totalorder %s20, 1
      %s339 = scalar_select %p338, %s20, 1
      %s340 = smul.addr %s339, 4
      %s341 = smul.addr %s340, 4
      %s342 = scalar_lea.vmem %s0, %s341
      %p343 = scmp.lt.s32.totalorder %s20, 1
      %s344 = scalar_select %p343, %s20, 1
      %s345 = smul.addr %s344, 2
      %s346 = smul.addr %s345, 8
      %s347 = scalar_lea.vmem %s7, %s346
      %p348 = scmp.lt.s32.totalorder %s20, 1
      %s349 = scalar_select %p348, %s20, 1
      %s350 = smul.addr %s349, 4
      %s351 = smul.addr %s350, 4
      %s352 = scalar_lea.vmem %s9, %s351
      %v354 = vld [vmem:[%s342] sm:$0xff]
      %v355 = vld [vmem:[%s342 + $0x8] sm:$0xff]
      %v356 = vunpack.c.l.bf16 %v354
      %v357 = vunpack.c.h.bf16 %v354
      %v358 = vunpack.c.l.bf16 %v355
      %v359 = vunpack.c.h.bf16 %v355
      %v360 = vadd.f32 %v356, %v357
      %361 = vadd.xlane.f32.xlu0 %v360
      %v362 = vpop.xlane.xlu0 %361
      %v363 = vadd.f32 %v358, %v359
      %364 = vadd.xlane.f32.xlu0 %v363
      %v365 = vpop.xlane.xlu0 %364
      %v366 = vld [vmem:[%s1] sm:$0xff]
      %v367 = vld [vmem:[%s1 + $0x8] sm:$0xff]
      %vm368 = vcmask 130048
      %v370 = vsel %vm368, %v366, 0
      %v373 = vsel %vm368, %v367, 0
      %375 = vmatprep.subr.mxu0 0.0
      %376 = vmatpush1.msra.mxu0 0.0
      %377 = vmatprep.subr.mxu0 0.0
      %378 = vmatpush1.msra.mxu0 0.0
      %379 = vmatprep.subr.mxu0 0.0
      %380 = vmatpush1.msra.mxu0 0.0
      %381 = vmatprep.subr.mxu0 0.0
      %382 = vmatpush1.msra.mxu0 0.0
      %383 = vmatprep.subr.mxu0 0.0
      %384 = vmatpush1.msra.mxu0 0.0
      %385 = vmatprep.subr.mxu0 0.0
      %386 = vmatpush1.msra.mxu0 0.0
      %387 = vmatprep.subr.mxu0 0.0
      %388 = vmatpush1.msra.mxu0 0.0
      %389 = vmatprep.subr.mxu0 0.0
      %390 = vmatpush1.msra.mxu0 0.0
      %391 = vmatprep.subr.mxu0 0.0
      %392 = vmatpush1.msra.mxu0 0.0
      %393 = vmatprep.subr.mxu0 0.0
      %394 = vmatpush1.msra.mxu0 0.0
      %395 = vmatprep.subr.mxu0 0.0
      %396 = vmatpush1.msra.mxu0 0.0
      %397 = vmatprep.subr.mxu0 0.0
      %398 = vmatpush1.msra.mxu0 0.0
      %399 = vmatprep.subr.mxu0 0.0
      %400 = vmatpush1.msra.mxu0 0.0
      %401 = vmatprep.subr.mxu0 0.0
      %402 = vmatpush1.msra.mxu0 0.0
      %403 = vmatprep.subr.mxu0 0.0
      %404 = vmatpush1.msra.mxu0 %v365
      %405 = vmatprep.subr.mxu0 0.0
      %406 = vmatpush1.msra.mxu0 %v362
      %407 = vmatprep.subr.mxu0 0.0
      %408 = vmatpush2.msra.mxu0 0.0
      %409 = vmatprep.subr.mxu0 0.0
      %410 = vmatpush2.msra.mxu0 0.0
      %411 = vmatprep.subr.mxu0 0.0
      %412 = vmatpush2.msra.mxu0 0.0
      %413 = vmatprep.subr.mxu0 0.0
      %414 = vmatpush2.msra.mxu0 0.0
      %415 = vmatprep.subr.mxu0 0.0
      %416 = vmatpush2.msra.mxu0 0.0
      %417 = vmatprep.subr.mxu0 0.0
      %418 = vmatpush2.msra.mxu0 0.0
      %419 = vmatprep.subr.mxu0 0.0
      %420 = vmatpush2.msra.mxu0 0.0
      %421 = vmatprep.subr.mxu0 0.0
      %422 = vmatpush2.msra.mxu0 0.0
      %423 = vmatprep.subr.mxu0 0.0
      %424 = vmatpush2.msra.mxu0 0.0
      %425 = vmatprep.subr.mxu0 0.0
      %426 = vmatpush2.msra.mxu0 0.0
      %427 = vmatprep.subr.mxu0 0.0
      %428 = vmatpush2.msra.mxu0 0.0
      %429 = vmatprep.subr.mxu0 0.0
      %430 = vmatpush2.msra.mxu0 0.0
      %431 = vmatprep.subr.mxu0 0.0
      %432 = vmatpush2.msra.mxu0 0.0
      %433 = vmatprep.subr.mxu0 0.0
      %434 = vmatpush2.msra.mxu0 0.0
      %435 = vmatprep.subr.mxu0 0.0
      %436 = vmatpush2.msra.mxu0 0.0
      %437 = vmatprep.subr.mxu0 0.0
      %438 = vmatpush2.msra.mxu0 0.0
      %439 = vmatprep.mubr.f32.mxu0 0.0
      %440 = vmatmul.mubr.f32.gmra.mxu0 %v370
      %v441 = vpop.f32.mrf.mxu0
      %v442 = vadd.f32 0.0, %v441
      %v443 = vpop.f32.mrf.mxu0
      %444 = vmatprep.mubr.f32.mxu0 0.0
      %445 = vmatmul.mubr.f32.gmra.mxu0 %v373
      %v446 = vpop.f32.mrf.mxu0
      %v447 = vadd.f32 0.0, %v446
      %v448 = vpop.f32.mrf.mxu0
      %449 = vdwg.mxu0
      %v450 = vmul.f32 %v442, 0.001953125
      %v451 = vmul.f32 %v447, 0.001953125
      %453 = vset.pattern.permute.xlu0 0
      %454 = vperm.xlu0 %453, %v450
      %v455 = vpop.permute.xlu0 %454
      %458 = vset.pattern.permute.xlu0 0
      %459 = vperm.xlu0 %458, %v451
      %v460 = vpop.permute.xlu0 %459
      %v462 = vsub.f32 %v356, %v455
      %v463 = vsub.f32 %v357, %v455
      %v464 = vsub.f32 %v358, %v460
      %v465 = vsub.f32 %v359, %v460
      %v466 = vmul.f32 %v462, %v462
      %v467 = vmul.f32 %v463, %v463
      %v468 = vmul.f32 %v464, %v464
      %v469 = vmul.f32 %v465, %v465
      %v470 = vadd.f32 %v466, %v467
      %471 = vadd.xlane.f32.xlu0 %v470
      %v472 = vpop.xlane.xlu0 %471
      %v473 = vadd.f32 %v468, %v469
      %474 = vadd.xlane.f32.xlu0 %v473
      %v475 = vpop.xlane.xlu0 %474
      %476 = vmatprep.subr.mxu0 0.0
      %477 = vmatpush1.msra.mxu0 0.0
      %478 = vmatprep.subr.mxu0 0.0
      %479 = vmatpush1.msra.mxu0 0.0
      %480 = vmatprep.subr.mxu0 0.0
      %481 = vmatpush1.msra.mxu0 0.0
      %482 = vmatprep.subr.mxu0 0.0
      %483 = vmatpush1.msra.mxu0 0.0
      %484 = vmatprep.subr.mxu0 0.0
      %485 = vmatpush1.msra.mxu0 0.0
      %486 = vmatprep.subr.mxu0 0.0
      %487 = vmatpush1.msra.mxu0 0.0
      %488 = vmatprep.subr.mxu0 0.0
      %489 = vmatpush1.msra.mxu0 0.0
      %490 = vmatprep.subr.mxu0 0.0
      %491 = vmatpush1.msra.mxu0 0.0
      %492 = vmatprep.subr.mxu0 0.0
      %493 = vmatpush1.msra.mxu0 0.0
      %494 = vmatprep.subr.mxu0 0.0
      %495 = vmatpush1.msra.mxu0 0.0
      %496 = vmatprep.subr.mxu0 0.0
      %497 = vmatpush1.msra.mxu0 0.0
      %498 = vmatprep.subr.mxu0 0.0
      %499 = vmatpush1.msra.mxu0 0.0
      %500 = vmatprep.subr.mxu0 0.0
      %501 = vmatpush1.msra.mxu0 0.0
      %502 = vmatprep.subr.mxu0 0.0
      %503 = vmatpush1.msra.mxu0 0.0
      %504 = vmatprep.subr.mxu0 0.0
      %505 = vmatpush1.msra.mxu0 %v475
      %506 = vmatprep.subr.mxu0 0.0
      %507 = vmatpush1.msra.mxu0 %v472
      %508 = vmatprep.subr.mxu0 0.0
      %509 = vmatpush2.msra.mxu0 0.0
      %510 = vmatprep.subr.mxu0 0.0
      %511 = vmatpush2.msra.mxu0 0.0
      %512 = vmatprep.subr.mxu0 0.0
      %513 = vmatpush2.msra.mxu0 0.0
      %514 = vmatprep.subr.mxu0 0.0
      %515 = vmatpush2.msra.mxu0 0.0
      %516 = vmatprep.subr.mxu0 0.0
      %517 = vmatpush2.msra.mxu0 0.0
      %518 = vmatprep.subr.mxu0 0.0
      %519 = vmatpush2.msra.mxu0 0.0
      %520 = vmatprep.subr.mxu0 0.0
      %521 = vmatpush2.msra.mxu0 0.0
      %522 = vmatprep.subr.mxu0 0.0
      %523 = vmatpush2.msra.mxu0 0.0
      %524 = vmatprep.subr.mxu0 0.0
      %525 = vmatpush2.msra.mxu0 0.0
      %526 = vmatprep.subr.mxu0 0.0
      %527 = vmatpush2.msra.mxu0 0.0
      %528 = vmatprep.subr.mxu0 0.0
      %529 = vmatpush2.msra.mxu0 0.0
      %530 = vmatprep.subr.mxu0 0.0
      %531 = vmatpush2.msra.mxu0 0.0
      %532 = vmatprep.subr.mxu0 0.0
      %533 = vmatpush2.msra.mxu0 0.0
      %534 = vmatprep.subr.mxu0 0.0
      %535 = vmatpush2.msra.mxu0 0.0
      %536 = vmatprep.subr.mxu0 0.0
      %537 = vmatpush2.msra.mxu0 0.0
      %538 = vmatprep.subr.mxu0 0.0
      %539 = vmatpush2.msra.mxu0 0.0
      %540 = vmatprep.mubr.f32.mxu0 0.0
      %541 = vmatmul.mubr.f32.gmra.mxu0 %v370
      %v542 = vpop.f32.mrf.mxu0
      %v543 = vadd.f32 0.0, %v542
      %v544 = vpop.f32.mrf.mxu0
      %545 = vmatprep.mubr.f32.mxu0 0.0
      %546 = vmatmul.mubr.f32.gmra.mxu0 %v373
      %v547 = vpop.f32.mrf.mxu0
      %v548 = vadd.f32 0.0, %v547
      %v549 = vpop.f32.mrf.mxu0
      %550 = vdwg.mxu0
      %v551 = vmul.f32 %v543, 0.001953125
      %v552 = vmul.f32 %v548, 0.001953125
      %v553 = vadd.f32 %v551, 1e-05
      %v554 = vadd.f32 %v552, 1e-05
      %v555 = vrsqrt.pop %v553
      %v556 = vrsqrt.pop %v554
      %558 = vset.pattern.permute.xlu0 0
      %559 = vperm.xlu0 %558, %v555
      %v560 = vpop.permute.xlu0 %559
      %563 = vset.pattern.permute.xlu0 0
      %564 = vperm.xlu0 %563, %v556
      %v565 = vpop.permute.xlu0 %564
      %v567 = vmul.f32 %v462, %v560
      %v568 = vmul.f32 %v463, %v560
      %v569 = vmul.f32 %v464, %v565
      %v570 = vmul.f32 %v465, %v565
      %v571 = vld [vmem:[%s2] sm:$0xff]
      %v572 = vld [vmem:[%s2 + $0x8] sm:$0xff]
      %574 = vset.pattern.permute.xlu0 0
      %575 = vperm.xlu0 %574, %v571
      %v576 = vpop.permute.xlu0 %575
      %579 = vset.pattern.permute.xlu0 0
      %580 = vperm.xlu0 %579, %v572
      %v581 = vpop.permute.xlu0 %580
      %v583 = vmul.f32 %v567, %v576
      %v584 = vmul.f32 %v568, %v576
      %v585 = vmul.f32 %v569, %v581
      %v586 = vmul.f32 %v570, %v581
      %v587 = vld [vmem:[%s3] sm:$0xff]
      %v588 = vld [vmem:[%s3 + $0x8] sm:$0xff]
      %590 = vset.pattern.permute.xlu0 0
      %591 = vperm.xlu0 %590, %v587
      %v592 = vpop.permute.xlu0 %591
      %595 = vset.pattern.permute.xlu0 0
      %596 = vperm.xlu0 %595, %v588
      %v597 = vpop.permute.xlu0 %596
      %v599 = vadd.f32 %v583, %v592
      %v600 = vadd.f32 %v584, %v592
      %v601 = vadd.f32 %v585, %v597
      %v602 = vadd.f32 %v586, %v597
      %v603 = vxor.u32 %v599, 2147483648
      %v604 = vxor.u32 %v600, 2147483648
      %v605 = vxor.u32 %v601, 2147483648
      %v606 = vxor.u32 %v602, 2147483648
      %v607 = vmul.f32 %v603, 1.442695
      %v608 = vpow.pop %v607
      %v609 = vmul.f32 %v604, 1.442695
      %v610 = vpow.pop %v609
      %v611 = vmul.f32 %v605, 1.442695
      %v612 = vpow.pop %v611
      %v613 = vmul.f32 %v606, 1.442695
      %v614 = vpow.pop %v613
      %v615 = vadd.f32 %v608, 1.0
      %v616 = vadd.f32 %v610, 1.0
      %v617 = vadd.f32 %v612, 1.0
      %v618 = vadd.f32 %v614, 1.0
      %v619 = vrcp.pop %v615
      %v620 = vmul.f32 1.0, %v619
      %v621 = vrcp.pop %v616
      %v622 = vmul.f32 1.0, %v621
      %v623 = vrcp.pop %v617
      %v624 = vmul.f32 1.0, %v623
      %v625 = vrcp.pop %v618
      %v626 = vmul.f32 1.0, %v625
      %v627 = vmul.f32 %v599, %v620
      %v628 = vmul.f32 %v600, %v622
      %v629 = vmul.f32 %v601, %v624
      %v630 = vmul.f32 %v602, %v626
      %v631 = vpack.c.bf16 %v629, %v627
      %v632 = vpack.c.bf16 %v630, %v628
      %634 = vrot.lane.b32.xlu0 %v632, 17
      %v635 = vpop.permute.xlu0 %634
      %637 = vrot.lane.b32.xlu0 %v631, 17
      %v638 = vpop.permute.xlu0 %637
      %vm639 = vcmask 138240
      %v640 = vsel %vm639, %v638, %v635
      %vm642 = vcmask 138240
      %v645 = vsel %vm642, %v635, %v638
      %v647 = vld [vmem:[%s6] sm:$0x3]
      %v650 = vunpack.c.l.s4 1966171168
      %v651 = vunpack.c.0.s8 %v650
      %v652 = vlaneseq
      %v653 = vshrl.u32 %v652, 7
      %v654 = vsub.s32 %v651, %v653
      %v655 = vrot.slane %v647, %v654
      %v656 = vcombine.high %v655, %v655
      %v658 = vunpack.c.l.s4 1966171168
      %v659 = vunpack.c.0.s8 %v658
      %v660 = vlaneseq
      %v661 = vshrl.u32 %v660, 7
      %v662 = vsub.s32 %v659, %v661
      %v663 = vrot.slane %v655, %v662
      %v665 = vunpack.c.l.s4 1966171168
      %v666 = vunpack.c.0.s8 %v665
      %v667 = vlaneseq
      %v668 = vshrl.u32 %v667, 7
      %v669 = vsub.s32 %v666, %v668
      %v670 = vrot.slane %v656, %v669
      %v672 = vpack.i.b16 %v663, %v663
      %v674 = vlaneseq
      %v675 = vshrl.u32 %v674, 7
      %v676 = vsub.s32 0, %v675
      %v677 = vrot.slane %v672, %v676
      %v679 = vpack.i.b16 %v670, %v670
      %v681 = vlaneseq
      %v682 = vshrl.u32 %v681, 7
      %v683 = vsub.s32 0, %v682
      %v684 = vrot.slane %v679, %v683
      %v685 = vmul.bf16 %v645, %v677
      %v686 = vmul.bf16 %v640, %v684
      %v687 = vld [vmem:[%s4] sm:$0xf]
      %v688 = vld [vmem:[%s4 + $0x4] sm:$0xf]
      %689 = vrot.lane.b32.xlu0 %v632, 16
      %v690 = vpop.permute.xlu0 %689
      %691 = vrot.lane.b32.xlu0 %v631, 16
      %v692 = vpop.permute.xlu0 %691
      %vm693 = vcmask 130048
      %v694 = vsel %vm693, %v692, %v690
      %v698 = vsel %vm368, %v690, %v692
      %s700 = scalar_lea.vmem %s6, 2
      %v701 = vld [vmem:[%s700] sm:$0x3]
      %v704 = vunpack.c.l.s4 1966171168
      %v705 = vunpack.c.0.s8 %v704
      %v706 = vlaneseq
      %v707 = vshrl.u32 %v706, 7
      %v708 = vsub.s32 %v705, %v707
      %v709 = vrot.slane %v701, %v708
      %v710 = vcombine.high %v709, %v709
      %v712 = vunpack.c.l.s4 1966171168
      %v713 = vunpack.c.0.s8 %v712
      %v714 = vlaneseq
      %v715 = vshrl.u32 %v714, 7
      %v716 = vsub.s32 %v713, %v715
      %v717 = vrot.slane %v709, %v716
      %v719 = vunpack.c.l.s4 1966171168
      %v720 = vunpack.c.0.s8 %v719
      %v721 = vlaneseq
      %v722 = vshrl.u32 %v721, 7
      %v723 = vsub.s32 %v720, %v722
      %v724 = vrot.slane %v710, %v723
      %v726 = vpack.i.b16 %v717, %v717
      %v728 = vlaneseq
      %v729 = vshrl.u32 %v728, 7
      %v730 = vsub.s32 0, %v729
      %v731 = vrot.slane %v726, %v730
      %v733 = vpack.i.b16 %v724, %v724
      %v735 = vlaneseq
      %v736 = vshrl.u32 %v735, 7
      %v737 = vsub.s32 0, %v736
      %v738 = vrot.slane %v733, %v737
      %v739 = vmul.bf16 %v698, %v731
      %v740 = vmul.bf16 %v694, %v738
      %s741 = scalar_lea.vmem %s4, 8
      %v742 = vld [vmem:[%s741] sm:$0xf]
      %v743 = vld [vmem:[%s741 + $0x4] sm:$0xf]
      %v746 = vunpack.c.l.b16 %v742
      %v747 = vunpack.c.l.b16 %v743
      %v748 = vpack.c.b16 %v747, %v746
      %v750 = vsel %vm368, %v748, 0
      %752 = vmatprep.subr.bf16.mxu0 0
      %753 = vmatpush1.bf16.msra.mxu0 0
      %754 = vmatprep.subr.bf16.mxu0 0
      %755 = vmatpush1.bf16.msra.mxu0 0
      %756 = vmatprep.subr.bf16.mxu0 0
      %757 = vmatpush1.bf16.msra.mxu0 0
      %758 = vmatprep.subr.bf16.mxu0 0
      %759 = vmatpush1.bf16.msra.mxu0 0
      %760 = vmatprep.subr.bf16.mxu0 0
      %761 = vmatpush1.bf16.msra.mxu0 0
      %762 = vmatprep.subr.bf16.mxu0 0
      %763 = vmatpush1.bf16.msra.mxu0 0
      %764 = vmatprep.subr.bf16.mxu0 0
      %765 = vmatpush1.bf16.msra.mxu0 0
      %766 = vmatprep.subr.bf16.mxu0 %v740
      %767 = vmatpush1.bf16.msra.mxu0 %v739
      %768 = vmatprep.subr.bf16.mxu0 0
      %769 = vmatpush2.bf16.msra.mxu0 0
      %770 = vmatprep.subr.bf16.mxu0 0
      %771 = vmatpush2.bf16.msra.mxu0 0
      %772 = vmatprep.subr.bf16.mxu0 0
      %773 = vmatpush2.bf16.msra.mxu0 0
      %774 = vmatprep.subr.bf16.mxu0 0
      %775 = vmatpush2.bf16.msra.mxu0 0
      %776 = vmatprep.subr.bf16.mxu0 0
      %777 = vmatpush2.bf16.msra.mxu0 0
      %778 = vmatprep.subr.bf16.mxu0 0
      %779 = vmatpush2.bf16.msra.mxu0 0
      %780 = vmatprep.subr.bf16.mxu0 0
      %781 = vmatpush2.bf16.msra.mxu0 0
      %782 = vmatprep.subr.bf16.mxu0 0
      %783 = vmatpush2.bf16.msra.mxu0 0
      %784 = vmatprep.mubr.bf16.mxu0 0
      %785 = vmatmul.mubr.bf16.gmra.mxu0 %v750
      %v786 = vpop.f32.mrf.mxu0
      %v787 = vadd.f32 0.0, %v786
      %v788 = vpop.f32.mrf.mxu0
      %v789 = vadd.f32 0.0, %v788
      %v790 = vpop.f32.mrf.mxu0
      %v791 = vadd.f32 0.0, %v790
      %v792 = vpop.f32.mrf.mxu0
      %v793 = vadd.f32 0.0, %v792
      %794 = vdwg.mxu0
      %v797 = vunpack.c.l.b16 %v687
      %v798 = vunpack.c.l.b16 %v688
      %v799 = vpack.c.b16 %v798, %v797
      %v801 = vsel %vm368, %v799, 0
      %803 = vmatprep.subr.bf16.mxu0 0
      %804 = vmatpush1.bf16.msra.mxu0 0
      %805 = vmatprep.subr.bf16.mxu0 0
      %806 = vmatpush1.bf16.msra.mxu0 0
      %807 = vmatprep.subr.bf16.mxu0 0
      %808 = vmatpush1.bf16.msra.mxu0 0
      %809 = vmatprep.subr.bf16.mxu0 0
      %810 = vmatpush1.bf16.msra.mxu0 0
      %811 = vmatprep.subr.bf16.mxu0 0
      %812 = vmatpush1.bf16.msra.mxu0 0
      %813 = vmatprep.subr.bf16.mxu0 0
      %814 = vmatpush1.bf16.msra.mxu0 0
      %815 = vmatprep.subr.bf16.mxu0 0
      %816 = vmatpush1.bf16.msra.mxu0 0
      %817 = vmatprep.subr.bf16.mxu0 %v686
      %818 = vmatpush1.bf16.msra.mxu0 %v685
      %819 = vmatprep.subr.bf16.mxu0 0
      %820 = vmatpush2.bf16.msra.mxu0 0
      %821 = vmatprep.subr.bf16.mxu0 0
      %822 = vmatpush2.bf16.msra.mxu0 0
      %823 = vmatprep.subr.bf16.mxu0 0
      %824 = vmatpush2.bf16.msra.mxu0 0
      %825 = vmatprep.subr.bf16.mxu0 0
      %826 = vmatpush2.bf16.msra.mxu0 0
      %827 = vmatprep.subr.bf16.mxu0 0
      %828 = vmatpush2.bf16.msra.mxu0 0
      %829 = vmatprep.subr.bf16.mxu0 0
      %830 = vmatpush2.bf16.msra.mxu0 0
      %831 = vmatprep.subr.bf16.mxu0 0
      %832 = vmatpush2.bf16.msra.mxu0 0
      %833 = vmatprep.subr.bf16.mxu0 0
      %834 = vmatpush2.bf16.msra.mxu0 0
      %835 = vmatprep.mubr.bf16.mxu0 0
      %836 = vmatmul.mubr.bf16.gmra.mxu0 %v801
      %v837 = vpop.f32.mrf.mxu0
      %v838 = vadd.f32 %v787, %v837
      %v839 = vpop.f32.mrf.mxu0
      %v840 = vadd.f32 %v789, %v839
      %v841 = vpop.f32.mrf.mxu0
      %v842 = vadd.f32 %v791, %v841
      %v843 = vpop.f32.mrf.mxu0
      %v844 = vadd.f32 %v793, %v843
      %845 = vdwg.mxu0
      %846 = vrot.lane.b32.xlu0 %v632, 15
      %v847 = vpop.permute.xlu0 %846
      %848 = vrot.lane.b32.xlu0 %v631, 15
      %v849 = vpop.permute.xlu0 %848
      %vm850 = vcmask 121856
      %v851 = vsel %vm850, %v849, %v847
      %vm853 = vcmask 121856
      %v856 = vsel %vm853, %v847, %v849
      %s858 = scalar_lea.vmem %s6, 4
      %v859 = vld [vmem:[%s858] sm:$0x3]
      %v862 = vunpack.c.l.s4 1966171168
      %v863 = vunpack.c.0.s8 %v862
      %v864 = vlaneseq
      %v865 = vshrl.u32 %v864, 7
      %v866 = vsub.s32 %v863, %v865
      %v867 = vrot.slane %v859, %v866
      %v868 = vcombine.high %v867, %v867
      %v870 = vunpack.c.l.s4 1966171168
      %v871 = vunpack.c.0.s8 %v870
      %v872 = vlaneseq
      %v873 = vshrl.u32 %v872, 7
      %v874 = vsub.s32 %v871, %v873
      %v875 = vrot.slane %v867, %v874
      %v877 = vunpack.c.l.s4 1966171168
      %v878 = vunpack.c.0.s8 %v877
      %v879 = vlaneseq
      %v880 = vshrl.u32 %v879, 7
      %v881 = vsub.s32 %v878, %v880
      %v882 = vrot.slane %v868, %v881
      %v884 = vpack.i.b16 %v875, %v875
      %v886 = vlaneseq
      %v887 = vshrl.u32 %v886, 7
      %v888 = vsub.s32 0, %v887
      %v889 = vrot.slane %v884, %v888
      %v891 = vpack.i.b16 %v882, %v882
      %v893 = vlaneseq
      %v894 = vshrl.u32 %v893, 7
      %v895 = vsub.s32 0, %v894
      %v896 = vrot.slane %v891, %v895
      %v897 = vmul.bf16 %v856, %v889
      %v898 = vmul.bf16 %v851, %v896
      %s899 = scalar_lea.vmem %s4, 16
      %v900 = vld [vmem:[%s899] sm:$0xf]
      %v901 = vld [vmem:[%s899 + $0x4] sm:$0xf]
      %v904 = vunpack.c.l.b16 %v900
      %v905 = vunpack.c.l.b16 %v901
      %v906 = vpack.c.b16 %v905, %v904
      %v908 = vsel %vm368, %v906, 0
      %910 = vmatprep.subr.bf16.mxu0 0
      %911 = vmatpush1.bf16.msra.mxu0 0
      %912 = vmatprep.subr.bf16.mxu0 0
      %913 = vmatpush1.bf16.msra.mxu0 0
      %914 = vmatprep.subr.bf16.mxu0 0
      %915 = vmatpush1.bf16.msra.mxu0 0
      %916 = vmatprep.subr.bf16.mxu0 0
      %917 = vmatpush1.bf16.msra.mxu0 0
      %918 = vmatprep.subr.bf16.mxu0 0
      %919 = vmatpush1.bf16.msra.mxu0 0
      %920 = vmatprep.subr.bf16.mxu0 0
      %921 = vmatpush1.bf16.msra.mxu0 0
      %922 = vmatprep.subr.bf16.mxu0 0
      %923 = vmatpush1.bf16.msra.mxu0 0
      %924 = vmatprep.subr.bf16.mxu0 %v898
      %925 = vmatpush1.bf16.msra.mxu0 %v897
      %926 = vmatprep.subr.bf16.mxu0 0
      %927 = vmatpush2.bf16.msra.mxu0 0
      %928 = vmatprep.subr.bf16.mxu0 0
      %929 = vmatpush2.bf16.msra.mxu0 0
      %930 = vmatprep.subr.bf16.mxu0 0
      %931 = vmatpush2.bf16.msra.mxu0 0
      %932 = vmatprep.subr.bf16.mxu0 0
      %933 = vmatpush2.bf16.msra.mxu0 0
      %934 = vmatprep.subr.bf16.mxu0 0
      %935 = vmatpush2.bf16.msra.mxu0 0
      %936 = vmatprep.subr.bf16.mxu0 0
      %937 = vmatpush2.bf16.msra.mxu0 0
      %938 = vmatprep.subr.bf16.mxu0 0
      %939 = vmatpush2.bf16.msra.mxu0 0
      %940 = vmatprep.subr.bf16.mxu0 0
      %941 = vmatpush2.bf16.msra.mxu0 0
      %942 = vmatprep.mubr.bf16.mxu0 0
      %943 = vmatmul.mubr.bf16.gmra.mxu0 %v908
      %v944 = vpop.f32.mrf.mxu0
      %v945 = vadd.f32 0.0, %v944
      %v946 = vpop.f32.mrf.mxu0
      %v947 = vadd.f32 0.0, %v946
      %v948 = vpop.f32.mrf.mxu0
      %v949 = vadd.f32 0.0, %v948
      %v950 = vpop.f32.mrf.mxu0
      %v951 = vadd.f32 0.0, %v950
      %952 = vdwg.mxu0
      %v953 = vadd.f32 %v838, %v945
      %v954 = vadd.f32 %v840, %v947
      %v955 = vadd.f32 %v842, %v949
      %v956 = vadd.f32 %v844, %v951
      %957 = vrot.lane.b32.xlu0 %v632, 1
      %v958 = vpop.permute.xlu0 %957
      %959 = vrot.lane.b32.xlu0 %v631, 1
      %v960 = vpop.permute.xlu0 %959
      %vm961 = vcmask 7168
      %v962 = vsel %vm961, %v960, %v958
      %vm964 = vcmask 7168
      %v967 = vsel %vm964, %v958, %v960
      %s969 = scalar_lea.vmem %s6, 6
      %v970 = vld [vmem:[%s969] sm:$0x3]
      %v973 = vunpack.c.l.s4 1966171168
      %v974 = vunpack.c.0.s8 %v973
      %v975 = vlaneseq
      %v976 = vshrl.u32 %v975, 7
      %v977 = vsub.s32 %v974, %v976
      %v978 = vrot.slane %v970, %v977
      %v979 = vcombine.high %v978, %v978
      %v981 = vunpack.c.l.s4 1966171168
      %v982 = vunpack.c.0.s8 %v981
      %v983 = vlaneseq
      %v984 = vshrl.u32 %v983, 7
      %v985 = vsub.s32 %v982, %v984
      %v986 = vrot.slane %v978, %v985
      %v988 = vunpack.c.l.s4 1966171168
      %v989 = vunpack.c.0.s8 %v988
      %v990 = vlaneseq
      %v991 = vshrl.u32 %v990, 7
      %v992 = vsub.s32 %v989, %v991
      %v993 = vrot.slane %v979, %v992
      %v995 = vpack.i.b16 %v986, %v986
      %v997 = vlaneseq
      %v998 = vshrl.u32 %v997, 7
      %v999 = vsub.s32 0, %v998
      %v1000 = vrot.slane %v995, %v999
      %v1002 = vpack.i.b16 %v993, %v993
      %v1004 = vlaneseq
      %v1005 = vshrl.u32 %v1004, 7
      %v1006 = vsub.s32 0, %v1005
      %v1007 = vrot.slane %v1002, %v1006
      %v1008 = vmul.bf16 %v967, %v1000
      %v1009 = vmul.bf16 %v962, %v1007
      %s1010 = scalar_lea.vmem %s4, 24
      %v1011 = vld [vmem:[%s1010] sm:$0xf]
      %v1012 = vld [vmem:[%s1010 + $0x4] sm:$0xf]
      %v1015 = vunpack.c.l.b16 %v1011
      %v1016 = vunpack.c.l.b16 %v1012
      %v1017 = vpack.c.b16 %v1016, %v1015
      %v1019 = vsel %vm368, %v1017, 0
      %1021 = vmatprep.subr.bf16.mxu0 0
      %1022 = vmatpush1.bf16.msra.mxu0 0
      %1023 = vmatprep.subr.bf16.mxu0 0
      %1024 = vmatpush1.bf16.msra.mxu0 0
      %1025 = vmatprep.subr.bf16.mxu0 0
      %1026 = vmatpush1.bf16.msra.mxu0 0
      %1027 = vmatprep.subr.bf16.mxu0 0
      %1028 = vmatpush1.bf16.msra.mxu0 0
      %1029 = vmatprep.subr.bf16.mxu0 0
      %1030 = vmatpush1.bf16.msra.mxu0 0
      %1031 = vmatprep.subr.bf16.mxu0 0
      %1032 = vmatpush1.bf16.msra.mxu0 0
      %1033 = vmatprep.subr.bf16.mxu0 0
      %1034 = vmatpush1.bf16.msra.mxu0 0
      %1035 = vmatprep.subr.bf16.mxu0 %v1009
      %1036 = vmatpush1.bf16.msra.mxu0 %v1008
      %1037 = vmatprep.subr.bf16.mxu0 0
      %1038 = vmatpush2.bf16.msra.mxu0 0
      %1039 = vmatprep.subr.bf16.mxu0 0
      %1040 = vmatpush2.bf16.msra.mxu0 0
      %1041 = vmatprep.subr.bf16.mxu0 0
      %1042 = vmatpush2.bf16.msra.mxu0 0
      %1043 = vmatprep.subr.bf16.mxu0 0
      %1044 = vmatpush2.bf16.msra.mxu0 0
      %1045 = vmatprep.subr.bf16.mxu0 0
      %1046 = vmatpush2.bf16.msra.mxu0 0
      %1047 = vmatprep.subr.bf16.mxu0 0
      %1048 = vmatpush2.bf16.msra.mxu0 0
      %1049 = vmatprep.subr.bf16.mxu0 0
      %1050 = vmatpush2.bf16.msra.mxu0 0
      %1051 = vmatprep.subr.bf16.mxu0 0
      %1052 = vmatpush2.bf16.msra.mxu0 0
      %1053 = vmatprep.mubr.bf16.mxu0 0
      %1054 = vmatmul.mubr.bf16.gmra.mxu0 %v1019
      %v1055 = vpop.f32.mrf.mxu0
      %v1056 = vadd.f32 0.0, %v1055
      %v1057 = vpop.f32.mrf.mxu0
      %v1058 = vadd.f32 0.0, %v1057
      %v1059 = vpop.f32.mrf.mxu0
      %v1060 = vadd.f32 0.0, %v1059
      %v1061 = vpop.f32.mrf.mxu0
      %v1062 = vadd.f32 0.0, %v1061
      %1063 = vdwg.mxu0
      %v1064 = vadd.f32 %v953, %v1056
      %v1065 = vadd.f32 %v954, %v1058
      %v1066 = vadd.f32 %v955, %v1060
      %v1067 = vadd.f32 %v956, %v1062
      %s1068 = scalar_lea.vmem %s4, 32
      %v1069 = vld [vmem:[%s1068] sm:$0xf]
      %v1070 = vld [vmem:[%s1068 + $0x4] sm:$0xf]
      %v1073 = vunpack.c.l.b16 %v1069
      %v1074 = vunpack.c.l.b16 %v1070
      %v1075 = vpack.c.b16 %v1074, %v1073
      %v1077 = vsel %vm368, %v1075, 0
      %1079 = vmatprep.subr.bf16.mxu0 0
      %1080 = vmatpush1.bf16.msra.mxu0 0
      %1081 = vmatprep.subr.bf16.mxu0 0
      %1082 = vmatpush1.bf16.msra.mxu0 0
      %1083 = vmatprep.subr.bf16.mxu0 0
      %1084 = vmatpush1.bf16.msra.mxu0 0
      %1085 = vmatprep.subr.bf16.mxu0 0
      %1086 = vmatpush1.bf16.msra.mxu0 0
      %1087 = vmatprep.subr.bf16.mxu0 0
      %1088 = vmatpush1.bf16.msra.mxu0 0
      %1089 = vmatprep.subr.bf16.mxu0 0
      %1090 = vmatpush1.bf16.msra.mxu0 0
      %1091 = vmatprep.subr.bf16.mxu0 0
      %1092 = vmatpush1.bf16.msra.mxu0 0
      %1093 = vmatprep.subr.bf16.mxu0 %v632
      %1094 = vmatpush1.bf16.msra.mxu0 %v631
      %1095 = vmatprep.subr.bf16.mxu0 0
      %1096 = vmatpush2.bf16.msra.mxu0 0
      %1097 = vmatprep.subr.bf16.mxu0 0
      %1098 = vmatpush2.bf16.msra.mxu0 0
      %1099 = vmatprep.subr.bf16.mxu0 0
      %1100 = vmatpush2.bf16.msra.mxu0 0
      %1101 = vmatprep.subr.bf16.mxu0 0
      %1102 = vmatpush2.bf16.msra.mxu0 0
      %1103 = vmatprep.subr.bf16.mxu0 0
      %1104 = vmatpush2.bf16.msra.mxu0 0
      %1105 = vmatprep.subr.bf16.mxu0 0
      %1106 = vmatpush2.bf16.msra.mxu0 0
      %1107 = vmatprep.subr.bf16.mxu0 0
      %1108 = vmatpush2.bf16.msra.mxu0 0
      %1109 = vmatprep.subr.bf16.mxu0 0
      %1110 = vmatpush2.bf16.msra.mxu0 0
      %1111 = vmatprep.mubr.bf16.mxu0 0
      %1112 = vmatmul.mubr.bf16.gmra.mxu0 %v1077
      %v1113 = vpop.f32.mrf.mxu0
      %v1114 = vadd.f32 0.0, %v1113
      %v1115 = vpop.f32.mrf.mxu0
      %v1116 = vadd.f32 0.0, %v1115
      %v1117 = vpop.f32.mrf.mxu0
      %v1118 = vadd.f32 0.0, %v1117
      %v1119 = vpop.f32.mrf.mxu0
      %v1120 = vadd.f32 0.0, %v1119
      %1121 = vdwg.mxu0
      %v1122 = vadd.f32 %v1064, %v1114
      %v1123 = vadd.f32 %v1065, %v1116
      %v1124 = vadd.f32 %v1066, %v1118
      %v1125 = vadd.f32 %v1067, %v1120
      %1126 = vrot.lane.b32.xlu0 %v631, 127
      %v1127 = vpop.permute.xlu0 %1126
      %1128 = vrot.lane.b32.xlu0 %v632, 127
      %v1129 = vpop.permute.xlu0 %1128
      %vm1130 = vcmask 1039360
      %v1131 = vsel %vm1130, %v1127, %v1129
      %vm1133 = vcmask 1039360
      %v1136 = vsel %vm1133, %v1129, %v1127
      %s1138 = scalar_lea.vmem %s6, 10
      %v1139 = vld [vmem:[%s1138] sm:$0x3]
      %v1142 = vunpack.c.l.s4 1966171168
      %v1143 = vunpack.c.0.s8 %v1142
      %v1144 = vlaneseq
      %v1145 = vshrl.u32 %v1144, 7
      %v1146 = vsub.s32 %v1143, %v1145
      %v1147 = vrot.slane %v1139, %v1146
      %v1148 = vcombine.high %v1147, %v1147
      %v1150 = vunpack.c.l.s4 1966171168
      %v1151 = vunpack.c.0.s8 %v1150
      %v1152 = vlaneseq
      %v1153 = vshrl.u32 %v1152, 7
      %v1154 = vsub.s32 %v1151, %v1153
      %v1155 = vrot.slane %v1147, %v1154
      %v1157 = vunpack.c.l.s4 1966171168
      %v1158 = vunpack.c.0.s8 %v1157
      %v1159 = vlaneseq
      %v1160 = vshrl.u32 %v1159, 7
      %v1161 = vsub.s32 %v1158, %v1160
      %v1162 = vrot.slane %v1148, %v1161
      %v1164 = vpack.i.b16 %v1155, %v1155
      %v1166 = vlaneseq
      %v1167 = vshrl.u32 %v1166, 7
      %v1168 = vsub.s32 0, %v1167
      %v1169 = vrot.slane %v1164, %v1168
      %v1171 = vpack.i.b16 %v1162, %v1162
      %v1173 = vlaneseq
      %v1174 = vshrl.u32 %v1173, 7
      %v1175 = vsub.s32 0, %v1174
      %v1176 = vrot.slane %v1171, %v1175
      %v1177 = vmul.bf16 %v1131, %v1169
      %v1178 = vmul.bf16 %v1136, %v1176
      %s1179 = scalar_lea.vmem %s4, 40
      %v1180 = vld [vmem:[%s1179] sm:$0xf]
      %v1181 = vld [vmem:[%s1179 + $0x4] sm:$0xf]
      %v1184 = vunpack.c.l.b16 %v1180
      %v1185 = vunpack.c.l.b16 %v1181
      %v1186 = vpack.c.b16 %v1185, %v1184
      %v1188 = vsel %vm368, %v1186, 0
      %1190 = vmatprep.subr.bf16.mxu0 0
      %1191 = vmatpush1.bf16.msra.mxu0 0
      %1192 = vmatprep.subr.bf16.mxu0 0
      %1193 = vmatpush1.bf16.msra.mxu0 0
      %1194 = vmatprep.subr.bf16.mxu0 0
      %1195 = vmatpush1.bf16.msra.mxu0 0
      %1196 = vmatprep.subr.bf16.mxu0 0
      %1197 = vmatpush1.bf16.msra.mxu0 0
      %1198 = vmatprep.subr.bf16.mxu0 0
      %1199 = vmatpush1.bf16.msra.mxu0 0
      %1200 = vmatprep.subr.bf16.mxu0 0
      %1201 = vmatpush1.bf16.msra.mxu0 0
      %1202 = vmatprep.subr.bf16.mxu0 0
      %1203 = vmatpush1.bf16.msra.mxu0 0
      %1204 = vmatprep.subr.bf16.mxu0 %v1178
      %1205 = vmatpush1.bf16.msra.mxu0 %v1177
      %1206 = vmatprep.subr.bf16.mxu0 0
      %1207 = vmatpush2.bf16.msra.mxu0 0
      %1208 = vmatprep.subr.bf16.mxu0 0
      %1209 = vmatpush2.bf16.msra.mxu0 0
      %1210 = vmatprep.subr.bf16.mxu0 0
      %1211 = vmatpush2.bf16.msra.mxu0 0
      %1212 = vmatprep.subr.bf16.mxu0 0
      %1213 = vmatpush2.bf16.msra.mxu0 0
      %1214 = vmatprep.subr.bf16.mxu0 0
      %1215 = vmatpush2.bf16.msra.mxu0 0
      %1216 = vmatprep.subr.bf16.mxu0 0
      %1217 = vmatpush2.bf16.msra.mxu0 0
      %1218 = vmatprep.subr.bf16.mxu0 0
      %1219 = vmatpush2.bf16.msra.mxu0 0
      %1220 = vmatprep.subr.bf16.mxu0 0
      %1221 = vmatpush2.bf16.msra.mxu0 0
      %1222 = vmatprep.mubr.bf16.mxu0 0
      %1223 = vmatmul.mubr.bf16.gmra.mxu0 %v1188
      %v1224 = vpop.f32.mrf.mxu0
      %v1225 = vadd.f32 0.0, %v1224
      %v1226 = vpop.f32.mrf.mxu0
      %v1227 = vadd.f32 0.0, %v1226
      %v1228 = vpop.f32.mrf.mxu0
      %v1229 = vadd.f32 0.0, %v1228
      %v1230 = vpop.f32.mrf.mxu0
      %v1231 = vadd.f32 0.0, %v1230
      %1232 = vdwg.mxu0
      %v1233 = vadd.f32 %v1122, %v1225
      %v1234 = vadd.f32 %v1123, %v1227
      %v1235 = vadd.f32 %v1124, %v1229
      %v1236 = vadd.f32 %v1125, %v1231
      %1237 = vrot.lane.b32.xlu0 %v631, 113
      %v1238 = vpop.permute.xlu0 %1237
      %1239 = vrot.lane.b32.xlu0 %v632, 113
      %v1240 = vpop.permute.xlu0 %1239
      %vm1241 = vcmask 924672
      %v1242 = vsel %vm1241, %v1238, %v1240
      %vm1244 = vcmask 924672
      %v1247 = vsel %vm1244, %v1240, %v1238
      %s1249 = scalar_lea.vmem %s6, 12
      %v1250 = vld [vmem:[%s1249] sm:$0x3]
      %v1253 = vunpack.c.l.s4 1966171168
      %v1254 = vunpack.c.0.s8 %v1253
      %v1255 = vlaneseq
      %v1256 = vshrl.u32 %v1255, 7
      %v1257 = vsub.s32 %v1254, %v1256
      %v1258 = vrot.slane %v1250, %v1257
      %v1259 = vcombine.high %v1258, %v1258
      %v1261 = vunpack.c.l.s4 1966171168
      %v1262 = vunpack.c.0.s8 %v1261
      %v1263 = vlaneseq
      %v1264 = vshrl.u32 %v1263, 7
      %v1265 = vsub.s32 %v1262, %v1264
      %v1266 = vrot.slane %v1258, %v1265
      %v1268 = vunpack.c.l.s4 1966171168
      %v1269 = vunpack.c.0.s8 %v1268
      %v1270 = vlaneseq
      %v1271 = vshrl.u32 %v1270, 7
      %v1272 = vsub.s32 %v1269, %v1271
      %v1273 = vrot.slane %v1259, %v1272
      %v1275 = vpack.i.b16 %v1266, %v1266
      %v1277 = vlaneseq
      %v1278 = vshrl.u32 %v1277, 7
      %v1279 = vsub.s32 0, %v1278
      %v1280 = vrot.slane %v1275, %v1279
      %v1282 = vpack.i.b16 %v1273, %v1273
      %v1284 = vlaneseq
      %v1285 = vshrl.u32 %v1284, 7
      %v1286 = vsub.s32 0, %v1285
      %v1287 = vrot.slane %v1282, %v1286
      %v1288 = vmul.bf16 %v1242, %v1280
      %v1289 = vmul.bf16 %v1247, %v1287
      %s1290 = scalar_lea.vmem %s4, 48
      %v1291 = vld [vmem:[%s1290] sm:$0xf]
      %v1292 = vld [vmem:[%s1290 + $0x4] sm:$0xf]
      %v1295 = vunpack.c.l.b16 %v1291
      %v1296 = vunpack.c.l.b16 %v1292
      %v1297 = vpack.c.b16 %v1296, %v1295
      %v1299 = vsel %vm368, %v1297, 0
      %1301 = vmatprep.subr.bf16.mxu0 0
      %1302 = vmatpush1.bf16.msra.mxu0 0
      %1303 = vmatprep.subr.bf16.mxu0 0
      %1304 = vmatpush1.bf16.msra.mxu0 0
      %1305 = vmatprep.subr.bf16.mxu0 0
      %1306 = vmatpush1.bf16.msra.mxu0 0
      %1307 = vmatprep.subr.bf16.mxu0 0
      %1308 = vmatpush1.bf16.msra.mxu0 0
      %1309 = vmatprep.subr.bf16.mxu0 0
      %1310 = vmatpush1.bf16.msra.mxu0 0
      %1311 = vmatprep.subr.bf16.mxu0 0
      %1312 = vmatpush1.bf16.msra.mxu0 0
      %1313 = vmatprep.subr.bf16.mxu0 0
      %1314 = vmatpush1.bf16.msra.mxu0 0
      %1315 = vmatprep.subr.bf16.mxu0 %v1289
      %1316 = vmatpush1.bf16.msra.mxu0 %v1288
      %1317 = vmatprep.subr.bf16.mxu0 0
      %1318 = vmatpush2.bf16.msra.mxu0 0
      %1319 = vmatprep.subr.bf16.mxu0 0
      %1320 = vmatpush2.bf16.msra.mxu0 0
      %1321 = vmatprep.subr.bf16.mxu0 0
      %1322 = vmatpush2.bf16.msra.mxu0 0
      %1323 = vmatprep.subr.bf16.mxu0 0
      %1324 = vmatpush2.bf16.msra.mxu0 0
      %1325 = vmatprep.subr.bf16.mxu0 0
      %1326 = vmatpush2.bf16.msra.mxu0 0
      %1327 = vmatprep.subr.bf16.mxu0 0
      %1328 = vmatpush2.bf16.msra.mxu0 0
      %1329 = vmatprep.subr.bf16.mxu0 0
      %1330 = vmatpush2.bf16.msra.mxu0 0
      %1331 = vmatprep.subr.bf16.mxu0 0
      %1332 = vmatpush2.bf16.msra.mxu0 0
      %1333 = vmatprep.mubr.bf16.mxu0 0
      %1334 = vmatmul.mubr.bf16.gmra.mxu0 %v1299
      %v1335 = vpop.f32.mrf.mxu0
      %v1336 = vadd.f32 0.0, %v1335
      %v1337 = vpop.f32.mrf.mxu0
      %v1338 = vadd.f32 0.0, %v1337
      %v1339 = vpop.f32.mrf.mxu0
      %v1340 = vadd.f32 0.0, %v1339
      %v1341 = vpop.f32.mrf.mxu0
      %v1342 = vadd.f32 0.0, %v1341
      %1343 = vdwg.mxu0
      %v1344 = vadd.f32 %v1233, %v1336
      %v1345 = vadd.f32 %v1234, %v1338
      %v1346 = vadd.f32 %v1235, %v1340
      %v1347 = vadd.f32 %v1236, %v1342
      %1348 = vrot.lane.b32.xlu0 %v631, 112
      %v1349 = vpop.permute.xlu0 %1348
      %1350 = vrot.lane.b32.xlu0 %v632, 112
      %v1351 = vpop.permute.xlu0 %1350
      %vm1352 = vcmask 916480
      %v1353 = vsel %vm1352, %v1349, %v1351
      %vm1355 = vcmask 916480
      %v1358 = vsel %vm1355, %v1351, %v1349
      %s1360 = scalar_lea.vmem %s6, 14
      %v1361 = vld [vmem:[%s1360] sm:$0x3]
      %v1364 = vunpack.c.l.s4 1966171168
      %v1365 = vunpack.c.0.s8 %v1364
      %v1366 = vlaneseq
      %v1367 = vshrl.u32 %v1366, 7
      %v1368 = vsub.s32 %v1365, %v1367
      %v1369 = vrot.slane %v1361, %v1368
      %v1370 = vcombine.high %v1369, %v1369
      %v1372 = vunpack.c.l.s4 1966171168
      %v1373 = vunpack.c.0.s8 %v1372
      %v1374 = vlaneseq
      %v1375 = vshrl.u32 %v1374, 7
      %v1376 = vsub.s32 %v1373, %v1375
      %v1377 = vrot.slane %v1369, %v1376
      %v1379 = vunpack.c.l.s4 1966171168
      %v1380 = vunpack.c.0.s8 %v1379
      %v1381 = vlaneseq
      %v1382 = vshrl.u32 %v1381, 7
      %v1383 = vsub.s32 %v1380, %v1382
      %v1384 = vrot.slane %v1370, %v1383
      %v1386 = vpack.i.b16 %v1377, %v1377
      %v1388 = vlaneseq
      %v1389 = vshrl.u32 %v1388, 7
      %v1390 = vsub.s32 0, %v1389
      %v1391 = vrot.slane %v1386, %v1390
      %v1393 = vpack.i.b16 %v1384, %v1384
      %v1395 = vlaneseq
      %v1396 = vshrl.u32 %v1395, 7
      %v1397 = vsub.s32 0, %v1396
      %v1398 = vrot.slane %v1393, %v1397
      %v1399 = vmul.bf16 %v1353, %v1391
      %v1400 = vmul.bf16 %v1358, %v1398
      %s1401 = scalar_lea.vmem %s4, 56
      %v1402 = vld [vmem:[%s1401] sm:$0xf]
      %v1403 = vld [vmem:[%s1401 + $0x4] sm:$0xf]
      %v1406 = vunpack.c.l.b16 %v1402
      %v1407 = vunpack.c.l.b16 %v1403
      %v1408 = vpack.c.b16 %v1407, %v1406
      %v1410 = vsel %vm368, %v1408, 0
      %1412 = vmatprep.subr.bf16.mxu0 0
      %1413 = vmatpush1.bf16.msra.mxu0 0
      %1414 = vmatprep.subr.bf16.mxu0 0
      %1415 = vmatpush1.bf16.msra.mxu0 0
      %1416 = vmatprep.subr.bf16.mxu0 0
      %1417 = vmatpush1.bf16.msra.mxu0 0
      %1418 = vmatprep.subr.bf16.mxu0 0
      %1419 = vmatpush1.bf16.msra.mxu0 0
      %1420 = vmatprep.subr.bf16.mxu0 0
      %1421 = vmatpush1.bf16.msra.mxu0 0
      %1422 = vmatprep.subr.bf16.mxu0 0
      %1423 = vmatpush1.bf16.msra.mxu0 0
      %1424 = vmatprep.subr.bf16.mxu0 0
      %1425 = vmatpush1.bf16.msra.mxu0 0
      %1426 = vmatprep.subr.bf16.mxu0 %v1400
      %1427 = vmatpush1.bf16.msra.mxu0 %v1399
      %1428 = vmatprep.subr.bf16.mxu0 0
      %1429 = vmatpush2.bf16.msra.mxu0 0
      %1430 = vmatprep.subr.bf16.mxu0 0
      %1431 = vmatpush2.bf16.msra.mxu0 0
      %1432 = vmatprep.subr.bf16.mxu0 0
      %1433 = vmatpush2.bf16.msra.mxu0 0
      %1434 = vmatprep.subr.bf16.mxu0 0
      %1435 = vmatpush2.bf16.msra.mxu0 0
      %1436 = vmatprep.subr.bf16.mxu0 0
      %1437 = vmatpush2.bf16.msra.mxu0 0
      %1438 = vmatprep.subr.bf16.mxu0 0
      %1439 = vmatpush2.bf16.msra.mxu0 0
      %1440 = vmatprep.subr.bf16.mxu0 0
      %1441 = vmatpush2.bf16.msra.mxu0 0
      %1442 = vmatprep.subr.bf16.mxu0 0
      %1443 = vmatpush2.bf16.msra.mxu0 0
      %1444 = vmatprep.mubr.bf16.mxu0 0
      %1445 = vmatmul.mubr.bf16.gmra.mxu0 %v1410
      %v1446 = vpop.f32.mrf.mxu0
      %v1447 = vadd.f32 0.0, %v1446
      %v1448 = vpop.f32.mrf.mxu0
      %v1449 = vadd.f32 0.0, %v1448
      %v1450 = vpop.f32.mrf.mxu0
      %v1451 = vadd.f32 0.0, %v1450
      %v1452 = vpop.f32.mrf.mxu0
      %v1453 = vadd.f32 0.0, %v1452
      %1454 = vdwg.mxu0
      %v1455 = vadd.f32 %v1344, %v1447
      %v1456 = vadd.f32 %v1345, %v1449
      %v1457 = vadd.f32 %v1346, %v1451
      %v1458 = vadd.f32 %v1347, %v1453
      %1459 = vrot.lane.b32.xlu0 %v631, 111
      %v1460 = vpop.permute.xlu0 %1459
      %1461 = vrot.lane.b32.xlu0 %v632, 111
      %v1462 = vpop.permute.xlu0 %1461
      %vm1463 = vcmask 908288
      %v1464 = vsel %vm1463, %v1460, %v1462
      %vm1466 = vcmask 908288
      %v1469 = vsel %vm1466, %v1462, %v1460
      %s1471 = scalar_lea.vmem %s6, 16
      %v1472 = vld [vmem:[%s1471] sm:$0x3]
      %v1475 = vunpack.c.l.s4 1966171168
      %v1476 = vunpack.c.0.s8 %v1475
      %v1477 = vlaneseq
      %v1478 = vshrl.u32 %v1477, 7
      %v1479 = vsub.s32 %v1476, %v1478
      %v1480 = vrot.slane %v1472, %v1479
      %v1481 = vcombine.high %v1480, %v1480
      %v1483 = vunpack.c.l.s4 1966171168
      %v1484 = vunpack.c.0.s8 %v1483
      %v1485 = vlaneseq
      %v1486 = vshrl.u32 %v1485, 7
      %v1487 = vsub.s32 %v1484, %v1486
      %v1488 = vrot.slane %v1480, %v1487
      %v1490 = vunpack.c.l.s4 1966171168
      %v1491 = vunpack.c.0.s8 %v1490
      %v1492 = vlaneseq
      %v1493 = vshrl.u32 %v1492, 7
      %v1494 = vsub.s32 %v1491, %v1493
      %v1495 = vrot.slane %v1481, %v1494
      %v1497 = vpack.i.b16 %v1488, %v1488
      %v1499 = vlaneseq
      %v1500 = vshrl.u32 %v1499, 7
      %v1501 = vsub.s32 0, %v1500
      %v1502 = vrot.slane %v1497, %v1501
      %v1504 = vpack.i.b16 %v1495, %v1495
      %v1506 = vlaneseq
      %v1507 = vshrl.u32 %v1506, 7
      %v1508 = vsub.s32 0, %v1507
      %v1509 = vrot.slane %v1504, %v1508
      %v1510 = vmul.bf16 %v1464, %v1502
      %v1511 = vmul.bf16 %v1469, %v1509
      %s1512 = scalar_lea.vmem %s4, 64
      %v1513 = vld [vmem:[%s1512] sm:$0xf]
      %v1514 = vld [vmem:[%s1512 + $0x4] sm:$0xf]
      %v1517 = vunpack.c.l.b16 %v1513
      %v1518 = vunpack.c.l.b16 %v1514
      %v1519 = vpack.c.b16 %v1518, %v1517
      %v1521 = vsel %vm368, %v1519, 0
      %1523 = vmatprep.subr.bf16.mxu0 0
      %1524 = vmatpush1.bf16.msra.mxu0 0
      %1525 = vmatprep.subr.bf16.mxu0 0
      %1526 = vmatpush1.bf16.msra.mxu0 0
      %1527 = vmatprep.subr.bf16.mxu0 0
      %1528 = vmatpush1.bf16.msra.mxu0 0
      %1529 = vmatprep.subr.bf16.mxu0 0
      %1530 = vmatpush1.bf16.msra.mxu0 0
      %1531 = vmatprep.subr.bf16.mxu0 0
      %1532 = vmatpush1.bf16.msra.mxu0 0
      %1533 = vmatprep.subr.bf16.mxu0 0
      %1534 = vmatpush1.bf16.msra.mxu0 0
      %1535 = vmatprep.subr.bf16.mxu0 0
      %1536 = vmatpush1.bf16.msra.mxu0 0
      %1537 = vmatprep.subr.bf16.mxu0 %v1511
      %1538 = vmatpush1.bf16.msra.mxu0 %v1510
      %1539 = vmatprep.subr.bf16.mxu0 0
      %1540 = vmatpush2.bf16.msra.mxu0 0
      %1541 = vmatprep.subr.bf16.mxu0 0
      %1542 = vmatpush2.bf16.msra.mxu0 0
      %1543 = vmatprep.subr.bf16.mxu0 0
      %1544 = vmatpush2.bf16.msra.mxu0 0
      %1545 = vmatprep.subr.bf16.mxu0 0
      %1546 = vmatpush2.bf16.msra.mxu0 0
      %1547 = vmatprep.subr.bf16.mxu0 0
      %1548 = vmatpush2.bf16.msra.mxu0 0
      %1549 = vmatprep.subr.bf16.mxu0 0
      %1550 = vmatpush2.bf16.msra.mxu0 0
      %1551 = vmatprep.subr.bf16.mxu0 0
      %1552 = vmatpush2.bf16.msra.mxu0 0
      %1553 = vmatprep.subr.bf16.mxu0 0
      %1554 = vmatpush2.bf16.msra.mxu0 0
      %1555 = vmatprep.mubr.bf16.mxu0 0
      %1556 = vmatmul.mubr.bf16.gmra.mxu0 %v1521
      %v1557 = vpop.f32.mrf.mxu0
      %v1558 = vadd.f32 0.0, %v1557
      %v1559 = vpop.f32.mrf.mxu0
      %v1560 = vadd.f32 0.0, %v1559
      %v1561 = vpop.f32.mrf.mxu0
      %v1562 = vadd.f32 0.0, %v1561
      %v1563 = vpop.f32.mrf.mxu0
      %v1564 = vadd.f32 0.0, %v1563
      %1565 = vdwg.mxu0
      %v1566 = vadd.f32 %v1455, %v1558
      %v1567 = vadd.f32 %v1456, %v1560
      %v1568 = vadd.f32 %v1457, %v1562
      %v1569 = vadd.f32 %v1458, %v1564
      %v1570 = vld [vmem:[%s5] sm:$0xff]
      %v1571 = vld [vmem:[%s5 + $0x8] sm:$0xff]
      %1573 = vset.pattern.permute.xlu0 0
      %1574 = vperm.xlu0 %1573, %v1570
      %v1575 = vpop.permute.xlu0 %1574
      %1578 = vset.pattern.permute.xlu0 0
      %1579 = vperm.xlu0 %1578, %v1571
      %v1580 = vpop.permute.xlu0 %1579
      %v1582 = vadd.f32 %v1566, %v1575
      %v1583 = vadd.f32 %v1567, %v1575
      %v1584 = vadd.f32 %v1568, %v1580
      %v1585 = vadd.f32 %v1569, %v1580
      %v1586 = vld [vmem:[%s8] sm:$0xf]
      %v1587 = vld [vmem:[%s8 + $0x4] sm:$0xf]
      %v1588 = vld [vmem:[%s347] sm:$0xff]
      %v1589 = vld [vmem:[%s347 + $0x8] sm:$0xff]
      %v1590 = vpack.c.bf16 %v1588, %v1588
      %v1591 = vpack.c.bf16 %v1589, %v1589
      %v1594 = vunpack.c.l.b16 %v1586
      %v1595 = vunpack.c.l.b16 %v1587
      %v1596 = vpack.c.b16 %v1595, %v1594
      %vm1597 = vcmask 64512
      %v1599 = vsel %vm1597, %v1596, 0
      %vm1601 = vcmask 1043456
      %v1603 = vsel %vm1601, %v1590, 0
      %v1606 = vsel %vm1601, %v1591, 0
      %1608 = vmatprep.subr.bf16.mxu0 0
      %1609 = vmatpush1.bf16.msra.mxu0 0
      %1610 = vmatprep.subr.bf16.mxu0 0
      %1611 = vmatpush1.bf16.msra.mxu0 0
      %1612 = vmatprep.subr.bf16.mxu0 0
      %1613 = vmatpush1.bf16.msra.mxu0 0
      %1614 = vmatprep.subr.bf16.mxu0 0
      %1615 = vmatpush1.bf16.msra.mxu0 0
      %1616 = vmatprep.subr.bf16.mxu0 0
      %1617 = vmatpush1.bf16.msra.mxu0 0
      %1618 = vmatprep.subr.bf16.mxu0 0
      %1619 = vmatpush1.bf16.msra.mxu0 0
      %1620 = vmatprep.subr.bf16.mxu0 0
      %1621 = vmatpush1.bf16.msra.mxu0 0
      %1622 = vmatprep.subr.bf16.mxu0 %v1606
      %1623 = vmatpush1.bf16.msra.mxu0 %v1603
      %1624 = vmatprep.subr.bf16.mxu0 0
      %1625 = vmatpush2.bf16.msra.mxu0 0
      %1626 = vmatprep.subr.bf16.mxu0 0
      %1627 = vmatpush2.bf16.msra.mxu0 0
      %1628 = vmatprep.subr.bf16.mxu0 0
      %1629 = vmatpush2.bf16.msra.mxu0 0
      %1630 = vmatprep.subr.bf16.mxu0 0
      %1631 = vmatpush2.bf16.msra.mxu0 0
      %1632 = vmatprep.subr.bf16.mxu0 0
      %1633 = vmatpush2.bf16.msra.mxu0 0
      %1634 = vmatprep.subr.bf16.mxu0 0
      %1635 = vmatpush2.bf16.msra.mxu0 0
      %1636 = vmatprep.subr.bf16.mxu0 0
      %1637 = vmatpush2.bf16.msra.mxu0 0
      %1638 = vmatprep.subr.bf16.mxu0 0
      %1639 = vmatpush2.bf16.msra.mxu0 0
      %1640 = vmatprep.mubr.bf16.mxu0 0
      %1641 = vmatmul.mubr.bf16.gmra.mxu0 %v1599
      %v1642 = vpop.f32.mrf.mxu0
      %v1643 = vadd.f32 0.0, %v1642
      %v1644 = vpop.f32.mrf.mxu0
      %v1645 = vadd.f32 0.0, %v1644
      %v1646 = vpop.f32.mrf.mxu0
      %v1647 = vadd.f32 0.0, %v1646
      %v1648 = vpop.f32.mrf.mxu0
      %v1649 = vadd.f32 0.0, %v1648
      %1650 = vdwg.mxu0
      %v1651 = vadd.f32 %v1582, %v1643
      %v1652 = vadd.f32 %v1583, %v1645
      %v1653 = vadd.f32 %v1584, %v1647
      %v1654 = vadd.f32 %v1585, %v1649
      %v1655 = vpack.c.bf16 %v1653, %v1651
      %v1656 = vpack.c.bf16 %v1654, %v1652
      %v1659 = vunpack.c.l.b16 %v1655
      %v1660 = vunpack.c.l.b16 %v1656
      %v1661 = vunpack.c.h.b16 %v1655
      %v1662 = vunpack.c.h.b16 %v1656
      %v1663 = vpack.c.b16 %v1660, %v1659
      %v1664 = vpack.c.b16 %v1662, %v1661
      %1667 = vst [vmem:[%s352] sm:$0xff] %v1663
      %1668 = vst [vmem:[%s352 + $0x8] sm:$0xff] %v1664
      %p1669 = scmp.lt.s32.totalorder %s20, 1
      %s1670 = scalar_select %p1669, %s20, 1
      %s1671 = smul.addr %s1670, 4
      %s1672 = smul.addr %s1671, 4
      %s1673 = scalar_lea.vmem %s9, %s1672
      // Predicated region
      $region57: #{down_block_forward.5} parent=55 // pred_check
        %p1674 = pneg %p237
      $region58: #{down_block_forward.5} parent=55 // pred_check_branch
        %1676 = sbr.rel (%p1674) target = $region60
      $region59: #{down_block_forward.5} parent=55 // pred_region
        _
      $region60: #{down_block_forward.5} parent=55 // pred_fallthru
        _
    $region56: #{down_block_forward.5} parent=5 // pred_fallthru
      _
    %p1677 = scmp.le.s32.totalorder 2, %s15
    // Predicated region
    $region61: #{down_block_forward.5} parent=5 // pred_check
      %p1678 = pneg %p1677
    $region62: #{down_block_forward.5} parent=5 // pred_check_branch
      %1680 = sbr.rel (%p1678) target = $region64
    $region63: #{down_block_forward.5} parent=5 // pred_region
      %s1681 = ssub.s32 %s15, 2
      // Predicated region
      $region65: #{down_block_forward.5} parent=63 // pred_check
        %p1682 = pneg %p243
      $region66: #{down_block_forward.5} parent=63 // pred_check_branch
        %1684 = sbr.rel (%p1682) target = $region68
      $region67: #{down_block_forward.5} parent=63 // pred_region
        %p1685 = scmp.lt.s32.totalorder %s21, 1
        %s1686 = scalar_select %p1685, %s21, 1
        %s1687 = smul.addr %s1686, 4
        %s1688 = smul.addr %s1687, 4
        %s1689 = scalar_lea.vmem %s9, %s1688
      $region68: #{down_block_forward.5} parent=63 // pred_fallthru
        _
    $region64: #{down_block_forward.5} parent=5 // pred_fallthru
      _
  $region6: #{down_block_forward.5} parent=0 // loop_footer
    %s19 = sadd.s32 1, %s15
  $region7: #{down_block_forward.5} parent=0 // loop_footer_branch
    %14 = sbr.rel target = $region3
  $region8: #{down_block_forward.5} parent=0 // loop_exit
    _

// kernel: down_block_forward.7
$region0: #{down_block_forward.7}
  #allocation0 [shape = 'u32[]', space=smem, size = 0x4, offset = 0x4, fixed_abs, tag = 'smem constant byte address 0x4 - core index']
  #allocation1 [shape = 'u32[144,128]{1,0:T(1,128)}', space=vmem, size = 0x12000, scoped, tag = 'internal scratch']
  %s0 = inlined_call_operand.vmem [shape: bf16[2,64,64], index: 0, kind: input, shape index: {}]
  %s1 = inlined_call_operand.vmem [shape: bf16[9,16,64], index: 1, kind: input, shape index: {}]
  %s2 = inlined_call_operand.vmem [shape: f32[16,1], index: 2, kind: input, shape index: {}]
  %s3 = inlined_call_operand.vmem [shape: bf16[9,1,64], index: 3, kind: input, shape index: {}]
  %s4 = inlined_call_operand.vmem [shape: f32[2,16,64], index: 4, kind: output, shape index: {}]
  %s5 = sld [smem:[#allocation0]]
  $region49: #{down_block_forward.7} parent=0
    _
  %s7 = ssub.s32 1, %s5
  %s8 = scalar_select 0, %s7, %s5
  loop: start=0, step=1, limit=4
  $region2: #{down_block_forward.7} parent=0 // loop_pre_header
    _
  $region3: #{down_block_forward.7} parent=0 // loop_header
    %s10 = sphi 0, %s14
    %p11 = scmp.ge.s32.totalorder %s10, 4
    %s20 = sphi 0, %s22
    %s23 = sphi 0, %s20
    %s24 = sphi 0, %s23
    %s40 = sphi 0, %s24
    %s44 = sphi 0, %s44
    %s46 = sphi 0, %s44
    %s47 = sphi 0, %s46
    %s61 = sphi 0, %s47
    %s65 = sphi 0, %s65
    %s67 = sphi 0, %s65
    %s68 = sphi 0, %s67
    %s82 = sphi 0, %s68
    %s86 = sphi 0, %s86
    %s88 = sphi 0, %s86
    %s89 = sphi 0, %s88
    %s103 = sphi 0, %s89
    %s109 = sphi 0, %s111
    %s112 = sphi 0, %s109
    %s113 = sphi 0, %s112
    %s129 = sphi 0, %s113
  $region4: #{down_block_forward.7} parent=0 // loop_header_branch
    %13 = sbr.rel (%p11) target = $region8
  $region5: #{down_block_forward.7} parent=0 // loop_body
    %s15 = ssub.s32 %s10, 1
    %s16 = ssub.s32 %s10, 2
    %s17 = sadd.s32 %s10, 1
    %s18 = ssub.s32 %s10, %s17
    %p19 = scmp.eq.s32.totalorder %s18, 0
    %s21 = sadd.s32 %s20, 1
    %s22 = scalar_select %p19, %s20, %s21
    %p25 = pneg %p19
    %p26 = scmp.eq.s32.totalorder %s10, 1
    %p27 = por %p25, %p26
    %p28 = scmp.ne.s32.totalorder %s20, %s23
    %p29 = scmp.eq.s32.totalorder %s10, 0
    %p30 = por %p28, %p29
    %p31 = scmp.ne.s32.totalorder %s20, %s23
    %p32 = scmp.eq.s32.totalorder %s15, 1
    %p33 = por %p31, %p32
    %p34 = scmp.ne.s32.totalorder %s23, %s24
    %p35 = scmp.eq.s32.totalorder %s15, 0
    %p36 = por %p34, %p35
    %p37 = scmp.ne.s32.totalorder %s23, %s24
    %p38 = scmp.eq.s32.totalorder %s16, 1
    %p39 = por %p37, %p38
    %p41 = scmp.ne.s32.totalorder %s24, %s40
    %p42 = scmp.eq.s32.totalorder %s16, 0
    %p43 = por %p41, %p42
    %s45 = sadd.s32 %s44, 1
    %p48 = scmp.eq.s32.totalorder %s10, 1
    %p49 = scmp.ne.s32.totalorder %s44, %s46
    %p50 = scmp.eq.s32.totalorder %s10, 0
    %p51 = por %p49, %p50
    %p52 = scmp.ne.s32.totalorder %s44, %s46
    %p53 = scmp.eq.s32.totalorder %s15, 1
    %p54 = por %p52, %p53
    %p55 = scmp.ne.s32.totalorder %s46, %s47
    %p56 = scmp.eq.s32.totalorder %s15, 0
    %p57 = por %p55, %p56
    %p58 = scmp.ne.s32.totalorder %s46, %s47
    %p59 = scmp.eq.s32.totalorder %s16, 1
    %p60 = por %p58, %p59
    %p62 = scmp.ne.s32.totalorder %s47, %s61
    %p63 = scmp.eq.s32.totalorder %s16, 0
    %p64 = por %p62, %p63
    %s66 = sadd.s32 %s65, 1
    %p69 = scmp.eq.s32.totalorder %s10, 1
    %p70 = scmp.ne.s32.totalorder %s65, %s67
    %p71 = scmp.eq.s32.totalorder %s10, 0
    %p72 = por %p70, %p71
    %p73 = scmp.ne.s32.totalorder %s65, %s67
    %p74 = scmp.eq.s32.totalorder %s15, 1
    %p75 = por %p73, %p74
    %p76 = scmp.ne.s32.totalorder %s67, %s68
    %p77 = scmp.eq.s32.totalorder %s15, 0
    %p78 = por %p76, %p77
    %p79 = scmp.ne.s32.totalorder %s67, %s68
    %p80 = scmp.eq.s32.totalorder %s16, 1
    %p81 = por %p79, %p80
    %p83 = scmp.ne.s32.totalorder %s68, %s82
    %p84 = scmp.eq.s32.totalorder %s16, 0
    %p85 = por %p83, %p84
    %s87 = sadd.s32 %s86, 1
    %p90 = scmp.eq.s32.totalorder %s10, 1
    %p91 = scmp.ne.s32.totalorder %s86, %s88
    %p92 = scmp.eq.s32.totalorder %s10, 0
    %p93 = por %p91, %p92
    %p94 = scmp.ne.s32.totalorder %s86, %s88
    %p95 = scmp.eq.s32.totalorder %s15, 1
    %p96 = por %p94, %p95
    %p97 = scmp.ne.s32.totalorder %s88, %s89
    %p98 = scmp.eq.s32.totalorder %s15, 0
    %p99 = por %p97, %p98
    %p100 = scmp.ne.s32.totalorder %s88, %s89
    %p101 = scmp.eq.s32.totalorder %s16, 1
    %p102 = por %p100, %p101
    %p104 = scmp.ne.s32.totalorder %s89, %s103
    %p105 = scmp.eq.s32.totalorder %s16, 0
    %p106 = por %p104, %p105
    %s107 = ssub.s32 %s10, %s17
    %p108 = scmp.eq.s32.totalorder %s107, 0
    %s110 = sadd.s32 %s109, 1
    %s111 = scalar_select %p108, %s109, %s110
    %p114 = pneg %p108
    %p115 = scmp.eq.s32.totalorder %s10, 1
    %p116 = por %p114, %p115
    %p117 = scmp.ne.s32.totalorder %s109, %s112
    %p118 = scmp.eq.s32.totalorder %s10, 0
    %p119 = por %p117, %p118
    %p120 = scmp.ne.s32.totalorder %s109, %s112
    %p121 = scmp.eq.s32.totalorder %s15, 1
    %p122 = por %p120, %p121
    %p123 = scmp.ne.s32.totalorder %s112, %s113
    %p124 = scmp.eq.s32.totalorder %s15, 0
    %p125 = por %p123, %p124
    %p126 = scmp.ne.s32.totalorder %s112, %s113
    %p127 = scmp.eq.s32.totalorder %s16, 1
    %p128 = por %p126, %p127
    %p130 = scmp.ne.s32.totalorder %s113, %s129
    %p131 = scmp.eq.s32.totalorder %s16, 0
    %p132 = por %p130, %p131
    %p133 = scmp.le.s32.totalorder 1, %s10
    %p134 = scmp.lt.s32.totalorder %s10, 3
    %p135 = pnand %p133, %p134
    %p136 = pneg %p135
    // Predicated region
    $region9: #{down_block_forward.7} parent=5 // pred_check
      _
    $region10: #{down_block_forward.7} parent=5 // pred_check_branch
      %138 = sbr.rel (%p135) target = $region12
    $region11: #{down_block_forward.7} parent=5 // pred_region
      %s139 = ssub.s32 %s10, 1
      // Predicated region
      $region13: #{down_block_forward.7} parent=11 // pred_check
        %p140 = pneg %p57
      $region14: #{down_block_forward.7} parent=11 // pred_check_branch
        %142 = sbr.rel (%p140) target = $region16
      $region15: #{down_block_forward.7} parent=11 // pred_region
        _
      $region16: #{down_block_forward.7} parent=11 // pred_fallthru
        _
      // Predicated region
      $region17: #{down_block_forward.7} parent=11 // pred_check
        %p143 = pneg %p78
      $region18: #{down_block_forward.7} parent=11 // pred_check_branch
        %145 = sbr.rel (%p143) target = $region20
      $region19: #{down_block_forward.7} parent=11 // pred_region
        _
      $region20: #{down_block_forward.7} parent=11 // pred_fallthru
        _
      // Predicated region
      $region21: #{down_block_forward.7} parent=11 // pred_check
        %p146 = pneg %p99
      $region22: #{down_block_forward.7} parent=11 // pred_check_branch
        %148 = sbr.rel (%p146) target = $region24
      $region23: #{down_block_forward.7} parent=11 // pred_region
        _
      $region24: #{down_block_forward.7} parent=11 // pred_fallthru
        _
    $region12: #{down_block_forward.7} parent=5 // pred_fallthru
      _
    %p149 = scmp.lt.s32.totalorder %s10, 2
    // Predicated region
    $region25: #{down_block_forward.7} parent=5 // pred_check
      %p150 = pneg %p149
    $region26: #{down_block_forward.7} parent=5 // pred_check_branch
      %152 = sbr.rel (%p150) target = $region28
    $region27: #{down_block_forward.7} parent=5 // pred_region
      // Predicated region
      $region29: #{down_block_forward.7} parent=27 // pred_check
        %p153 = pneg %p30
      $region30: #{down_block_forward.7} parent=27 // pred_check_branch
        %155 = sbr.rel (%p153) target = $region32
      $region31: #{down_block_forward.7} parent=27 // pred_region
        %p156 = scmp.lt.s32.totalorder %s10, 1
        %s157 = scalar_select %p156, %s10, 1
        %s158 = smul.addr %s157, 8
        %s159 = smul.addr %s158, 4
        %s160 = scalar_lea.vmem %s0, %s159
      $region32: #{down_block_forward.7} parent=27 // pred_fallthru
        _
    $region28: #{down_block_forward.7} parent=5 // pred_fallthru
      _
    %p161 = scmp.le.s32.totalorder 1, %s10
    %p162 = scmp.lt.s32.totalorder %s10, 3
    %p163 = pnand %p161, %p162
    %p164 = pneg %p163
    // Predicated region
    $region33: #{down_block_forward.7} parent=5 // pred_check
      _
    $region34: #{down_block_forward.7} parent=5 // pred_check_branch
      %166 = sbr.rel (%p163) target = $region36
    $region35: #{down_block_forward.7} parent=5 // pred_region
      %s167 = ssub.s32 %s10, 1
      %p168 = scmp.lt.s32.totalorder %s15, 1
      %s169 = scalar_select %p168, %s15, 1
      %s170 = smul.addr %s169, 8
      %s171 = smul.addr %s170, 4
      %s172 = scalar_lea.vmem %s0, %s171
      %p173 = pneg %p36
      %p174 = pneg %p33
      %p175 = pneg %p57
      %p176 = pneg %p54
      %p177 = pneg %p78
      %p178 = pneg %p75
      %p179 = pneg %p99
      %p180 = pneg %p96
      %p181 = pneg %p125
      %p182 = pneg %p122
      %p183 = scmp.lt.s32.totalorder %s15, 1
      %s184 = scalar_select %p183, %s15, 1
      %s185 = smul.addr %s184, 2
      %s186 = smul.addr %s185, 8
      %s187 = scalar_lea.vmem %s4, %s186
      %p188 = scmp.lt.s32.totalorder %s15, 1
      %s189 = scalar_select %p188, %s15, 1
      %s190 = smul.addr %s189, 8
      %s191 = smul.addr %s190, 4
      %s192 = scalar_lea.vmem %s0, %s191
      %p193 = scmp.lt.s32.totalorder %s15, 1
      %s194 = scalar_select %p193, %s15, 1
      %s195 = smul.addr %s194, 2
      %s196 = smul.addr %s195, 8
      %s197 = scalar_lea.vmem %s4, %s196
      %v199 = vld [vmem:[%s192] sm:$0xf]
      %v200 = vld [vmem:[%s192 + $0x4] sm:$0xf]
      %v201 = vld [vmem:[%s192 + $0x8] sm:$0xf]
      %v202 = vld [vmem:[%s192 + $0xc] sm:$0xf]
      %v203 = vld [vmem:[%s192 + $0x10] sm:$0xf]
      %v204 = vld [vmem:[%s192 + $0x14] sm:$0xf]
      %v205 = vld [vmem:[%s192 + $0x18] sm:$0xf]
      %v206 = vld [vmem:[%s192 + $0x1c] sm:$0xf]
      %v215 = vunpack.c.l.b16 %v199
      %v216 = vunpack.c.l.b16 %v200
      %v217 = vunpack.c.l.b16 %v201
      %v218 = vunpack.c.l.b16 %v202
      %v219 = vunpack.c.l.b16 %v203
      %v220 = vunpack.c.l.b16 %v204
      %v221 = vunpack.c.l.b16 %v205
      %v222 = vunpack.c.l.b16 %v206
      %v223 = vpack.c.b16 %v216, %v215
      %v224 = vpack.c.b16 %v218, %v217
      %v225 = vpack.c.b16 %v220, %v219
      %v226 = vpack.c.b16 %v222, %v221
      %227 = vrot.lane.b32.xlu0 %v223, 73
      %v228 = vpop.permute.xlu0 %227
      %229 = vrot.lane.b32.xlu0 %v224, 73
      %v230 = vpop.permute.xlu0 %229
      %231 = vrot.lane.b32.xlu0 %v225, 73
      %v232 = vpop.permute.xlu0 %231
      %233 = vrot.lane.b32.xlu0 %v226, 73
      %v234 = vpop.permute.xlu0 %233
      %235 = vrot.lane.b32.xlu0 %v223, 9
      %v236 = vpop.permute.xlu0 %235
      %237 = vrot.lane.b32.xlu0 %v224, 9
      %v238 = vpop.permute.xlu0 %237
      %239 = vrot.lane.b32.xlu0 %v225, 9
      %v240 = vpop.permute.xlu0 %239
      %241 = vrot.lane.b32.xlu0 %v226, 9
      %v242 = vpop.permute.xlu0 %241
      %vm243 = vcmask 72704
      %v246 = vsel %vm243, %v228, %v236
      %v250 = vsel %vm243, %v230, %v238
      %v254 = vsel %vm243, %v232, %v240
      %v258 = vsel %vm243, %v234, %v242
      %v260 = vld [vmem:[%s3] sm:$0x1]
      %v262 = vpack.i.b16 %v260, %v260
      %v264 = vlaneseq
      %v265 = vshrl.u32 %v264, 7
      %v266 = vsub.s32 0, %v265
      %v267 = vrot.slane %v262, %v266
      %v268 = vmul.bf16 %v246, %v267
      %v269 = vmul.bf16 %v250, %v267
      %v270 = vmul.bf16 %v254, %v267
      %v271 = vmul.bf16 %v258, %v267
      %v272 = vld [vmem:[%s1] sm:$0xf]
      %v273 = vld [vmem:[%s1 + $0x4] sm:$0xf]
      %274 = vrot.lane.b32.xlu0 %v223, 72
      %v275 = vpop.permute.xlu0 %274
      %276 = vrot.lane.b32.xlu0 %v224, 72
      %v277 = vpop.permute.xlu0 %276
      %278 = vrot.lane.b32.xlu0 %v225, 72
      %v279 = vpop.permute.xlu0 %278
      %280 = vrot.lane.b32.xlu0 %v226, 72
      %v281 = vpop.permute.xlu0 %280
      %282 = vrot.lane.b32.xlu0 %v223, 8
      %v283 = vpop.permute.xlu0 %282
      %284 = vrot.lane.b32.xlu0 %v224, 8
      %v285 = vpop.permute.xlu0 %284
      %286 = vrot.lane.b32.xlu0 %v225, 8
      %v287 = vpop.permute.xlu0 %286
      %288 = vrot.lane.b32.xlu0 %v226, 8
      %v289 = vpop.permute.xlu0 %288
      %vm290 = vcmask 64512
      %v293 = vsel %vm290, %v275, %v283
      %v297 = vsel %vm290, %v277, %v285
      %v301 = vsel %vm290, %v279, %v287
      %v305 = vsel %vm290, %v281, %v289
      %s307 = scalar_lea.vmem %s3, 1
      %v308 = vld [vmem:[%s307] sm:$0x1]
      %v310 = vpack.i.b16 %v308, %v308
      %v312 = vlaneseq
      %v313 = vshrl.u32 %v312, 7
      %v314 = vsub.s32 0, %v313
      %v315 = vrot.slane %v310, %v314
      %v316 = vmul.bf16 %v293, %v315
      %v317 = vmul.bf16 %v297, %v315
      %v318 = vmul.bf16 %v301, %v315
      %v319 = vmul.bf16 %v305, %v315
      %s320 = scalar_lea.vmem %s1, 8
      %v321 = vld [vmem:[%s320] sm:$0xf]
      %v322 = vld [vmem:[%s320 + $0x4] sm:$0xf]
      %v325 = vunpack.c.l.b16 %v321
      %v326 = vunpack.c.l.b16 %v322
      %v327 = vpack.c.b16 %v326, %v325
      %vm328 = vcmask 523264
      %v330 = vsel %vm328, %v327, 0
      %332 = vmatprep.subr.bf16.mxu0 0
      %333 = vmatpush1.bf16.msra.mxu0 0
      %334 = vmatprep.subr.bf16.mxu0 0
      %335 = vmatpush1.bf16.msra.mxu0 0
      %336 = vmatprep.subr.bf16.mxu0 0
      %337 = vmatpush1.bf16.msra.mxu0 0
      %338 = vmatprep.subr.bf16.mxu0 0
      %339 = vmatpush1.bf16.msra.mxu0 0
      %340 = vmatprep.subr.bf16.mxu0 0
      %341 = vmatpush1.bf16.msra.mxu0 %v319
      %342 = vmatprep.subr.bf16.mxu0 0
      %343 = vmatpush1.bf16.msra.mxu0 %v318
      %344 = vmatprep.subr.bf16.mxu0 0
      %345 = vmatpush1.bf16.msra.mxu0 %v317
      %346 = vmatprep.subr.bf16.mxu0 0
      %347 = vmatpush1.bf16.msra.mxu0 %v316
      %348 = vmatprep.subr.bf16.mxu0 0
      %349 = vmatpush2.bf16.msra.mxu0 0
      %350 = vmatprep.subr.bf16.mxu0 0
      %351 = vmatpush2.bf16.msra.mxu0 0
      %352 = vmatprep.subr.bf16.mxu0 0
      %353 = vmatpush2.bf16.msra.mxu0 0
      %354 = vmatprep.subr.bf16.mxu0 0
      %355 = vmatpush2.bf16.msra.mxu0 0
      %356 = vmatprep.subr.bf16.mxu0 0
      %357 = vmatpush2.bf16.msra.mxu0 0
      %358 = vmatprep.subr.bf16.mxu0 0
      %359 = vmatpush2.bf16.msra.mxu0 0
      %360 = vmatprep.subr.bf16.mxu0 0
      %361 = vmatpush2.bf16.msra.mxu0 0
      %362 = vmatprep.subr.bf16.mxu0 0
      %363 = vmatpush2.bf16.msra.mxu0 0
      %364 = vmatprep.mubr.bf16.mxu0 0
      %365 = vmatmul.mubr.bf16.gmra.mxu0 %v330
      %v366 = vpop.f32.mrf.mxu0
      %v367 = vadd.f32 0.0, %v366
      %v368 = vpop.f32.mrf.mxu0
      %v369 = vpop.f32.mrf.mxu0
      %v370 = vadd.f32 0.0, %v369
      %v371 = vpop.f32.mrf.mxu0
      %372 = vdwg.mxu0
      %v375 = vunpack.c.l.b16 %v272
      %v376 = vunpack.c.l.b16 %v273
      %v377 = vpack.c.b16 %v376, %v375
      %v379 = vsel %vm328, %v377, 0
      %381 = vmatprep.subr.bf16.mxu0 0
      %382 = vmatpush1.bf16.msra.mxu0 0
      %383 = vmatprep.subr.bf16.mxu0 0
      %384 = vmatpush1.bf16.msra.mxu0 0
      %385 = vmatprep.subr.bf16.mxu0 0
      %386 = vmatpush1.bf16.msra.mxu0 0
      %387 = vmatprep.subr.bf16.mxu0 0
      %388 = vmatpush1.bf16.msra.mxu0 0
      %389 = vmatprep.subr.bf16.mxu0 0
      %390 = vmatpush1.bf16.msra.mxu0 %v271
      %391 = vmatprep.subr.bf16.mxu0 0
      %392 = vmatpush1.bf16.msra.mxu0 %v270
      %393 = vmatprep.subr.bf16.mxu0 0
      %394 = vmatpush1.bf16.msra.mxu0 %v269
      %395 = vmatprep.subr.bf16.mxu0 0
      %396 = vmatpush1.bf16.msra.mxu0 %v268
      %397 = vmatprep.subr.bf16.mxu0 0
      %398 = vmatpush2.bf16.msra.mxu0 0
      %399 = vmatprep.subr.bf16.mxu0 0
      %400 = vmatpush2.bf16.msra.mxu0 0
      %401 = vmatprep.subr.bf16.mxu0 0
      %402 = vmatpush2.bf16.msra.mxu0 0
      %403 = vmatprep.subr.bf16.mxu0 0
      %404 = vmatpush2.bf16.msra.mxu0 0
      %405 = vmatprep.subr.bf16.mxu0 0
      %406 = vmatpush2.bf16.msra.mxu0 0
      %407 = vmatprep.subr.bf16.mxu0 0
      %408 = vmatpush2.bf16.msra.mxu0 0
      %409 = vmatprep.subr.bf16.mxu0 0
      %410 = vmatpush2.bf16.msra.mxu0 0
      %411 = vmatprep.subr.bf16.mxu0 0
      %412 = vmatpush2.bf16.msra.mxu0 0
      %413 = vmatprep.mubr.bf16.mxu0 0
      %414 = vmatmul.mubr.bf16.gmra.mxu0 %v379
      %v415 = vpop.f32.mrf.mxu0
      %v416 = vadd.f32 %v367, %v415
      %v417 = vpop.f32.mrf.mxu0
      %v418 = vpop.f32.mrf.mxu0
      %v419 = vadd.f32 %v370, %v418
      %v420 = vpop.f32.mrf.mxu0
      %421 = vdwg.mxu0
      %422 = vrot.lane.b32.xlu0 %v223, 71
      %v423 = vpop.permute.xlu0 %422
      %424 = vrot.lane.b32.xlu0 %v224, 71
      %v425 = vpop.permute.xlu0 %424
      %426 = vrot.lane.b32.xlu0 %v225, 71
      %v427 = vpop.permute.xlu0 %426
      %428 = vrot.lane.b32.xlu0 %v226, 71
      %v429 = vpop.permute.xlu0 %428
      %430 = vrot.lane.b32.xlu0 %v223, 7
      %v431 = vpop.permute.xlu0 %430
      %432 = vrot.lane.b32.xlu0 %v224, 7
      %v433 = vpop.permute.xlu0 %432
      %434 = vrot.lane.b32.xlu0 %v225, 7
      %v435 = vpop.permute.xlu0 %434
      %436 = vrot.lane.b32.xlu0 %v226, 7
      %v437 = vpop.permute.xlu0 %436
      %vm438 = vcmask 56320
      %v441 = vsel %vm438, %v423, %v431
      %v445 = vsel %vm438, %v425, %v433
      %v449 = vsel %vm438, %v427, %v435
      %v453 = vsel %vm438, %v429, %v437
      %s455 = scalar_lea.vmem %s3, 2
      %v456 = vld [vmem:[%s455] sm:$0x1]
      %v458 = vpack.i.b16 %v456, %v456
      %v460 = vlaneseq
      %v461 = vshrl.u32 %v460, 7
      %v462 = vsub.s32 0, %v461
      %v463 = vrot.slane %v458, %v462
      %v464 = vmul.bf16 %v441, %v463
      %v465 = vmul.bf16 %v445, %v463
      %v466 = vmul.bf16 %v449, %v463
      %v467 = vmul.bf16 %v453, %v463
      %s468 = scalar_lea.vmem %s1, 16
      %v469 = vld [vmem:[%s468] sm:$0xf]
      %v470 = vld [vmem:[%s468 + $0x4] sm:$0xf]
      %v473 = vunpack.c.l.b16 %v469
      %v474 = vunpack.c.l.b16 %v470
      %v475 = vpack.c.b16 %v474, %v473
      %v477 = vsel %vm328, %v475, 0
      %479 = vmatprep.subr.bf16.mxu0 0
      %480 = vmatpush1.bf16.msra.mxu0 0
      %481 = vmatprep.subr.bf16.mxu0 0
      %482 = vmatpush1.bf16.msra.mxu0 0
      %483 = vmatprep.subr.bf16.mxu0 0
      %484 = vmatpush1.bf16.msra.mxu0 0
      %485 = vmatprep.subr.bf16.mxu0 0
      %486 = vmatpush1.bf16.msra.mxu0 0
      %487 = vmatprep.subr.bf16.mxu0 0
      %488 = vmatpush1.bf16.msra.mxu0 %v467
      %489 = vmatprep.subr.bf16.mxu0 0
      %490 = vmatpush1.bf16.msra.mxu0 %v466
      %491 = vmatprep.subr.bf16.mxu0 0
      %492 = vmatpush1.bf16.msra.mxu0 %v465
      %493 = vmatprep.subr.bf16.mxu0 0
      %494 = vmatpush1.bf16.msra.mxu0 %v464
      %495 = vmatprep.subr.bf16.mxu0 0
      %496 = vmatpush2.bf16.msra.mxu0 0
      %497 = vmatprep.subr.bf16.mxu0 0
      %498 = vmatpush2.bf16.msra.mxu0 0
      %499 = vmatprep.subr.bf16.mxu0 0
      %500 = vmatpush2.bf16.msra.mxu0 0
      %501 = vmatprep.subr.bf16.mxu0 0
      %502 = vmatpush2.bf16.msra.mxu0 0
      %503 = vmatprep.subr.bf16.mxu0 0
      %504 = vmatpush2.bf16.msra.mxu0 0
      %505 = vmatprep.subr.bf16.mxu0 0
      %506 = vmatpush2.bf16.msra.mxu0 0
      %507 = vmatprep.subr.bf16.mxu0 0
      %508 = vmatpush2.bf16.msra.mxu0 0
      %509 = vmatprep.subr.bf16.mxu0 0
      %510 = vmatpush2.bf16.msra.mxu0 0
      %511 = vmatprep.mubr.bf16.mxu0 0
      %512 = vmatmul.mubr.bf16.gmra.mxu0 %v477
      %v513 = vpop.f32.mrf.mxu0
      %v514 = vadd.f32 0.0, %v513
      %v515 = vpop.f32.mrf.mxu0
      %v516 = vpop.f32.mrf.mxu0
      %v517 = vadd.f32 0.0, %v516
      %v518 = vpop.f32.mrf.mxu0
      %519 = vdwg.mxu0
      %v520 = vadd.f32 %v416, %v514
      %v521 = vadd.f32 %v419, %v517
      %522 = vrot.lane.b32.xlu0 %v223, 65
      %v523 = vpop.permute.xlu0 %522
      %524 = vrot.lane.b32.xlu0 %v224, 65
      %v525 = vpop.permute.xlu0 %524
      %526 = vrot.lane.b32.xlu0 %v225, 65
      %v527 = vpop.permute.xlu0 %526
      %528 = vrot.lane.b32.xlu0 %v226, 65
      %v529 = vpop.permute.xlu0 %528
      %530 = vrot.lane.b32.xlu0 %v223, 1
      %v531 = vpop.permute.xlu0 %530
      %532 = vrot.lane.b32.xlu0 %v224, 1
      %v533 = vpop.permute.xlu0 %532
      %534 = vrot.lane.b32.xlu0 %v225, 1
      %v535 = vpop.permute.xlu0 %534
      %536 = vrot.lane.b32.xlu0 %v226, 1
      %v537 = vpop.permute.xlu0 %536
      %vm538 = vcmask 7168
      %v541 = vsel %vm538, %v523, %v531
      %v545 = vsel %vm538, %v525, %v533
      %v549 = vsel %vm538, %v527, %v535
      %v553 = vsel %vm538, %v529, %v537
      %s555 = scalar_lea.vmem %s3, 3
      %v556 = vld [vmem:[%s555] sm:$0x1]
      %v558 = vpack.i.b16 %v556, %v556
      %v560 = vlaneseq
      %v561 = vshrl.u32 %v560, 7
      %v562 = vsub.s32 0, %v561
      %v563 = vrot.slane %v558, %v562
      %v564 = vmul.bf16 %v541, %v563
      %v565 = vmul.bf16 %v545, %v563
      %v566 = vmul.bf16 %v549, %v563
      %v567 = vmul.bf16 %v553, %v563
      %s568 = scalar_lea.vmem %s1, 24
      %v569 = vld [vmem:[%s568] sm:$0xf]
      %v570 = vld [vmem:[%s568 + $0x4] sm:$0xf]
      %v573 = vunpack.c.l.b16 %v569
      %v574 = vunpack.c.l.b16 %v570
      %v575 = vpack.c.b16 %v574, %v573
      %v577 = vsel %vm328, %v575, 0
      %579 = vmatprep.subr.bf16.mxu0 0
      %580 = vmatpush1.bf16.msra.mxu0 0
      %581 = vmatprep.subr.bf16.mxu0 0
      %582 = vmatpush1.bf16.msra.mxu0 0
      %583 = vmatprep.subr.bf16.mxu0 0
      %584 = vmatpush1.bf16.msra.mxu0 0
      %585 = vmatprep.subr.bf16.mxu0 0
      %586 = vmatpush1.bf16.msra.mxu0 0
      %587 = vmatprep.subr.bf16.mxu0 0
      %588 = vmatpush1.bf16.msra.mxu0 %v567
      %589 = vmatprep.subr.bf16.mxu0 0
      %590 = vmatpush1.bf16.msra.mxu0 %v566
      %591 = vmatprep.subr.bf16.mxu0 0
      %592 = vmatpush1.bf16.msra.mxu0 %v565
      %593 = vmatprep.subr.bf16.mxu0 0
      %594 = vmatpush1.bf16.msra.mxu0 %v564
      %595 = vmatprep.subr.bf16.mxu0 0
      %596 = vmatpush2.bf16.msra.mxu0 0
      %597 = vmatprep.subr.bf16.mxu0 0
      %598 = vmatpush2.bf16.msra.mxu0 0
      %599 = vmatprep.subr.bf16.mxu0 0
      %600 = vmatpush2.bf16.msra.mxu0 0
      %601 = vmatprep.subr.bf16.mxu0 0
      %602 = vmatpush2.bf16.msra.mxu0 0
      %603 = vmatprep.subr.bf16.mxu0 0
      %604 = vmatpush2.bf16.msra.mxu0 0
      %605 = vmatprep.subr.bf16.mxu0 0
      %606 = vmatpush2.bf16.msra.mxu0 0
      %607 = vmatprep.subr.bf16.mxu0 0
      %608 = vmatpush2.bf16.msra.mxu0 0
      %609 = vmatprep.subr.bf16.mxu0 0
      %610 = vmatpush2.bf16.msra.mxu0 0
      %611 = vmatprep.mubr.bf16.mxu0 0
      %612 = vmatmul.mubr.bf16.gmra.mxu0 %v577
      %v613 = vpop.f32.mrf.mxu0
      %v614 = vadd.f32 0.0, %v613
      %v615 = vpop.f32.mrf.mxu0
      %v616 = vpop.f32.mrf.mxu0
      %v617 = vadd.f32 0.0, %v616
      %v618 = vpop.f32.mrf.mxu0
      %619 = vdwg.mxu0
      %v620 = vadd.f32 %v520, %v614
      %v621 = vadd.f32 %v521, %v617
      %s622 = scalar_lea.vmem %s1, 32
      %v623 = vld [vmem:[%s622] sm:$0xf]
      %v624 = vld [vmem:[%s622 + $0x4] sm:$0xf]
      %v627 = vunpack.c.l.b16 %v623
      %v628 = vunpack.c.l.b16 %v624
      %v629 = vpack.c.b16 %v628, %v627
      %v635 = vsel %vm328, %v629, 0
      %637 = vmatprep.subr.bf16.mxu0 0
      %638 = vmatpush1.bf16.msra.mxu0 0
      %639 = vmatprep.subr.bf16.mxu0 0
      %640 = vmatpush1.bf16.msra.mxu0 0
      %641 = vmatprep.subr.bf16.mxu0 0
      %642 = vmatpush1.bf16.msra.mxu0 0
      %643 = vmatprep.subr.bf16.mxu0 0
      %644 = vmatpush1.bf16.msra.mxu0 0
      %645 = vmatprep.subr.bf16.mxu0 0
      %646 = vmatpush1.bf16.msra.mxu0 %v226
      %647 = vmatprep.subr.bf16.mxu0 0
      %648 = vmatpush1.bf16.msra.mxu0 %v225
      %649 = vmatprep.subr.bf16.mxu0 0
      %650 = vmatpush1.bf16.msra.mxu0 %v224
      %651 = vmatprep.subr.bf16.mxu0 0
      %652 = vmatpush1.bf16.msra.mxu0 %v223
      %653 = vmatprep.subr.bf16.mxu0 0
      %654 = vmatpush2.bf16.msra.mxu0 0
      %655 = vmatprep.subr.bf16.mxu0 0
      %656 = vmatpush2.bf16.msra.mxu0 0
      %657 = vmatprep.subr.bf16.mxu0 0
      %658 = vmatpush2.bf16.msra.mxu0 0
      %659 = vmatprep.subr.bf16.mxu0 0
      %660 = vmatpush2.bf16.msra.mxu0 0
      %661 = vmatprep.subr.bf16.mxu0 0
      %662 = vmatpush2.bf16.msra.mxu0 0
      %663 = vmatprep.subr.bf16.mxu0 0
      %664 = vmatpush2.bf16.msra.mxu0 0
      %665 = vmatprep.subr.bf16.mxu0 0
      %666 = vmatpush2.bf16.msra.mxu0 0
      %667 = vmatprep.subr.bf16.mxu0 0
      %668 = vmatpush2.bf16.msra.mxu0 0
      %669 = vmatprep.mubr.bf16.mxu0 0
      %670 = vmatmul.mubr.bf16.gmra.mxu0 %v635
      %v671 = vpop.f32.mrf.mxu0
      %v672 = vadd.f32 0.0, %v671
      %v673 = vpop.f32.mrf.mxu0
      %v674 = vpop.f32.mrf.mxu0
      %v675 = vadd.f32 0.0, %v674
      %v676 = vpop.f32.mrf.mxu0
      %677 = vdwg.mxu0
      %v678 = vadd.f32 %v620, %v672
      %v679 = vadd.f32 %v621, %v675
      %680 = vrot.lane.b32.xlu0 %v223, 127
      %v681 = vpop.permute.xlu0 %680
      %682 = vrot.lane.b32.xlu0 %v224, 127
      %v683 = vpop.permute.xlu0 %682
      %684 = vrot.lane.b32.xlu0 %v225, 127
      %v685 = vpop.permute.xlu0 %684
      %686 = vrot.lane.b32.xlu0 %v226, 127
      %v687 = vpop.permute.xlu0 %686
      %688 = vrot.lane.b32.xlu0 %v223, 63
      %v689 = vpop.permute.xlu0 %688
      %690 = vrot.lane.b32.xlu0 %v224, 63
      %v691 = vpop.permute.xlu0 %690
      %692 = vrot.lane.b32.xlu0 %v225, 63
      %v693 = vpop.permute.xlu0 %692
      %694 = vrot.lane.b32.xlu0 %v226, 63
      %v695 = vpop.permute.xlu0 %694
      %vm696 = vcmask 515072
      %v699 = vsel %vm696, %v681, %v689
      %v703 = vsel %vm696, %v683, %v691
      %v707 = vsel %vm696, %v685, %v693
      %v711 = vsel %vm696, %v687, %v695
      %s713 = scalar_lea.vmem %s3, 5
      %v714 = vld [vmem:[%s713] sm:$0x1]
      %v716 = vpack.i.b16 %v714, %v714
      %v718 = vlaneseq
      %v719 = vshrl.u32 %v718, 7
      %v720 = vsub.s32 0, %v719
      %v721 = vrot.slane %v716, %v720
      %v722 = vmul.bf16 %v699, %v721
      %v723 = vmul.bf16 %v703, %v721
      %v724 = vmul.bf16 %v707, %v721
      %v725 = vmul.bf16 %v711, %v721
      %s726 = scalar_lea.vmem %s1, 40
      %v727 = vld [vmem:[%s726] sm:$0xf]
      %v728 = vld [vmem:[%s726 + $0x4] sm:$0xf]
      %v731 = vunpack.c.l.b16 %v727
      %v732 = vunpack.c.l.b16 %v728
      %v733 = vpack.c.b16 %v732, %v731
      %v735 = vsel %vm328, %v733, 0
      %737 = vmatprep.subr.bf16.mxu0 0
      %738 = vmatpush1.bf16.msra.mxu0 0
      %739 = vmatprep.subr.bf16.mxu0 0
      %740 = vmatpush1.bf16.msra.mxu0 0
      %741 = vmatprep.subr.bf16.mxu0 0
      %742 = vmatpush1.bf16.msra.mxu0 0
      %743 = vmatprep.subr.bf16.mxu0 0
      %744 = vmatpush1.bf16.msra.mxu0 0
      %745 = vmatprep.subr.bf16.mxu0 0
      %746 = vmatpush1.bf16.msra.mxu0 %v725
      %747 = vmatprep.subr.bf16.mxu0 0
      %748 = vmatpush1.bf16.msra.mxu0 %v724
      %749 = vmatprep.subr.bf16.mxu0 0
      %750 = vmatpush1.bf16.msra.mxu0 %v723
      %751 = vmatprep.subr.bf16.mxu0 0
      %752 = vmatpush1.bf16.msra.mxu0 %v722
      %753 = vmatprep.subr.bf16.mxu0 0
      %754 = vmatpush2.bf16.msra.mxu0 0
      %755 = vmatprep.subr.bf16.mxu0 0
      %756 = vmatpush2.bf16.msra.mxu0 0
      %757 = vmatprep.subr.bf16.mxu0 0
      %758 = vmatpush2.bf16.msra.mxu0 0
      %759 = vmatprep.subr.bf16.mxu0 0
      %760 = vmatpush2.bf16.msra.mxu0 0
      %761 = vmatprep.subr.bf16.mxu0 0
      %762 = vmatpush2.bf16.msra.mxu0 0
      %763 = vmatprep.subr.bf16.mxu0 0
      %764 = vmatpush2.bf16.msra.mxu0 0
      %765 = vmatprep.subr.bf16.mxu0 0
      %766 = vmatpush2.bf16.msra.mxu0 0
      %767 = vmatprep.subr.bf16.mxu0 0
      %768 = vmatpush2.bf16.msra.mxu0 0
      %769 = vmatprep.mubr.bf16.mxu0 0
      %770 = vmatmul.mubr.bf16.gmra.mxu0 %v735
      %v771 = vpop.f32.mrf.mxu0
      %v772 = vadd.f32 0.0, %v771
      %v773 = vpop.f32.mrf.mxu0
      %v774 = vpop.f32.mrf.mxu0
      %v775 = vadd.f32 0.0, %v774
      %v776 = vpop.f32.mrf.mxu0
      %777 = vdwg.mxu0
      %v778 = vadd.f32 %v678, %v772
      %v779 = vadd.f32 %v679, %v775
      %780 = vrot.lane.b32.xlu0 %v223, 121
      %v781 = vpop.permute.xlu0 %780
      %782 = vrot.lane.b32.xlu0 %v224, 121
      %v783 = vpop.permute.xlu0 %782
      %784 = vrot.lane.b32.xlu0 %v225, 121
      %v785 = vpop.permute.xlu0 %784
      %786 = vrot.lane.b32.xlu0 %v226, 121
      %v787 = vpop.permute.xlu0 %786
      %788 = vrot.lane.b32.xlu0 %v223, 57
      %v789 = vpop.permute.xlu0 %788
      %790 = vrot.lane.b32.xlu0 %v224, 57
      %v791 = vpop.permute.xlu0 %790
      %792 = vrot.lane.b32.xlu0 %v225, 57
      %v793 = vpop.permute.xlu0 %792
      %794 = vrot.lane.b32.xlu0 %v226, 57
      %v795 = vpop.permute.xlu0 %794
      %vm796 = vcmask 465920
      %v799 = vsel %vm796, %v781, %v789
      %v803 = vsel %vm796, %v783, %v791
      %v807 = vsel %vm796, %v785, %v793
      %v811 = vsel %vm796, %v787, %v795
      %s813 = scalar_lea.vmem %s3, 6
      %v814 = vld [vmem:[%s813] sm:$0x1]
      %v816 = vpack.i.b16 %v814, %v814
      %v818 = vlaneseq
      %v819 = vshrl.u32 %v818, 7
      %v820 = vsub.s32 0, %v819
      %v821 = vrot.slane %v816, %v820
      %v822 = vmul.bf16 %v799, %v821
      %v823 = vmul.bf16 %v803, %v821
      %v824 = vmul.bf16 %v807, %v821
      %v825 = vmul.bf16 %v811, %v821
      %s826 = scalar_lea.vmem %s1, 48
      %v827 = vld [vmem:[%s826] sm:$0xf]
      %v828 = vld [vmem:[%s826 + $0x4] sm:$0xf]
      %v831 = vunpack.c.l.b16 %v827
      %v832 = vunpack.c.l.b16 %v828
      %v833 = vpack.c.b16 %v832, %v831
      %v835 = vsel %vm328, %v833, 0
      %837 = vmatprep.subr.bf16.mxu0 0
      %838 = vmatpush1.bf16.msra.mxu0 0
      %839 = vmatprep.subr.bf16.mxu0 0
      %840 = vmatpush1.bf16.msra.mxu0 0
      %841 = vmatprep.subr.bf16.mxu0 0
      %842 = vmatpush1.bf16.msra.mxu0 0
      %843 = vmatprep.subr.bf16.mxu0 0
      %844 = vmatpush1.bf16.msra.mxu0 0
      %845 = vmatprep.subr.bf16.mxu0 0
      %846 = vmatpush1.bf16.msra.mxu0 %v825
      %847 = vmatprep.subr.bf16.mxu0 0
      %848 = vmatpush1.bf16.msra.mxu0 %v824
      %849 = vmatprep.subr.bf16.mxu0 0
      %850 = vmatpush1.bf16.msra.mxu0 %v823
      %851 = vmatprep.subr.bf16.mxu0 0
      %852 = vmatpush1.bf16.msra.mxu0 %v822
      %853 = vmatprep.subr.bf16.mxu0 0
      %854 = vmatpush2.bf16.msra.mxu0 0
      %855 = vmatprep.subr.bf16.mxu0 0
      %856 = vmatpush2.bf16.msra.mxu0 0
      %857 = vmatprep.subr.bf16.mxu0 0
      %858 = vmatpush2.bf16.msra.mxu0 0
      %859 = vmatprep.subr.bf16.mxu0 0
      %860 = vmatpush2.bf16.msra.mxu0 0
      %861 = vmatprep.subr.bf16.mxu0 0
      %862 = vmatpush2.bf16.msra.mxu0 0
      %863 = vmatprep.subr.bf16.mxu0 0
      %864 = vmatpush2.bf16.msra.mxu0 0
      %865 = vmatprep.subr.bf16.mxu0 0
      %866 = vmatpush2.bf16.msra.mxu0 0
      %867 = vmatprep.subr.bf16.mxu0 0
      %868 = vmatpush2.bf16.msra.mxu0 0
      %869 = vmatprep.mubr.bf16.mxu0 0
      %870 = vmatmul.mubr.bf16.gmra.mxu0 %v835
      %v871 = vpop.f32.mrf.mxu0
      %v872 = vadd.f32 0.0, %v871
      %v873 = vpop.f32.mrf.mxu0
      %v874 = vpop.f32.mrf.mxu0
      %v875 = vadd.f32 0.0, %v874
      %v876 = vpop.f32.mrf.mxu0
      %877 = vdwg.mxu0
      %v878 = vadd.f32 %v778, %v872
      %v879 = vadd.f32 %v779, %v875
      %880 = vrot.lane.b32.xlu0 %v223, 120
      %v881 = vpop.permute.xlu0 %880
      %882 = vrot.lane.b32.xlu0 %v224, 120
      %v883 = vpop.permute.xlu0 %882
      %884 = vrot.lane.b32.xlu0 %v225, 120
      %v885 = vpop.permute.xlu0 %884
      %886 = vrot.lane.b32.xlu0 %v226, 120
      %v887 = vpop.permute.xlu0 %886
      %888 = vrot.lane.b32.xlu0 %v223, 56
      %v889 = vpop.permute.xlu0 %888
      %890 = vrot.lane.b32.xlu0 %v224, 56
      %v891 = vpop.permute.xlu0 %890
      %892 = vrot.lane.b32.xlu0 %v225, 56
      %v893 = vpop.permute.xlu0 %892
      %894 = vrot.lane.b32.xlu0 %v226, 56
      %v895 = vpop.permute.xlu0 %894
      %vm896 = vcmask 457728
      %v899 = vsel %vm896, %v881, %v889
      %v903 = vsel %vm896, %v883, %v891
      %v907 = vsel %vm896, %v885, %v893
      %v911 = vsel %vm896, %v887, %v895
      %s913 = scalar_lea.vmem %s3, 7
      %v914 = vld [vmem:[%s913] sm:$0x1]
      %v916 = vpack.i.b16 %v914, %v914
      %v918 = vlaneseq
      %v919 = vshrl.u32 %v918, 7
      %v920 = vsub.s32 0, %v919
      %v921 = vrot.slane %v916, %v920
      %v922 = vmul.bf16 %v899, %v921
      %v923 = vmul.bf16 %v903, %v921
      %v924 = vmul.bf16 %v907, %v921
      %v925 = vmul.bf16 %v911, %v921
      %s926 = scalar_lea.vmem %s1, 56
      %v927 = vld [vmem:[%s926] sm:$0xf]
      %v928 = vld [vmem:[%s926 + $0x4] sm:$0xf]
      %v931 = vunpack.c.l.b16 %v927
      %v932 = vunpack.c.l.b16 %v928
      %v933 = vpack.c.b16 %v932, %v931
      %v935 = vsel %vm328, %v933, 0
      %937 = vmatprep.subr.bf16.mxu0 0
      %938 = vmatpush1.bf16.msra.mxu0 0
      %939 = vmatprep.subr.bf16.mxu0 0
      %940 = vmatpush1.bf16.msra.mxu0 0
      %941 = vmatprep.subr.bf16.mxu0 0
      %942 = vmatpush1.bf16.msra.mxu0 0
      %943 = vmatprep.subr.bf16.mxu0 0
      %944 = vmatpush1.bf16.msra.mxu0 0
      %945 = vmatprep.subr.bf16.mxu0 0
      %946 = vmatpush1.bf16.msra.mxu0 %v925
      %947 = vmatprep.subr.bf16.mxu0 0
      %948 = vmatpush1.bf16.msra.mxu0 %v924
      %949 = vmatprep.subr.bf16.mxu0 0
      %950 = vmatpush1.bf16.msra.mxu0 %v923
      %951 = vmatprep.subr.bf16.mxu0 0
      %952 = vmatpush1.bf16.msra.mxu0 %v922
      %953 = vmatprep.subr.bf16.mxu0 0
      %954 = vmatpush2.bf16.msra.mxu0 0
      %955 = vmatprep.subr.bf16.mxu0 0
      %956 = vmatpush2.bf16.msra.mxu0 0
      %957 = vmatprep.subr.bf16.mxu0 0
      %958 = vmatpush2.bf16.msra.mxu0 0
      %959 = vmatprep.subr.bf16.mxu0 0
      %960 = vmatpush2.bf16.msra.mxu0 0
      %961 = vmatprep.subr.bf16.mxu0 0
      %962 = vmatpush2.bf16.msra.mxu0 0
      %963 = vmatprep.subr.bf16.mxu0 0
      %964 = vmatpush2.bf16.msra.mxu0 0
      %965 = vmatprep.subr.bf16.mxu0 0
      %966 = vmatpush2.bf16.msra.mxu0 0
      %967 = vmatprep.subr.bf16.mxu0 0
      %968 = vmatpush2.bf16.msra.mxu0 0
      %969 = vmatprep.mubr.bf16.mxu0 0
      %970 = vmatmul.mubr.bf16.gmra.mxu0 %v935
      %v971 = vpop.f32.mrf.mxu0
      %v972 = vadd.f32 0.0, %v971
      %v973 = vpop.f32.mrf.mxu0
      %v974 = vpop.f32.mrf.mxu0
      %v975 = vadd.f32 0.0, %v974
      %v976 = vpop.f32.mrf.mxu0
      %977 = vdwg.mxu0
      %v978 = vadd.f32 %v878, %v972
      %v979 = vadd.f32 %v879, %v975
      %980 = vrot.lane.b32.xlu0 %v223, 119
      %v981 = vpop.permute.xlu0 %980
      %982 = vrot.lane.b32.xlu0 %v224, 119
      %v983 = vpop.permute.xlu0 %982
      %984 = vrot.lane.b32.xlu0 %v225, 119
      %v985 = vpop.permute.xlu0 %984
      %986 = vrot.lane.b32.xlu0 %v226, 119
      %v987 = vpop.permute.xlu0 %986
      %988 = vrot.lane.b32.xlu0 %v223, 55
      %v989 = vpop.permute.xlu0 %988
      %990 = vrot.lane.b32.xlu0 %v224, 55
      %v991 = vpop.permute.xlu0 %990
      %992 = vrot.lane.b32.xlu0 %v225, 55
      %v993 = vpop.permute.xlu0 %992
      %994 = vrot.lane.b32.xlu0 %v226, 55
      %v995 = vpop.permute.xlu0 %994
      %vm996 = vcmask 449536
      %v999 = vsel %vm996, %v981, %v989
      %v1003 = vsel %vm996, %v983, %v991
      %v1007 = vsel %vm996, %v985, %v993
      %v1011 = vsel %vm996, %v987, %v995
      %s1013 = scalar_lea.vmem %s3, 8
      %v1014 = vld [vmem:[%s1013] sm:$0x1]
      %v1016 = vpack.i.b16 %v1014, %v1014
      %v1018 = vlaneseq
      %v1019 = vshrl.u32 %v1018, 7
      %v1020 = vsub.s32 0, %v1019
      %v1021 = vrot.slane %v1016, %v1020
      %v1022 = vmul.bf16 %v999, %v1021
      %v1023 = vmul.bf16 %v1003, %v1021
      %v1024 = vmul.bf16 %v1007, %v1021
      %v1025 = vmul.bf16 %v1011, %v1021
      %s1026 = scalar_lea.vmem %s1, 64
      %v1027 = vld [vmem:[%s1026] sm:$0xf]
      %v1028 = vld [vmem:[%s1026 + $0x4] sm:$0xf]
      %v1031 = vunpack.c.l.b16 %v1027
      %v1032 = vunpack.c.l.b16 %v1028
      %v1033 = vpack.c.b16 %v1032, %v1031
      %v1035 = vsel %vm328, %v1033, 0
      %1037 = vmatprep.subr.bf16.mxu0 0
      %1038 = vmatpush1.bf16.msra.mxu0 0
      %1039 = vmatprep.subr.bf16.mxu0 0
      %1040 = vmatpush1.bf16.msra.mxu0 0
      %1041 = vmatprep.subr.bf16.mxu0 0
      %1042 = vmatpush1.bf16.msra.mxu0 0
      %1043 = vmatprep.subr.bf16.mxu0 0
      %1044 = vmatpush1.bf16.msra.mxu0 0
      %1045 = vmatprep.subr.bf16.mxu0 0
      %1046 = vmatpush1.bf16.msra.mxu0 %v1025
      %1047 = vmatprep.subr.bf16.mxu0 0
      %1048 = vmatpush1.bf16.msra.mxu0 %v1024
      %1049 = vmatprep.subr.bf16.mxu0 0
      %1050 = vmatpush1.bf16.msra.mxu0 %v1023
      %1051 = vmatprep.subr.bf16.mxu0 0
      %1052 = vmatpush1.bf16.msra.mxu0 %v1022
      %1053 = vmatprep.subr.bf16.mxu0 0
      %1054 = vmatpush2.bf16.msra.mxu0 0
      %1055 = vmatprep.subr.bf16.mxu0 0
      %1056 = vmatpush2.bf16.msra.mxu0 0
      %1057 = vmatprep.subr.bf16.mxu0 0
      %1058 = vmatpush2.bf16.msra.mxu0 0
      %1059 = vmatprep.subr.bf16.mxu0 0
      %1060 = vmatpush2.bf16.msra.mxu0 0
      %1061 = vmatprep.subr.bf16.mxu0 0
      %1062 = vmatpush2.bf16.msra.mxu0 0
      %1063 = vmatprep.subr.bf16.mxu0 0
      %1064 = vmatpush2.bf16.msra.mxu0 0
      %1065 = vmatprep.subr.bf16.mxu0 0
      %1066 = vmatpush2.bf16.msra.mxu0 0
      %1067 = vmatprep.subr.bf16.mxu0 0
      %1068 = vmatpush2.bf16.msra.mxu0 0
      %1069 = vmatprep.mubr.bf16.mxu0 0
      %1070 = vmatmul.mubr.bf16.gmra.mxu0 %v1035
      %v1071 = vpop.f32.mrf.mxu0
      %v1072 = vadd.f32 0.0, %v1071
      %v1073 = vpop.f32.mrf.mxu0
      %v1074 = vpop.f32.mrf.mxu0
      %v1075 = vadd.f32 0.0, %v1074
      %v1076 = vpop.f32.mrf.mxu0
      %1077 = vdwg.mxu0
      %v1078 = vadd.f32 %v978, %v1072
      %v1079 = vadd.f32 %v979, %v1075
      %v1080 = vld [vmem:[%s2] sm:$0xff]
      %v1081 = vld [vmem:[%s2 + $0x8] sm:$0xff]
      %1083 = vset.pattern.permute.xlu0 0
      %1084 = vperm.xlu0 %1083, %v1080
      %v1085 = vpop.permute.xlu0 %1084
      %1088 = vset.pattern.permute.xlu0 0
      %1089 = vperm.xlu0 %1088, %v1081
      %v1090 = vpop.permute.xlu0 %1089
      %v1092 = vadd.f32 %v1078, %v1085
      %v1093 = vadd.f32 %v1079, %v1090
      %1094 = vst.msk [vmem:[%s197] sm:$0xff] %vm328, %v1092
      %1095 = vst.msk [vmem:[%s197 + $0x8] sm:$0xff] %vm328, %v1093
      %p1096 = scmp.lt.s32.totalorder %s15, 1
      %s1097 = scalar_select %p1096, %s15, 1
      %s1098 = smul.addr %s1097, 2
      %s1099 = smul.addr %s1098, 8
      %s1100 = scalar_lea.vmem %s4, %s1099
      // Predicated region
      $region37: #{down_block_forward.7} parent=35 // pred_check
        %p1101 = pneg %p122
      $region38: #{down_block_forward.7} parent=35 // pred_check_branch
        %1103 = sbr.rel (%p1101) target = $region40
      $region39: #{down_block_forward.7} parent=35 // pred_region
        _
      $region40: #{down_block_forward.7} parent=35 // pred_fallthru
        _
    $region36: #{down_block_forward.7} parent=5 // pred_fallthru
      _
    %p1104 = scmp.le.s32.totalorder 2, %s10
    // Predicated region
    $region41: #{down_block_forward.7} parent=5 // pred_check
      %p1105 = pneg %p1104
    $region42: #{down_block_forward.7} parent=5 // pred_check_branch
      %1107 = sbr.rel (%p1105) target = $region44
    $region43: #{down_block_forward.7} parent=5 // pred_region
      %s1108 = ssub.s32 %s10, 2
      // Predicated region
      $region45: #{down_block_forward.7} parent=43 // pred_check
        %p1109 = pneg %p128
      $region46: #{down_block_forward.7} parent=43 // pred_check_branch
        %1111 = sbr.rel (%p1109) target = $region48
      $region47: #{down_block_forward.7} parent=43 // pred_region
        %p1112 = scmp.lt.s32.totalorder %s16, 1
        %s1113 = scalar_select %p1112, %s16, 1
        %s1114 = smul.addr %s1113, 2
        %s1115 = smul.addr %s1114, 8
        %s1116 = scalar_lea.vmem %s4, %s1115
      $region48: #{down_block_forward.7} parent=43 // pred_fallthru
        _
    $region44: #{down_block_forward.7} parent=5 // pred_fallthru
      _
  $region6: #{down_block_forward.7} parent=0 // loop_footer
    %s14 = sadd.s32 1, %s10
  $region7: #{down_block_forward.7} parent=0 // loop_footer_branch
    %9 = sbr.rel target = $region3
  $region8: #{down_block_forward.7} parent=0 // loop_exit
    _

</llo_original>
